<compile_context>
chip_gen: v7x
topology: tpu7x:2x2x1
jax: 0.10.0
libtpu: 0.0.40
codegen_flags: <defaults>
</compile_context>

<pallas_src>
from functools import partial

import jax
import jax.numpy as jnp
from jax.experimental import pallas as pl
from jax.experimental.pallas import tpu as pltpu


def _stage1_kernel(x_ref, w1_ref, b1_ref, w2_ref, b2_ref, grid1d_ref, kuu_ref,
                   feat_ref, w_ref, a_ref,
                   *, dout, g, spacing, grid_bound):
    """Stem MLP + SKI interpolation weights W + A = W @ K_uu for one row tile."""
    # ---- stem MLP: Linear -> ReLU -> Linear -> bounded tanh (synthetic stem) ----
    x = x_ref[...]                                                     # (TM, DIN)
    h = jnp.dot(x, w1_ref[...], preferred_element_type=jnp.float32) + b1_ref[...]
    h = jnp.maximum(h, 0.0)
    f = jnp.dot(h, w2_ref[...], preferred_element_type=jnp.float32) + b2_ref[...]
    f = grid_bound * jnp.tanh(f)                                       # (TM, DOUT)
    feat_ref[...] = f

    tm = f.shape[0]
    g1 = grid1d_ref.shape[1]
    inv_spacing = 1.0 / spacing

    # ---- cubic-convolution (Keys) interpolation weights per grid dim ----
    # Kronecker combine with 2D repeat/tile (lane-aligned, no 3D outer product).
    w_full = None
    for d in range(dout):                                              # static unroll
        fd = f[:, d:d + 1]                                             # (TM, 1)
        gd = grid1d_ref[d, :][None, :]                                 # (1, G1)
        u = jnp.abs(fd - gd) * inv_spacing                             # (TM, G1)
        near = (1.5 * u - 2.5) * u * u + 1.0                           # 0 <= u < 1
        far = ((-0.5 * u + 2.5) * u - 4.0) * u + 2.0                   # 1 <= u < 2
        wd = jnp.where(u < 1.0, near, jnp.where(u < 2.0, far, 0.0))
        if w_full is None:
            w_full = wd
        else:
            prev = w_full.shape[1]
            w_full = jnp.repeat(w_full, g1, axis=1) * jnp.tile(wd, (1, prev))
    # w_full : (TM, G) with G = G1**DOUT, 'ij' meshgrid order

    # ---- A = W @ K_uu  (K_uu precomputed, columns zero-padded to lane width) ----
    a_ref[...] = jnp.dot(w_full, kuu_ref[...], preferred_element_type=jnp.float32)

    # ---- lane-dense padded copy of W for the tiled covariance stage ----
    g_pad = w_ref.shape[1]
    if g_pad > g:
        w_full = jnp.concatenate(
            [w_full, jnp.zeros((tm, g_pad - g), jnp.float32)], axis=1)
    w_ref[...] = w_full


def _cov_tile_kernel(a_ref, w_ref, cov_ref):
    """cov tile = A_i @ W_j^T via dot_general (no explicit transpose/relayout)."""
    cov_ref[...] = jax.lax.dot_general(
        a_ref[...], w_ref[...],
        dimension_numbers=(((1,), (1,)), ((), ())),
        preferred_element_type=jnp.float32)


class OnlineSKIRegressionPallas:
    """JAX/Pallas port of OnlineSKIRegression.forward (stem + SKI GP prior)."""

    def __init__(self, input_dim=8, hidden_dim=32, output_dim=2,
                 grid_size=8, grid_bound=1.0, target_dim=1, seed=0):
        self.input_dim = input_dim
        self.hidden_dim = hidden_dim
        self.output_dim = output_dim
        self.grid_size = grid_size
        self.target_dim = target_dim

        # deterministic synthetic stem parameters
        key = jax.random.PRNGKey(seed)
        k1, k2, k3, k4 = jax.random.split(key, 4)
        self.w1 = 0.3 * jax.random.normal(k1, (input_dim, hidden_dim), jnp.float32)
        self.b1 = 0.1 * jax.random.normal(k2, (1, hidden_dim), jnp.float32)
        self.w2 = 0.3 * jax.random.normal(k3, (hidden_dim, output_dim), jnp.float32)
        self.b2 = 0.1 * jax.random.normal(k4, (1, output_dim), jnp.float32)

        # SKI grid: bounds [-(grid_bound+0.1), grid_bound+0.1] per output dim (as in __init__)
        gb = grid_bound + 0.1
        g1d = jnp.linspace(-gb, gb, grid_size, dtype=jnp.float32)       # (G1,)
        self.grid1d = jnp.tile(g1d[None, :], (output_dim, 1))           # (DOUT, G1)
        mesh = jnp.meshgrid(*([g1d] * output_dim), indexing="ij")
        zgrid = jnp.stack([m.reshape(-1) for m in mesh], axis=-1)       # (G, DOUT)
        self.num_grid = int(zgrid.shape[0])

        self._spacing = float(2.0 * gb / (grid_size - 1))
        self._grid_bound = float(grid_bound)
        # gpytorch default raw-param init 0.0 -> softplus
        self._lengthscale = float(jax.nn.softplus(0.0))
        self._outputscale = float(jax.nn.softplus(0.0))
        self._mean_const = 0.0

        # ---- constant K_uu: hoisted out of the kernel, computed once here ----
        # per-dimension squared differences (no zsq + zsq.T - 2zz^T cancellation)
        diff = zgrid[:, None, :] - zgrid[None, :, :]                    # (G, G, DOUT)
        sqdist = jnp.sum(diff * diff, axis=-1)
        kuu = self._outputscale * jnp.exp(
            -0.5 * sqdist / (self._lengthscale * self._lengthscale))    # (G, G)
        g = self.num_grid
        self.g_pad = max(128, ((g + 127) // 128) * 128)                 # lane-dense width
        self.kuu_pad = jnp.pad(kuu, ((0, 0), (0, self.g_pad - g))).astype(jnp.float32)

    def forward(self, inputs):
        x = jnp.asarray(inputs, jnp.float32).reshape(-1, self.input_dim)
        n = x.shape[0]
        din, hdim, dout = self.input_dim, self.hidden_dim, self.output_dim
        g, g_pad, g1 = self.num_grid, self.g_pad, self.grid_size

        # pad rows to a multiple of 128 (lane-dense cov tiles); pick the largest
        # of {512, 256, 128} that divides the padded row count (512 = ~1 MiB f32 tile,
        # double-buffers comfortably inside v7x's 64 MiB VMEM)
        n_pad = max(128, ((n + 127) // 128) * 128)
        if n_pad % 512 == 0:
            tm = 512
        elif n_pad % 256 == 0:
            tm = 256
        else:
            tm = 128
        if n_pad > n:
            x = jnp.concatenate(
                [x, jnp.zeros((n_pad - n, din), jnp.float32)], axis=0)
        n_tiles = n_pad // tm

        # ---- stage 1: features, W, A = W @ K_uu (row-tiled, pipelined) ----
        stage1 = pl.pallas_call(
            partial(_stage1_kernel, dout=dout, g=g,
                    spacing=self._spacing, grid_bound=self._grid_bound),
            grid=(n_tiles,),
            out_shape=(
                jax.ShapeDtypeStruct((n_pad, dout), jnp.float32),    # features
                jax.ShapeDtypeStruct((n_pad, g_pad), jnp.float32),   # W (padded)
                jax.ShapeDtypeStruct((n_pad, g_pad), jnp.float32),   # A = W @ K_uu
            ),
            in_specs=[
                pl.BlockSpec((tm, din), lambda i: (i, 0)),
                pl.BlockSpec((din, hdim), lambda i: (0, 0)),
                pl.BlockSpec((1, hdim), lambda i: (0, 0)),
                pl.BlockSpec((hdim, dout), lambda i: (0, 0)),
                pl.BlockSpec((1, dout), lambda i: (0, 0)),
                pl.BlockSpec((dout, g1), lambda i: (0, 0)),
                pl.BlockSpec((g, g_pad), lambda i: (0, 0)),
            ],
            out_specs=(
                pl.BlockSpec((tm, dout), lambda i: (i, 0)),
                pl.BlockSpec((tm, g_pad), lambda i: (i, 0)),
                pl.BlockSpec((tm, g_pad), lambda i: (i, 0)),
            ),
            compiler_params=pltpu.CompilerParams(
                dimension_semantics=("parallel",)),
        )
        feat_p, w_p, a_p = stage1(x, self.w1, self.b1, self.w2, self.b2,
                                  self.grid1d, self.kuu_pad)

        # ---- stage 2: tiled SKI prior covariance  cov = A @ W^T = W K_uu W^T ----
        # A_i tile resident across the inner j axis; lane-dense (tm, tm) output tiles;
        # both grid axes "parallel" so v7x's two TensorCores split the tiles.
        cov_p = pl.pallas_call(
            _cov_tile_kernel,
            grid=(n_tiles, n_tiles),
            out_shape=jax.ShapeDtypeStruct((n_pad, n_pad), jnp.float32),
            in_specs=[
                pl.BlockSpec((tm, g_pad), lambda i, j: (i, 0)),
                pl.BlockSpec((tm, g_pad), lambda i, j: (j, 0)),
            ],
            out_specs=pl.BlockSpec((tm, tm), lambda i, j: (i, j)),
            compiler_params=pltpu.CompilerParams(
                dimension_semantics=("parallel", "parallel")),
        )(a_p, w_p)

        # ---- ConstantMean (init 0): compile-time constant, produced host-side ----
        mean = jnp.full((n,), self._mean_const, dtype=jnp.float32)
        cov = cov_p[:n, :n]
        feat = feat_p[:n]

        # MultivariateNormal parameters of the GP prior over the batch
        return mean, cov, feat

    __call__ = forward


if __name__ == "__main__":
    N, DIN, H, DOUT, G1 = 16, 8, 32, 2, 8

    model = OnlineSKIRegressionPallas(
        input_dim=DIN, hidden_dim=H, output_dim=DOUT,
        grid_size=G1, grid_bound=1.0, target_dim=1, seed=0,
    )

    key = jax.random.PRNGKey(0)
    inputs = jax.random.normal(key, (N, DIN), jnp.float32)

    mean, cov, feat = model(inputs)
    (mean, cov, feat) = jax.block_until_ready((mean, cov, feat))

    assert mean.shape == (N,)
    assert cov.shape == (N, N)
    assert feat.shape == (N, DOUT)
    assert bool(jnp.all(jnp.isfinite(mean)))
    assert bool(jnp.all(jnp.isfinite(cov)))
    assert bool(jnp.all(jnp.isfinite(feat)))
    # covariance should be (numerically) symmetric
    assert bool(jnp.max(jnp.abs(cov - cov.T)) < 1e-4)

    print("KERNEL_OK")
</pallas_src>

<mosaic_0001>
module attributes {stable_mosaic.version = 11 : i64} {
  func.func @_stage1_kernel(%arg0: i32, %arg1: memref<128x8xf32, #tpu.memory_space<vmem>>, %arg2: memref<8x32xf32, #tpu.memory_space<vmem>>, %arg3: memref<1x32xf32, #tpu.memory_space<vmem>>, %arg4: memref<32x2xf32, #tpu.memory_space<vmem>>, %arg5: memref<1x2xf32, #tpu.memory_space<vmem>>, %arg6: memref<2x8xf32, #tpu.memory_space<vmem>>, %arg7: memref<64x128xf32, #tpu.memory_space<vmem>>, %arg8: memref<128x2xf32, #tpu.memory_space<vmem>>, %arg9: memref<128x128xf32, #tpu.memory_space<vmem>>, %arg10: memref<128x128xf32, #tpu.memory_space<vmem>>) attributes {dimension_semantics = [#tpu.dimension_semantics<parallel>], iteration_bounds = array<i64: 1>, scalar_prefetch = 0 : i64, scratch_operands = 0 : i64, tpu.core_type = #tpu.core_type<tc>, window_params = [{transform_indices = @transform_0, window_bounds = array<i64: 128, 8>}, {pipeline_mode = #tpu.pipeline_mode<synchronous>, transform_indices = @transform_1, window_bounds = array<i64: 8, 32>}, {pipeline_mode = #tpu.pipeline_mode<synchronous>, transform_indices = @transform_2, window_bounds = array<i64: 1, 32>}, {pipeline_mode = #tpu.pipeline_mode<synchronous>, transform_indices = @transform_3, window_bounds = array<i64: 32, 2>}, {pipeline_mode = #tpu.pipeline_mode<synchronous>, transform_indices = @transform_4, window_bounds = array<i64: 1, 2>}, {pipeline_mode = #tpu.pipeline_mode<synchronous>, transform_indices = @transform_5, window_bounds = array<i64: 2, 8>}, {pipeline_mode = #tpu.pipeline_mode<synchronous>, transform_indices = @transform_6, window_bounds = array<i64: 64, 128>}, {transform_indices = @transform_7, window_bounds = array<i64: 128, 2>}, {transform_indices = @transform_8, window_bounds = array<i64: 128, 128>}, {transform_indices = @transform_9, window_bounds = array<i64: 128, 128>}]} {
    %c0 = arith.constant 0 : index
    %c0_0 = arith.constant 0 : index
    %0 = vector.load %arg1[%c0, %c0_0] : memref<128x8xf32, #tpu.memory_space<vmem>>, vector<128x8xf32>
    %c0_1 = arith.constant 0 : index
    %c0_2 = arith.constant 0 : index
    %1 = vector.load %arg2[%c0_1, %c0_2] : memref<8x32xf32, #tpu.memory_space<vmem>>, vector<8x32xf32>
    %cst = arith.constant dense<0.000000e+00> : vector<128x32xf32>
    %2 = tpu.matmul %0, %1, %cst {dimension_numbers = #tpu.dot_dimension_numbers<[1], [0], [0], [1], [0, 0, 1, 1], [], []>} : vector<128x8xf32>, vector<8x32xf32>, vector<128x32xf32> -> vector<128x32xf32>
    %c0_3 = arith.constant 0 : index
    %c0_4 = arith.constant 0 : index
    %3 = vector.load %arg3[%c0_3, %c0_4] : memref<1x32xf32, #tpu.memory_space<vmem>>, vector<1x32xf32>
    %4 = vector.broadcast %3 : vector<1x32xf32> to vector<128x32xf32>
    %5 = arith.addf %2, %4 : vector<128x32xf32>
    %cst_5 = arith.constant 0.000000e+00 : f32
    %6 = vector.broadcast %cst_5 : f32 to vector<128x32xf32>
    %7 = arith.maximumf %5, %6 : vector<128x32xf32>
    %c0_6 = arith.constant 0 : index
    %c0_7 = arith.constant 0 : index
    %8 = vector.load %arg4[%c0_6, %c0_7] : memref<32x2xf32, #tpu.memory_space<vmem>>, vector<32x2xf32>
    %cst_8 = arith.constant dense<0.000000e+00> : vector<128x2xf32>
    %9 = tpu.matmul %7, %8, %cst_8 {dimension_numbers = #tpu.dot_dimension_numbers<[1], [0], [0], [1], [0, 0, 1, 1], [], []>} : vector<128x32xf32>, vector<32x2xf32>, vector<128x2xf32> -> vector<128x2xf32>
    %c0_9 = arith.constant 0 : index
    %c0_10 = arith.constant 0 : index
    %10 = vector.load %arg5[%c0_9, %c0_10] : memref<1x2xf32, #tpu.memory_space<vmem>>, vector<1x2xf32>
    %11 = vector.broadcast %10 : vector<1x2xf32> to vector<128x2xf32>
    %12 = arith.addf %9, %11 : vector<128x2xf32>
    %13 = math.tanh %12 : vector<128x2xf32>
    %cst_11 = arith.constant 1.000000e+00 : f32
    %14 = vector.broadcast %cst_11 : f32 to vector<128x2xf32>
    %15 = arith.mulf %14, %13 : vector<128x2xf32>
    %c0_12 = arith.constant 0 : index
    %c0_13 = arith.constant 0 : index
    %16 = vector.load %arg8[%c0_12, %c0_13] : memref<128x2xf32, #tpu.memory_space<vmem>>, vector<128x2xf32>
    tpu.vector_store %arg8[%c0_12, %c0_13], %15 {strides = array<i32>} : memref<128x2xf32, #tpu.memory_space<vmem>>, vector<128x2xf32>,
    %17 = vector.extract_strided_slice %15 {offsets = [0, 0], sizes = [128, 1], strides = [1, 1]} : vector<128x2xf32> to vector<128x1xf32>
    %c0_14 = arith.constant 0 : index
    %c0_15 = arith.constant 0 : index
    %18 = vector.load %arg6[%c0_14, %c0_15] : memref<2x8xf32, #tpu.memory_space<vmem>>, vector<1x8xf32>
    %19 = vector.shape_cast %18 : vector<1x8xf32> to vector<8xf32>
    %20 = vector.shape_cast %19 : vector<8xf32> to vector<1x8xf32>
    %21 = vector.broadcast %17 : vector<128x1xf32> to vector<128x8xf32>
    %22 = vector.broadcast %20 : vector<1x8xf32> to vector<128x8xf32>
    %23 = arith.subf %21, %22 : vector<128x8xf32>
    %24 = math.absf %23 : vector<128x8xf32>
    %cst_16 = arith.constant 3.18181825 : f32
    %25 = vector.broadcast %cst_16 : f32 to vector<128x8xf32>
    %26 = arith.mulf %24, %25 : vector<128x8xf32>
    %cst_17 = arith.constant 1.500000e+00 : f32
    %27 = vector.broadcast %cst_17 : f32 to vector<128x8xf32>
    %28 = arith.mulf %27, %26 : vector<128x8xf32>
    %cst_18 = arith.constant 2.500000e+00 : f32
    %29 = vector.broadcast %cst_18 : f32 to vector<128x8xf32>
    %30 = arith.subf %28, %29 : vector<128x8xf32>
    %31 = arith.mulf %30, %26 : vector<128x8xf32>
    %32 = arith.mulf %31, %26 : vector<128x8xf32>
    %cst_19 = arith.constant 1.000000e+00 : f32
    %33 = vector.broadcast %cst_19 : f32 to vector<128x8xf32>
    %34 = arith.addf %32, %33 : vector<128x8xf32>
    %cst_20 = arith.constant -5.000000e-01 : f32
    %35 = vector.broadcast %cst_20 : f32 to vector<128x8xf32>
    %36 = arith.mulf %35, %26 : vector<128x8xf32>
    %cst_21 = arith.constant 2.500000e+00 : f32
    %37 = vector.broadcast %cst_21 : f32 to vector<128x8xf32>
    %38 = arith.addf %36, %37 : vector<128x8xf32>
    %39 = arith.mulf %38, %26 : vector<128x8xf32>
    %cst_22 = arith.constant 4.000000e+00 : f32
    %40 = vector.broadcast %cst_22 : f32 to vector<128x8xf32>
    %41 = arith.subf %39, %40 : vector<128x8xf32>
    %42 = arith.mulf %41, %26 : vector<128x8xf32>
    %cst_23 = arith.constant 2.000000e+00 : f32
    %43 = vector.broadcast %cst_23 : f32 to vector<128x8xf32>
    %44 = arith.addf %42, %43 : vector<128x8xf32>
    %cst_24 = arith.constant 1.000000e+00 : f32
    %45 = vector.broadcast %cst_24 : f32 to vector<128x8xf32>
    %46 = arith.cmpf olt, %26, %45 : vector<128x8xf32>
    %cst_25 = arith.constant 2.000000e+00 : f32
    %47 = vector.broadcast %cst_25 : f32 to vector<128x8xf32>
    %48 = arith.cmpf olt, %26, %47 : vector<128x8xf32>
    %cst_26 = arith.constant 0.000000e+00 : f32
    %49 = vector.broadcast %cst_26 : f32 to vector<128x8xf32>
    %50 = arith.select %48, %44, %49 : vector<128x8xi1>, vector<128x8xf32>
    %51 = arith.select %46, %34, %50 : vector<128x8xi1>, vector<128x8xf32>
    %52 = vector.extract_strided_slice %15 {offsets = [0, 1], sizes = [128, 1], strides = [1, 1]} : vector<128x2xf32> to vector<128x1xf32>
    %c1 = arith.constant 1 : index
    %c0_27 = arith.constant 0 : index
    %53 = vector.load %arg6[%c1, %c0_27] : memref<2x8xf32, #tpu.memory_space<vmem>>, vector<1x8xf32>
    %54 = vector.shape_cast %53 : vector<1x8xf32> to vector<8xf32>
    %55 = vector.shape_cast %54 : vector<8xf32> to vector<1x8xf32>
    %56 = vector.broadcast %52 : vector<128x1xf32> to vector<128x8xf32>
    %57 = vector.broadcast %55 : vector<1x8xf32> to vector<128x8xf32>
    %58 = arith.subf %56, %57 : vector<128x8xf32>
    %59 = math.absf %58 : vector<128x8xf32>
    %cst_28 = arith.constant 3.18181825 : f32
    %60 = vector.broadcast %cst_28 : f32 to vector<128x8xf32>
    %61 = arith.mulf %59, %60 : vector<128x8xf32>
    %cst_29 = arith.constant 1.500000e+00 : f32
    %62 = vector.broadcast %cst_29 : f32 to vector<128x8xf32>
    %63 = arith.mulf %62, %61 : vector<128x8xf32>
    %cst_30 = arith.constant 2.500000e+00 : f32
    %64 = vector.broadcast %cst_30 : f32 to vector<128x8xf32>
    %65 = arith.subf %63, %64 : vector<128x8xf32>
    %66 = arith.mulf %65, %61 : vector<128x8xf32>
    %67 = arith.mulf %66, %61 : vector<128x8xf32>
    %cst_31 = arith.constant 1.000000e+00 : f32
    %68 = vector.broadcast %cst_31 : f32 to vector<128x8xf32>
    %69 = arith.addf %67, %68 : vector<128x8xf32>
    %cst_32 = arith.constant -5.000000e-01 : f32
    %70 = vector.broadcast %cst_32 : f32 to vector<128x8xf32>
    %71 = arith.mulf %70, %61 : vector<128x8xf32>
    %cst_33 = arith.constant 2.500000e+00 : f32
    %72 = vector.broadcast %cst_33 : f32 to vector<128x8xf32>
    %73 = arith.addf %71, %72 : vector<128x8xf32>
    %74 = arith.mulf %73, %61 : vector<128x8xf32>
    %cst_34 = arith.constant 4.000000e+00 : f32
    %75 = vector.broadcast %cst_34 : f32 to vector<128x8xf32>
    %76 = arith.subf %74, %75 : vector<128x8xf32>
    %77 = arith.mulf %76, %61 : vector<128x8xf32>
    %cst_35 = arith.constant 2.000000e+00 : f32
    %78 = vector.broadcast %cst_35 : f32 to vector<128x8xf32>
    %79 = arith.addf %77, %78 : vector<128x8xf32>
    %cst_36 = arith.constant 1.000000e+00 : f32
    %80 = vector.broadcast %cst_36 : f32 to vector<128x8xf32>
    %81 = arith.cmpf olt, %61, %80 : vector<128x8xf32>
    %cst_37 = arith.constant 2.000000e+00 : f32
    %82 = vector.broadcast %cst_37 : f32 to vector<128x8xf32>
    %83 = arith.cmpf olt, %61, %82 : vector<128x8xf32>
    %cst_38 = arith.constant 0.000000e+00 : f32
    %84 = vector.broadcast %cst_38 : f32 to vector<128x8xf32>
    %85 = arith.select %83, %79, %84 : vector<128x8xi1>, vector<128x8xf32>
    %86 = arith.select %81, %69, %85 : vector<128x8xi1>, vector<128x8xf32>
    %87 = vector.shape_cast %51 : vector<128x8xf32> to vector<128x8x1xf32>
    %88 = vector.broadcast %87 : vector<128x8x1xf32> to vector<128x8x8xf32>
    %89 = vector.shape_cast %88 : vector<128x8x8xf32> to vector<128x64xf32>
    %90 = tpu.concatenate %86, %86, %86, %86, %86, %86, %86, %86 in 1 : vector<128x8xf32>, vector<128x8xf32>, vector<128x8xf32>, vector<128x8xf32>, vector<128x8xf32>, vector<128x8xf32>, vector<128x8xf32>, vector<128x8xf32> -> vector<128x64xf32>
    %91 = arith.mulf %89, %90 : vector<128x64xf32>
    %c0_39 = arith.constant 0 : index
    %c0_40 = arith.constant 0 : index
    %92 = vector.load %arg7[%c0_39, %c0_40] : memref<64x128xf32, #tpu.memory_space<vmem>>, vector<64x128xf32>
    %cst_41 = arith.constant dense<0.000000e+00> : vector<128x128xf32>
    %93 = tpu.matmul %91, %92, %cst_41 {dimension_numbers = #tpu.dot_dimension_numbers<[1], [0], [0], [1], [0, 0, 1, 1], [], []>} : vector<128x64xf32>, vector<64x128xf32>, vector<128x128xf32> -> vector<128x128xf32>
    %c0_42 = arith.constant 0 : index
    %c0_43 = arith.constant 0 : index
    %94 = vector.load %arg10[%c0_42, %c0_43] : memref<128x128xf32, #tpu.memory_space<vmem>>, vector<128x128xf32>
    tpu.vector_store %arg10[%c0_42, %c0_43], %93 {strides = array<i32>} : memref<128x128xf32, #tpu.memory_space<vmem>>, vector<128x128xf32>,
    %cst_44 = arith.constant 0.000000e+00 : f32
    %95 = vector.broadcast %cst_44 : f32 to vector<128x64xf32>
    %96 = tpu.concatenate %91, %95 in 1 : vector<128x64xf32>, vector<128x64xf32> -> vector<128x128xf32>
    %c0_45 = arith.constant 0 : index
    %c0_46 = arith.constant 0 : index
    %97 = vector.load %arg9[%c0_45, %c0_46] : memref<128x128xf32, #tpu.memory_space<vmem>>, vector<128x128xf32>
    tpu.vector_store %arg9[%c0_45, %c0_46], %96 {strides = array<i32>} : memref<128x128xf32, #tpu.memory_space<vmem>>, vector<128x128xf32>,
    return
  }
  func.func @transform_0(%arg0: i32) -> (i32, i32) {
    %c0_i32 = arith.constant 0 : i32
    %c0_i32_0 = arith.constant 0 : i32
    return %arg0, %c0_i32 : i32, i32
  }
  func.func @transform_1(%arg0: i32) -> (i32, i32) {
    %c0_i32 = arith.constant 0 : i32
    %c0_i32_0 = arith.constant 0 : i32
    %c0_i32_1 = arith.constant 0 : i32
    return %c0_i32, %c0_i32_0 : i32, i32
  }
  func.func @transform_2(%arg0: i32) -> (i32, i32) {
    %c0_i32 = arith.constant 0 : i32
    %c0_i32_0 = arith.constant 0 : i32
    %c0_i32_1 = arith.constant 0 : i32
    return %c0_i32, %c0_i32_0 : i32, i32
  }
  func.func @transform_3(%arg0: i32) -> (i32, i32) {
    %c0_i32 = arith.constant 0 : i32
    %c0_i32_0 = arith.constant 0 : i32
    %c0_i32_1 = arith.constant 0 : i32
    return %c0_i32, %c0_i32_0 : i32, i32
  }
  func.func @transform_4(%arg0: i32) -> (i32, i32) {
    %c0_i32 = arith.constant 0 : i32
    %c0_i32_0 = arith.constant 0 : i32
    %c0_i32_1 = arith.constant 0 : i32
    return %c0_i32, %c0_i32_0 : i32, i32
  }
  func.func @transform_5(%arg0: i32) -> (i32, i32) {
    %c0_i32 = arith.constant 0 : i32
    %c0_i32_0 = arith.constant 0 : i32
    %c0_i32_1 = arith.constant 0 : i32
    return %c0_i32, %c0_i32_0 : i32, i32
  }
  func.func @transform_6(%arg0: i32) -> (i32, i32) {
    %c0_i32 = arith.constant 0 : i32
    %c0_i32_0 = arith.constant 0 : i32
    %c0_i32_1 = arith.constant 0 : i32
    return %c0_i32, %c0_i32_0 : i32, i32
  }
  func.func @transform_7(%arg0: i32) -> (i32, i32) {
    %c0_i32 = arith.constant 0 : i32
    %c0_i32_0 = arith.constant 0 : i32
    return %arg0, %c0_i32 : i32, i32
  }
  func.func @transform_8(%arg0: i32) -> (i32, i32) {
    %c0_i32 = arith.constant 0 : i32
    %c0_i32_0 = arith.constant 0 : i32
    return %arg0, %c0_i32 : i32, i32
  }
  func.func @transform_9(%arg0: i32) -> (i32, i32) {
    %c0_i32 = arith.constant 0 : i32
    %c0_i32_0 = arith.constant 0 : i32
    return %arg0, %c0_i32 : i32, i32
  }
}

</mosaic_0001>

<llo_original>
// kernel: tpu_custom_call.1
$region0: #{tpu_custom_call.1}
  #allocation0 [shape = 'u32[]', space=smem, size = 0x4, offset = 0x4, fixed_abs, tag = 'smem constant byte address 0x4 - core index']
  #allocation1 [shape = 'u32[144,128]{1,0:T(1,128)}', space=vmem, size = 0x12000, scoped, tag = 'internal scratch']
  %s0 = inlined_call_operand.vmem [shape: f32[128,8], index: 0, kind: input, shape index: {}]
  %s1 = inlined_call_operand.vmem [shape: f32[8,32], index: 1, kind: input, shape index: {}]
  %s2 = inlined_call_operand.vmem [shape: f32[1,32], index: 2, kind: input, shape index: {}]
  %s3 = inlined_call_operand.vmem [shape: f32[32,2], index: 3, kind: input, shape index: {}]
  %s4 = inlined_call_operand.vmem [shape: f32[1,2], index: 4, kind: input, shape index: {}]
  %s5 = inlined_call_operand.vmem [shape: f32[2,8], index: 5, kind: input, shape index: {}]
  %s6 = inlined_call_operand.vmem [shape: f32[64,128], index: 6, kind: input, shape index: {}]
  %s7 = inlined_call_operand.vmem [shape: f32[128,2], index: 7, kind: output, shape index: {0}]
  %s8 = inlined_call_operand.hbm [shape: f32[128,128], index: 8, kind: output, shape index: {1}]
  %s9 = inlined_call_operand.hbm [shape: f32[128,128], index: 9, kind: output, shape index: {2}]
  %10 = xla_tuple %s7, %s8, %s9
  %s11 = sld [smem:[#allocation0]]
  $region54: #{tpu_custom_call.1} parent=0
    _
  %s13 = ssub.s32 1, %s11
  %s14 = scalar_select 0, %s13, %s11
  $region1: #{tpu_custom_call.1} parent=0
    #allocation2 [shape = 'u8[65536]{0}', space=vmem, size = 0x10000, scoped, tag = 'output window, operand 1, single buffered']
    #allocation3 [shape = 's32[1]{0}', space=sflag, size = 0x4, scoped, tag = 'scoped memory for tpu_custom_call.1']
    #allocation4 [shape = 'u8[65536]{0}', space=vmem, size = 0x10000, scoped, tag = 'output window, operand 2, single buffered']
    #allocation5 [shape = 's32[1]{0}', space=sflag, size = 0x4, scoped, tag = 'scoped memory for tpu_custom_call.1']
    %15 = vsyncpa [#allocation3], 0
    %16 = vsyncpa [#allocation5], 0
    // Predicated region
    $region2: #{tpu_custom_call.1} parent=1 // pred_check
      _
    $region3: #{tpu_custom_call.1} parent=1 // pred_check_branch
      %18 = sbr.rel (0) target = $region5
    $region4: #{tpu_custom_call.1} parent=1 // pred_region
      _
    $region5: #{tpu_custom_call.1} parent=1 // pred_fallthru
      _
    // Predicated region
    $region6: #{tpu_custom_call.1} parent=1 // pred_check
      _
    $region7: #{tpu_custom_call.1} parent=1 // pred_check_branch
      %20 = sbr.rel (0) target = $region9
    $region8: #{tpu_custom_call.1} parent=1 // pred_region
      _
    $region9: #{tpu_custom_call.1} parent=1 // pred_fallthru
      _
    // Predicated region
    $region10: #{tpu_custom_call.1} parent=1 // pred_check
      _
    $region11: #{tpu_custom_call.1} parent=1 // pred_check_branch
      %22 = sbr.rel (0) target = $region13
    $region12: #{tpu_custom_call.1} parent=1 // pred_region
      _
    $region13: #{tpu_custom_call.1} parent=1 // pred_fallthru
      _
    // Predicated region
    $region14: #{tpu_custom_call.1} parent=1 // pred_check
      _
    $region15: #{tpu_custom_call.1} parent=1 // pred_check_branch
      %24 = sbr.rel (0) target = $region17
    $region16: #{tpu_custom_call.1} parent=1 // pred_region
      _
    $region17: #{tpu_custom_call.1} parent=1 // pred_fallthru
      _
    // Predicated region
    $region18: #{tpu_custom_call.1} parent=1 // pred_check
      _
    $region19: #{tpu_custom_call.1} parent=1 // pred_check_branch
      %26 = sbr.rel (0) target = $region21
    $region20: #{tpu_custom_call.1} parent=1 // pred_region
      _
    $region21: #{tpu_custom_call.1} parent=1 // pred_fallthru
      _
    // Predicated region
    $region22: #{tpu_custom_call.1} parent=1 // pred_check
      _
    $region23: #{tpu_custom_call.1} parent=1 // pred_check_branch
      %28 = sbr.rel (0) target = $region25
    $region24: #{tpu_custom_call.1} parent=1 // pred_region
      _
    $region25: #{tpu_custom_call.1} parent=1 // pred_fallthru
      _
    // Predicated region
    $region26: #{tpu_custom_call.1} parent=1 // pred_check
      _
    $region27: #{tpu_custom_call.1} parent=1 // pred_check_branch
      %30 = sbr.rel (0) target = $region29
    $region28: #{tpu_custom_call.1} parent=1 // pred_region
      _
    $region29: #{tpu_custom_call.1} parent=1 // pred_fallthru
      _
    %v31 = vld [vmem:[%s0] sm:$0xff]
    %v32 = vld [vmem:[%s0 + $0x8] sm:$0xff]
    %v33 = vld [vmem:[%s0 + $0x10] sm:$0xff]
    %v34 = vld [vmem:[%s0 + $0x18] sm:$0xff]
    %v35 = vld [vmem:[%s0 + $0x20] sm:$0xff]
    %v36 = vld [vmem:[%s0 + $0x28] sm:$0xff]
    %v37 = vld [vmem:[%s0 + $0x30] sm:$0xff]
    %v38 = vld [vmem:[%s0 + $0x38] sm:$0xff]
    %v39 = vld [vmem:[%s0 + $0x40] sm:$0xff]
    %v40 = vld [vmem:[%s0 + $0x48] sm:$0xff]
    %v41 = vld [vmem:[%s0 + $0x50] sm:$0xff]
    %v42 = vld [vmem:[%s0 + $0x58] sm:$0xff]
    %v43 = vld [vmem:[%s0 + $0x60] sm:$0xff]
    %v44 = vld [vmem:[%s0 + $0x68] sm:$0xff]
    %v45 = vld [vmem:[%s0 + $0x70] sm:$0xff]
    %v46 = vld [vmem:[%s0 + $0x78] sm:$0xff]
    %v47 = vld [vmem:[%s1] sm:$0xff]
    %v48 = vld [vmem:[%s2] sm:$0x1]
    %v50 = vlaneseq
    %v51 = vshrl.u32 %v50, 7
    %v52 = vsub.s32 0, %v51
    %v53 = vrot.slane %v48, %v52
    %vm55 = vcmask 64512
    %v57 = vsel %vm55, %v31, 0
    %v60 = vsel %vm55, %v32, 0
    %v63 = vsel %vm55, %v33, 0
    %v66 = vsel %vm55, %v34, 0
    %v69 = vsel %vm55, %v35, 0
    %v72 = vsel %vm55, %v36, 0
    %v75 = vsel %vm55, %v37, 0
    %v78 = vsel %vm55, %v38, 0
    %v81 = vsel %vm55, %v39, 0
    %v84 = vsel %vm55, %v40, 0
    %v87 = vsel %vm55, %v41, 0
    %v90 = vsel %vm55, %v42, 0
    %v93 = vsel %vm55, %v43, 0
    %v96 = vsel %vm55, %v44, 0
    %v99 = vsel %vm55, %v45, 0
    %v102 = vsel %vm55, %v46, 0
    %104 = vmatprep.subr.mxu0 0.0
    %105 = vmatpush1.msra.mxu0 %v47
    %106 = vmatprep.subr.mxu0 0.0
    %107 = vmatpush1.msra.mxu0 0.0
    %108 = vmatprep.subr.mxu0 0.0
    %109 = vmatpush1.msra.mxu0 0.0
    %110 = vmatprep.subr.mxu0 0.0
    %111 = vmatpush1.msra.mxu0 0.0
    %112 = vmatprep.subr.mxu0 0.0
    %113 = vmatpush1.msra.mxu0 0.0
    %114 = vmatprep.subr.mxu0 0.0
    %115 = vmatpush1.msra.mxu0 0.0
    %116 = vmatprep.subr.mxu0 0.0
    %117 = vmatpush1.msra.mxu0 0.0
    %118 = vmatprep.subr.mxu0 0.0
    %119 = vmatpush1.msra.mxu0 0.0
    %120 = vmatprep.subr.mxu0 0.0
    %121 = vmatpush1.msra.mxu0 0.0
    %122 = vmatprep.subr.mxu0 0.0
    %123 = vmatpush1.msra.mxu0 0.0
    %124 = vmatprep.subr.mxu0 0.0
    %125 = vmatpush1.msra.mxu0 0.0
    %126 = vmatprep.subr.mxu0 0.0
    %127 = vmatpush1.msra.mxu0 0.0
    %128 = vmatprep.subr.mxu0 0.0
    %129 = vmatpush1.msra.mxu0 0.0
    %130 = vmatprep.subr.mxu0 0.0
    %131 = vmatpush1.msra.mxu0 0.0
    %132 = vmatprep.subr.mxu0 0.0
    %133 = vmatpush1.msra.mxu0 0.0
    %134 = vmatprep.subr.mxu0 0.0
    %135 = vmatpush1.msra.mxu0 0.0
    %136 = vmatprep.subr.mxu0 0.0
    %137 = vmatpush1.msra.mxu0 0.0
    %138 = vmatprep.subr.mxu0 0.0
    %139 = vmatpush1.msra.mxu0 0.0
    %140 = vmatprep.subr.mxu0 0.0
    %141 = vmatpush1.msra.mxu0 0.0
    %142 = vmatprep.subr.mxu0 0.0
    %143 = vmatpush1.msra.mxu0 0.0
    %144 = vmatprep.subr.mxu0 0.0
    %145 = vmatpush1.msra.mxu0 0.0
    %146 = vmatprep.subr.mxu0 0.0
    %147 = vmatpush1.msra.mxu0 0.0
    %148 = vmatprep.subr.mxu0 0.0
    %149 = vmatpush1.msra.mxu0 0.0
    %150 = vmatprep.subr.mxu0 0.0
    %151 = vmatpush1.msra.mxu0 0.0
    %152 = vmatprep.subr.mxu0 0.0
    %153 = vmatpush1.msra.mxu0 0.0
    %154 = vmatprep.subr.mxu0 0.0
    %155 = vmatpush1.msra.mxu0 0.0
    %156 = vmatprep.subr.mxu0 0.0
    %157 = vmatpush1.msra.mxu0 0.0
    %158 = vmatprep.subr.mxu0 0.0
    %159 = vmatpush1.msra.mxu0 0.0
    %160 = vmatprep.subr.mxu0 0.0
    %161 = vmatpush1.msra.mxu0 0.0
    %162 = vmatprep.subr.mxu0 0.0
    %163 = vmatpush1.msra.mxu0 0.0
    %164 = vmatprep.subr.mxu0 0.0
    %165 = vmatpush1.msra.mxu0 0.0
    %166 = vmatprep.subr.mxu0 0.0
    %167 = vmatpush1.msra.mxu0 0.0
    %168 = vmatprep.mubr.f32.mxu0 0.0
    %169 = vmatmul.mubr.f32.gmra.mrb[0].mxu0 %v57
    %v170 = vpop.f32.mrb[0].mxu0
    %v171 = vadd.f32 %v53, %v170
    %v172 = vpop.f32.mrb[0].mxu0
    %173 = vmatprep.mubr.f32.mxu0 0.0
    %174 = vmatmul.mubr.f32.gmra.mrb[0].mxu0 %v60
    %v175 = vpop.f32.mrb[0].mxu0
    %v176 = vadd.f32 %v53, %v175
    %v177 = vpop.f32.mrb[0].mxu0
    %178 = vmatprep.mubr.f32.mxu0 0.0
    %179 = vmatmul.mubr.f32.gmra.mrb[0].mxu0 %v63
    %v180 = vpop.f32.mrb[0].mxu0
    %v181 = vadd.f32 %v53, %v180
    %v182 = vpop.f32.mrb[0].mxu0
    %183 = vmatprep.mubr.f32.mxu0 0.0
    %184 = vmatmul.mubr.f32.gmra.mrb[0].mxu0 %v66
    %v185 = vpop.f32.mrb[0].mxu0
    %v186 = vadd.f32 %v53, %v185
    %v187 = vpop.f32.mrb[0].mxu0
    %188 = vmatprep.mubr.f32.mxu0 0.0
    %189 = vmatmul.mubr.f32.gmra.mrb[0].mxu0 %v69
    %v190 = vpop.f32.mrb[0].mxu0
    %v191 = vadd.f32 %v53, %v190
    %v192 = vpop.f32.mrb[0].mxu0
    %193 = vmatprep.mubr.f32.mxu0 0.0
    %194 = vmatmul.mubr.f32.gmra.mrb[0].mxu0 %v72
    %v195 = vpop.f32.mrb[0].mxu0
    %v196 = vadd.f32 %v53, %v195
    %v197 = vpop.f32.mrb[0].mxu0
    %198 = vmatprep.mubr.f32.mxu0 0.0
    %199 = vmatmul.mubr.f32.gmra.mrb[0].mxu0 %v75
    %v200 = vpop.f32.mrb[0].mxu0
    %v201 = vadd.f32 %v53, %v200
    %v202 = vpop.f32.mrb[0].mxu0
    %203 = vmatprep.mubr.f32.mxu0 0.0
    %204 = vmatmul.mubr.f32.gmra.mrb[0].mxu0 %v78
    %v205 = vpop.f32.mrb[0].mxu0
    %v206 = vadd.f32 %v53, %v205
    %v207 = vpop.f32.mrb[0].mxu0
    %208 = vmatprep.mubr.f32.mxu0 0.0
    %209 = vmatmul.mubr.f32.gmra.mrb[0].mxu0 %v81
    %v210 = vpop.f32.mrb[0].mxu0
    %v211 = vadd.f32 %v53, %v210
    %v212 = vpop.f32.mrb[0].mxu0
    %213 = vmatprep.mubr.f32.mxu0 0.0
    %214 = vmatmul.mubr.f32.gmra.mrb[0].mxu0 %v84
    %v215 = vpop.f32.mrb[0].mxu0
    %v216 = vadd.f32 %v53, %v215
    %v217 = vpop.f32.mrb[0].mxu0
    %218 = vmatprep.mubr.f32.mxu0 0.0
    %219 = vmatmul.mubr.f32.gmra.mrb[0].mxu0 %v87
    %v220 = vpop.f32.mrb[0].mxu0
    %v221 = vadd.f32 %v53, %v220
    %v222 = vpop.f32.mrb[0].mxu0
    %223 = vmatprep.mubr.f32.mxu0 0.0
    %224 = vmatmul.mubr.f32.gmra.mrb[0].mxu0 %v90
    %v225 = vpop.f32.mrb[0].mxu0
    %v226 = vadd.f32 %v53, %v225
    %v227 = vpop.f32.mrb[0].mxu0
    %228 = vmatprep.mubr.f32.mxu0 0.0
    %229 = vmatmul.mubr.f32.gmra.mrb[0].mxu0 %v93
    %v230 = vpop.f32.mrb[0].mxu0
    %v231 = vadd.f32 %v53, %v230
    %v232 = vpop.f32.mrb[0].mxu0
    %233 = vmatprep.mubr.f32.mxu0 0.0
    %234 = vmatmul.mubr.f32.gmra.mrb[0].mxu0 %v96
    %v235 = vpop.f32.mrb[0].mxu0
    %v236 = vadd.f32 %v53, %v235
    %v237 = vpop.f32.mrb[0].mxu0
    %238 = vmatprep.mubr.f32.mxu0 0.0
    %239 = vmatmul.mubr.f32.gmra.mrb[0].mxu0 %v99
    %v240 = vpop.f32.mrb[0].mxu0
    %v241 = vadd.f32 %v53, %v240
    %v242 = vpop.f32.mrb[0].mxu0
    %243 = vmatprep.mubr.f32.mxu0 0.0
    %244 = vmatmul.mubr.f32.gmra.mrb[0].mxu0 %v102
    %v245 = vpop.f32.mrb[0].mxu0
    %v246 = vadd.f32 %v53, %v245
    %v247 = vpop.f32.mrb[0].mxu0
    %248 = vdwg.mxu0
    %v249 = vmax.f32 %v171, 0.0
    %v250 = vmax.f32 %v176, 0.0
    %v251 = vmax.f32 %v181, 0.0
    %v252 = vmax.f32 %v186, 0.0
    %v253 = vmax.f32 %v191, 0.0
    %v254 = vmax.f32 %v196, 0.0
    %v255 = vmax.f32 %v201, 0.0
    %v256 = vmax.f32 %v206, 0.0
    %v257 = vmax.f32 %v211, 0.0
    %v258 = vmax.f32 %v216, 0.0
    %v259 = vmax.f32 %v221, 0.0
    %v260 = vmax.f32 %v226, 0.0
    %v261 = vmax.f32 %v231, 0.0
    %v262 = vmax.f32 %v236, 0.0
    %v263 = vmax.f32 %v241, 0.0
    %v264 = vmax.f32 %v246, 0.0
    %v265 = vld [vmem:[%s3] sm:$0xff]
    %v266 = vld [vmem:[%s3 + $0x8] sm:$0xff]
    %v267 = vld [vmem:[%s3 + $0x10] sm:$0xff]
    %v268 = vld [vmem:[%s3 + $0x18] sm:$0xff]
    %v269 = vld [vmem:[%s4] sm:$0x1]
    %v271 = vlaneseq
    %v272 = vshrl.u32 %v271, 7
    %v273 = vsub.s32 0, %v272
    %v274 = vrot.slane %v269, %v273
    %vm276 = vcmask 261120
    %v278 = vsel %vm276, %v249, 0
    %v281 = vsel %vm276, %v250, 0
    %v284 = vsel %vm276, %v251, 0
    %v287 = vsel %vm276, %v252, 0
    %v290 = vsel %vm276, %v253, 0
    %v293 = vsel %vm276, %v254, 0
    %v296 = vsel %vm276, %v255, 0
    %v299 = vsel %vm276, %v256, 0
    %v302 = vsel %vm276, %v257, 0
    %v305 = vsel %vm276, %v258, 0
    %v308 = vsel %vm276, %v259, 0
    %v311 = vsel %vm276, %v260, 0
    %v314 = vsel %vm276, %v261, 0
    %v317 = vsel %vm276, %v262, 0
    %v320 = vsel %vm276, %v263, 0
    %v323 = vsel %vm276, %v264, 0
    %325 = vmatprep.subr.mxu0 0.0
    %326 = vmatpush1.msra.mxu0 %v265
    %327 = vmatprep.subr.mxu0 0.0
    %328 = vmatpush1.msra.mxu0 %v266
    %329 = vmatprep.subr.mxu0 0.0
    %330 = vmatpush1.msra.mxu0 %v267
    %331 = vmatprep.subr.mxu0 0.0
    %332 = vmatpush1.msra.mxu0 %v268
    %333 = vmatprep.subr.mxu0 0.0
    %334 = vmatpush1.msra.mxu0 0.0
    %335 = vmatprep.subr.mxu0 0.0
    %336 = vmatpush1.msra.mxu0 0.0
    %337 = vmatprep.subr.mxu0 0.0
    %338 = vmatpush1.msra.mxu0 0.0
    %339 = vmatprep.subr.mxu0 0.0
    %340 = vmatpush1.msra.mxu0 0.0
    %341 = vmatprep.subr.mxu0 0.0
    %342 = vmatpush1.msra.mxu0 0.0
    %343 = vmatprep.subr.mxu0 0.0
    %344 = vmatpush1.msra.mxu0 0.0
    %345 = vmatprep.subr.mxu0 0.0
    %346 = vmatpush1.msra.mxu0 0.0
    %347 = vmatprep.subr.mxu0 0.0
    %348 = vmatpush1.msra.mxu0 0.0
    %349 = vmatprep.subr.mxu0 0.0
    %350 = vmatpush1.msra.mxu0 0.0
    %351 = vmatprep.subr.mxu0 0.0
    %352 = vmatpush1.msra.mxu0 0.0
    %353 = vmatprep.subr.mxu0 0.0
    %354 = vmatpush1.msra.mxu0 0.0
    %355 = vmatprep.subr.mxu0 0.0
    %356 = vmatpush1.msra.mxu0 0.0
    %357 = vmatprep.subr.mxu0 0.0
    %358 = vmatpush1.msra.mxu0 0.0
    %359 = vmatprep.subr.mxu0 0.0
    %360 = vmatpush1.msra.mxu0 0.0
    %361 = vmatprep.subr.mxu0 0.0
    %362 = vmatpush1.msra.mxu0 0.0
    %363 = vmatprep.subr.mxu0 0.0
    %364 = vmatpush1.msra.mxu0 0.0
    %365 = vmatprep.subr.mxu0 0.0
    %366 = vmatpush1.msra.mxu0 0.0
    %367 = vmatprep.subr.mxu0 0.0
    %368 = vmatpush1.msra.mxu0 0.0
    %369 = vmatprep.subr.mxu0 0.0
    %370 = vmatpush1.msra.mxu0 0.0
    %371 = vmatprep.subr.mxu0 0.0
    %372 = vmatpush1.msra.mxu0 0.0
    %373 = vmatprep.subr.mxu0 0.0
    %374 = vmatpush1.msra.mxu0 0.0
    %375 = vmatprep.subr.mxu0 0.0
    %376 = vmatpush1.msra.mxu0 0.0
    %377 = vmatprep.subr.mxu0 0.0
    %378 = vmatpush1.msra.mxu0 0.0
    %379 = vmatprep.subr.mxu0 0.0
    %380 = vmatpush1.msra.mxu0 0.0
    %381 = vmatprep.subr.mxu0 0.0
    %382 = vmatpush1.msra.mxu0 0.0
    %383 = vmatprep.subr.mxu0 0.0
    %384 = vmatpush1.msra.mxu0 0.0
    %385 = vmatprep.subr.mxu0 0.0
    %386 = vmatpush1.msra.mxu0 0.0
    %387 = vmatprep.subr.mxu0 0.0
    %388 = vmatpush1.msra.mxu0 0.0
    %389 = vmatprep.mubr.f32.mxu0 0.0
    %390 = vmatmul.mubr.f32.gmra.mrb[0].mxu0 %v278
    %v391 = vpop.f32.mrb[0].mxu0
    %v392 = vadd.f32 %v274, %v391
    %v393 = vpop.f32.mrb[0].mxu0
    %394 = vmatprep.mubr.f32.mxu0 0.0
    %395 = vmatmul.mubr.f32.gmra.mrb[0].mxu0 %v281
    %v396 = vpop.f32.mrb[0].mxu0
    %v397 = vadd.f32 %v274, %v396
    %v398 = vpop.f32.mrb[0].mxu0
    %399 = vmatprep.mubr.f32.mxu0 0.0
    %400 = vmatmul.mubr.f32.gmra.mrb[0].mxu0 %v284
    %v401 = vpop.f32.mrb[0].mxu0
    %v402 = vadd.f32 %v274, %v401
    %v403 = vpop.f32.mrb[0].mxu0
    %404 = vmatprep.mubr.f32.mxu0 0.0
    %405 = vmatmul.mubr.f32.gmra.mrb[0].mxu0 %v287
    %v406 = vpop.f32.mrb[0].mxu0
    %v407 = vadd.f32 %v274, %v406
    %v408 = vpop.f32.mrb[0].mxu0
    %409 = vmatprep.mubr.f32.mxu0 0.0
    %410 = vmatmul.mubr.f32.gmra.mrb[0].mxu0 %v290
    %v411 = vpop.f32.mrb[0].mxu0
    %v412 = vadd.f32 %v274, %v411
    %v413 = vpop.f32.mrb[0].mxu0
    %414 = vmatprep.mubr.f32.mxu0 0.0
    %415 = vmatmul.mubr.f32.gmra.mrb[0].mxu0 %v293
    %v416 = vpop.f32.mrb[0].mxu0
    %v417 = vadd.f32 %v274, %v416
    %v418 = vpop.f32.mrb[0].mxu0
    %419 = vmatprep.mubr.f32.mxu0 0.0
    %420 = vmatmul.mubr.f32.gmra.mrb[0].mxu0 %v296
    %v421 = vpop.f32.mrb[0].mxu0
    %v422 = vadd.f32 %v274, %v421
    %v423 = vpop.f32.mrb[0].mxu0
    %424 = vmatprep.mubr.f32.mxu0 0.0
    %425 = vmatmul.mubr.f32.gmra.mrb[0].mxu0 %v299
    %v426 = vpop.f32.mrb[0].mxu0
    %v427 = vadd.f32 %v274, %v426
    %v428 = vpop.f32.mrb[0].mxu0
    %429 = vmatprep.mubr.f32.mxu0 0.0
    %430 = vmatmul.mubr.f32.gmra.mrb[0].mxu0 %v302
    %v431 = vpop.f32.mrb[0].mxu0
    %v432 = vadd.f32 %v274, %v431
    %v433 = vpop.f32.mrb[0].mxu0
    %434 = vmatprep.mubr.f32.mxu0 0.0
    %435 = vmatmul.mubr.f32.gmra.mrb[0].mxu0 %v305
    %v436 = vpop.f32.mrb[0].mxu0
    %v437 = vadd.f32 %v274, %v436
    %v438 = vpop.f32.mrb[0].mxu0
    %439 = vmatprep.mubr.f32.mxu0 0.0
    %440 = vmatmul.mubr.f32.gmra.mrb[0].mxu0 %v308
    %v441 = vpop.f32.mrb[0].mxu0
    %v442 = vadd.f32 %v274, %v441
    %v443 = vpop.f32.mrb[0].mxu0
    %444 = vmatprep.mubr.f32.mxu0 0.0
    %445 = vmatmul.mubr.f32.gmra.mrb[0].mxu0 %v311
    %v446 = vpop.f32.mrb[0].mxu0
    %v447 = vadd.f32 %v274, %v446
    %v448 = vpop.f32.mrb[0].mxu0
    %449 = vmatprep.mubr.f32.mxu0 0.0
    %450 = vmatmul.mubr.f32.gmra.mrb[0].mxu0 %v314
    %v451 = vpop.f32.mrb[0].mxu0
    %v452 = vadd.f32 %v274, %v451
    %v453 = vpop.f32.mrb[0].mxu0
    %454 = vmatprep.mubr.f32.mxu0 0.0
    %455 = vmatmul.mubr.f32.gmra.mrb[0].mxu0 %v317
    %v456 = vpop.f32.mrb[0].mxu0
    %v457 = vadd.f32 %v274, %v456
    %v458 = vpop.f32.mrb[0].mxu0
    %459 = vmatprep.mubr.f32.mxu0 0.0
    %460 = vmatmul.mubr.f32.gmra.mrb[0].mxu0 %v320
    %v461 = vpop.f32.mrb[0].mxu0
    %v462 = vadd.f32 %v274, %v461
    %v463 = vpop.f32.mrb[0].mxu0
    %464 = vmatprep.mubr.f32.mxu0 0.0
    %465 = vmatmul.mubr.f32.gmra.mrb[0].mxu0 %v323
    %v466 = vpop.f32.mrb[0].mxu0
    %v467 = vadd.f32 %v274, %v466
    %v468 = vpop.f32.mrb[0].mxu0
    %469 = vdwg.mxu0
    %v470 = vtanh.pop %v392
    %v471 = vtanh.pop %v397
    %v472 = vtanh.pop %v402
    %v473 = vtanh.pop %v407
    %v474 = vtanh.pop %v412
    %v475 = vtanh.pop %v417
    %v476 = vtanh.pop %v422
    %v477 = vtanh.pop %v427
    %v478 = vtanh.pop %v432
    %v479 = vtanh.pop %v437
    %v480 = vtanh.pop %v442
    %v481 = vtanh.pop %v447
    %v482 = vtanh.pop %v452
    %v483 = vtanh.pop %v457
    %v484 = vtanh.pop %v462
    %v485 = vtanh.pop %v467
    %vm486 = vcmask 15360
    %487 = vst.msk [vmem:[%s7] sm:$0xff] %vm486, %v470
    %488 = vst.msk [vmem:[%s7 + $0x8] sm:$0xff] %vm486, %v471
    %489 = vst.msk [vmem:[%s7 + $0x10] sm:$0xff] %vm486, %v472
    %490 = vst.msk [vmem:[%s7 + $0x18] sm:$0xff] %vm486, %v473
    %491 = vst.msk [vmem:[%s7 + $0x20] sm:$0xff] %vm486, %v474
    %492 = vst.msk [vmem:[%s7 + $0x28] sm:$0xff] %vm486, %v475
    %493 = vst.msk [vmem:[%s7 + $0x30] sm:$0xff] %vm486, %v476
    %494 = vst.msk [vmem:[%s7 + $0x38] sm:$0xff] %vm486, %v477
    %495 = vst.msk [vmem:[%s7 + $0x40] sm:$0xff] %vm486, %v478
    %496 = vst.msk [vmem:[%s7 + $0x48] sm:$0xff] %vm486, %v479
    %497 = vst.msk [vmem:[%s7 + $0x50] sm:$0xff] %vm486, %v480
    %498 = vst.msk [vmem:[%s7 + $0x58] sm:$0xff] %vm486, %v481
    %499 = vst.msk [vmem:[%s7 + $0x60] sm:$0xff] %vm486, %v482
    %500 = vst.msk [vmem:[%s7 + $0x68] sm:$0xff] %vm486, %v483
    %501 = vst.msk [vmem:[%s7 + $0x70] sm:$0xff] %vm486, %v484
    %502 = vst.msk [vmem:[%s7 + $0x78] sm:$0xff] %vm486, %v485
    %v503 = vld [vmem:[%s5] sm:$0x1]
    %505 = vset.pattern.permute.xlu0 0
    %506 = vperm.xlu0 %505, %v470
    %v507 = vpop.permute.xlu0 %506
    %510 = vset.pattern.permute.xlu0 0
    %511 = vperm.xlu0 %510, %v471
    %v512 = vpop.permute.xlu0 %511
    %515 = vset.pattern.permute.xlu0 0
    %516 = vperm.xlu0 %515, %v472
    %v517 = vpop.permute.xlu0 %516
    %520 = vset.pattern.permute.xlu0 0
    %521 = vperm.xlu0 %520, %v473
    %v522 = vpop.permute.xlu0 %521
    %525 = vset.pattern.permute.xlu0 0
    %526 = vperm.xlu0 %525, %v474
    %v527 = vpop.permute.xlu0 %526
    %530 = vset.pattern.permute.xlu0 0
    %531 = vperm.xlu0 %530, %v475
    %v532 = vpop.permute.xlu0 %531
    %535 = vset.pattern.permute.xlu0 0
    %536 = vperm.xlu0 %535, %v476
    %v537 = vpop.permute.xlu0 %536
    %540 = vset.pattern.permute.xlu0 0
    %541 = vperm.xlu0 %540, %v477
    %v542 = vpop.permute.xlu0 %541
    %545 = vset.pattern.permute.xlu0 0
    %546 = vperm.xlu0 %545, %v478
    %v547 = vpop.permute.xlu0 %546
    %550 = vset.pattern.permute.xlu0 0
    %551 = vperm.xlu0 %550, %v479
    %v552 = vpop.permute.xlu0 %551
    %555 = vset.pattern.permute.xlu0 0
    %556 = vperm.xlu0 %555, %v480
    %v557 = vpop.permute.xlu0 %556
    %560 = vset.pattern.permute.xlu0 0
    %561 = vperm.xlu0 %560, %v481
    %v562 = vpop.permute.xlu0 %561
    %565 = vset.pattern.permute.xlu0 0
    %566 = vperm.xlu0 %565, %v482
    %v567 = vpop.permute.xlu0 %566
    %570 = vset.pattern.permute.xlu0 0
    %571 = vperm.xlu0 %570, %v483
    %v572 = vpop.permute.xlu0 %571
    %575 = vset.pattern.permute.xlu0 0
    %576 = vperm.xlu0 %575, %v484
    %v577 = vpop.permute.xlu0 %576
    %580 = vset.pattern.permute.xlu0 0
    %581 = vperm.xlu0 %580, %v485
    %v582 = vpop.permute.xlu0 %581
    %v584 = vlaneseq
    %v585 = vshrl.u32 %v584, 7
    %v586 = vsub.s32 0, %v585
    %v587 = vrot.slane %v503, %v586
    %v588 = vsub.f32 %v507, %v587
    %v589 = vsub.f32 %v512, %v587
    %v590 = vsub.f32 %v517, %v587
    %v591 = vsub.f32 %v522, %v587
    %v592 = vsub.f32 %v527, %v587
    %v593 = vsub.f32 %v532, %v587
    %v594 = vsub.f32 %v537, %v587
    %v595 = vsub.f32 %v542, %v587
    %v596 = vsub.f32 %v547, %v587
    %v597 = vsub.f32 %v552, %v587
    %v598 = vsub.f32 %v557, %v587
    %v599 = vsub.f32 %v562, %v587
    %v600 = vsub.f32 %v567, %v587
    %v601 = vsub.f32 %v572, %v587
    %v602 = vsub.f32 %v577, %v587
    %v603 = vsub.f32 %v582, %v587
    %v604 = vand.u32 2147483647, %v588
    %v605 = vand.u32 2147483647, %v589
    %v606 = vand.u32 2147483647, %v590
    %v607 = vand.u32 2147483647, %v591
    %v608 = vand.u32 2147483647, %v592
    %v609 = vand.u32 2147483647, %v593
    %v610 = vand.u32 2147483647, %v594
    %v611 = vand.u32 2147483647, %v595
    %v612 = vand.u32 2147483647, %v596
    %v613 = vand.u32 2147483647, %v597
    %v614 = vand.u32 2147483647, %v598
    %v615 = vand.u32 2147483647, %v599
    %v616 = vand.u32 2147483647, %v600
    %v617 = vand.u32 2147483647, %v601
    %v618 = vand.u32 2147483647, %v602
    %v619 = vand.u32 2147483647, %v603
    %v620 = vmul.f32 %v604, 3.1818182
    %v621 = vmul.f32 %v605, 3.1818182
    %v622 = vmul.f32 %v606, 3.1818182
    %v623 = vmul.f32 %v607, 3.1818182
    %v624 = vmul.f32 %v608, 3.1818182
    %v625 = vmul.f32 %v609, 3.1818182
    %v626 = vmul.f32 %v610, 3.1818182
    %v627 = vmul.f32 %v611, 3.1818182
    %v628 = vmul.f32 %v612, 3.1818182
    %v629 = vmul.f32 %v613, 3.1818182
    %v630 = vmul.f32 %v614, 3.1818182
    %v631 = vmul.f32 %v615, 3.1818182
    %v632 = vmul.f32 %v616, 3.1818182
    %v633 = vmul.f32 %v617, 3.1818182
    %v634 = vmul.f32 %v618, 3.1818182
    %v635 = vmul.f32 %v619, 3.1818182
    %v636 = vmul.f32 %v620, 1.5
    %v637 = vmul.f32 %v621, 1.5
    %v638 = vmul.f32 %v622, 1.5
    %v639 = vmul.f32 %v623, 1.5
    %v640 = vmul.f32 %v624, 1.5
    %v641 = vmul.f32 %v625, 1.5
    %v642 = vmul.f32 %v626, 1.5
    %v643 = vmul.f32 %v627, 1.5
    %v644 = vmul.f32 %v628, 1.5
    %v645 = vmul.f32 %v629, 1.5
    %v646 = vmul.f32 %v630, 1.5
    %v647 = vmul.f32 %v631, 1.5
    %v648 = vmul.f32 %v632, 1.5
    %v649 = vmul.f32 %v633, 1.5
    %v650 = vmul.f32 %v634, 1.5
    %v651 = vmul.f32 %v635, 1.5
    %v652 = vsub.f32 %v636, 2.5
    %v653 = vsub.f32 %v637, 2.5
    %v654 = vsub.f32 %v638, 2.5
    %v655 = vsub.f32 %v639, 2.5
    %v656 = vsub.f32 %v640, 2.5
    %v657 = vsub.f32 %v641, 2.5
    %v658 = vsub.f32 %v642, 2.5
    %v659 = vsub.f32 %v643, 2.5
    %v660 = vsub.f32 %v644, 2.5
    %v661 = vsub.f32 %v645, 2.5
    %v662 = vsub.f32 %v646, 2.5
    %v663 = vsub.f32 %v647, 2.5
    %v664 = vsub.f32 %v648, 2.5
    %v665 = vsub.f32 %v649, 2.5
    %v666 = vsub.f32 %v650, 2.5
    %v667 = vsub.f32 %v651, 2.5
    %v668 = vmul.f32 %v652, %v620
    %v669 = vmul.f32 %v653, %v621
    %v670 = vmul.f32 %v654, %v622
    %v671 = vmul.f32 %v655, %v623
    %v672 = vmul.f32 %v656, %v624
    %v673 = vmul.f32 %v657, %v625
    %v674 = vmul.f32 %v658, %v626
    %v675 = vmul.f32 %v659, %v627
    %v676 = vmul.f32 %v660, %v628
    %v677 = vmul.f32 %v661, %v629
    %v678 = vmul.f32 %v662, %v630
    %v679 = vmul.f32 %v663, %v631
    %v680 = vmul.f32 %v664, %v632
    %v681 = vmul.f32 %v665, %v633
    %v682 = vmul.f32 %v666, %v634
    %v683 = vmul.f32 %v667, %v635
    %v684 = vmul.f32 %v668, %v620
    %v685 = vmul.f32 %v669, %v621
    %v686 = vmul.f32 %v670, %v622
    %v687 = vmul.f32 %v671, %v623
    %v688 = vmul.f32 %v672, %v624
    %v689 = vmul.f32 %v673, %v625
    %v690 = vmul.f32 %v674, %v626
    %v691 = vmul.f32 %v675, %v627
    %v692 = vmul.f32 %v676, %v628
    %v693 = vmul.f32 %v677, %v629
    %v694 = vmul.f32 %v678, %v630
    %v695 = vmul.f32 %v679, %v631
    %v696 = vmul.f32 %v680, %v632
    %v697 = vmul.f32 %v681, %v633
    %v698 = vmul.f32 %v682, %v634
    %v699 = vmul.f32 %v683, %v635
    %v700 = vadd.f32 %v684, 1.0
    %v701 = vadd.f32 %v685, 1.0
    %v702 = vadd.f32 %v686, 1.0
    %v703 = vadd.f32 %v687, 1.0
    %v704 = vadd.f32 %v688, 1.0
    %v705 = vadd.f32 %v689, 1.0
    %v706 = vadd.f32 %v690, 1.0
    %v707 = vadd.f32 %v691, 1.0
    %v708 = vadd.f32 %v692, 1.0
    %v709 = vadd.f32 %v693, 1.0
    %v710 = vadd.f32 %v694, 1.0
    %v711 = vadd.f32 %v695, 1.0
    %v712 = vadd.f32 %v696, 1.0
    %v713 = vadd.f32 %v697, 1.0
    %v714 = vadd.f32 %v698, 1.0
    %v715 = vadd.f32 %v699, 1.0
    %v716 = vmul.f32 %v620, -0.5
    %v717 = vmul.f32 %v621, -0.5
    %v718 = vmul.f32 %v622, -0.5
    %v719 = vmul.f32 %v623, -0.5
    %v720 = vmul.f32 %v624, -0.5
    %v721 = vmul.f32 %v625, -0.5
    %v722 = vmul.f32 %v626, -0.5
    %v723 = vmul.f32 %v627, -0.5
    %v724 = vmul.f32 %v628, -0.5
    %v725 = vmul.f32 %v629, -0.5
    %v726 = vmul.f32 %v630, -0.5
    %v727 = vmul.f32 %v631, -0.5
    %v728 = vmul.f32 %v632, -0.5
    %v729 = vmul.f32 %v633, -0.5
    %v730 = vmul.f32 %v634, -0.5
    %v731 = vmul.f32 %v635, -0.5
    %v732 = vadd.f32 %v716, 2.5
    %v733 = vadd.f32 %v717, 2.5
    %v734 = vadd.f32 %v718, 2.5
    %v735 = vadd.f32 %v719, 2.5
    %v736 = vadd.f32 %v720, 2.5
    %v737 = vadd.f32 %v721, 2.5
    %v738 = vadd.f32 %v722, 2.5
    %v739 = vadd.f32 %v723, 2.5
    %v740 = vadd.f32 %v724, 2.5
    %v741 = vadd.f32 %v725, 2.5
    %v742 = vadd.f32 %v726, 2.5
    %v743 = vadd.f32 %v727, 2.5
    %v744 = vadd.f32 %v728, 2.5
    %v745 = vadd.f32 %v729, 2.5
    %v746 = vadd.f32 %v730, 2.5
    %v747 = vadd.f32 %v731, 2.5
    %v748 = vmul.f32 %v732, %v620
    %v749 = vmul.f32 %v733, %v621
    %v750 = vmul.f32 %v734, %v622
    %v751 = vmul.f32 %v735, %v623
    %v752 = vmul.f32 %v736, %v624
    %v753 = vmul.f32 %v737, %v625
    %v754 = vmul.f32 %v738, %v626
    %v755 = vmul.f32 %v739, %v627
    %v756 = vmul.f32 %v740, %v628
    %v757 = vmul.f32 %v741, %v629
    %v758 = vmul.f32 %v742, %v630
    %v759 = vmul.f32 %v743, %v631
    %v760 = vmul.f32 %v744, %v632
    %v761 = vmul.f32 %v745, %v633
    %v762 = vmul.f32 %v746, %v634
    %v763 = vmul.f32 %v747, %v635
    %v764 = vsub.f32 %v748, 4.0
    %v765 = vsub.f32 %v749, 4.0
    %v766 = vsub.f32 %v750, 4.0
    %v767 = vsub.f32 %v751, 4.0
    %v768 = vsub.f32 %v752, 4.0
    %v769 = vsub.f32 %v753, 4.0
    %v770 = vsub.f32 %v754, 4.0
    %v771 = vsub.f32 %v755, 4.0
    %v772 = vsub.f32 %v756, 4.0
    %v773 = vsub.f32 %v757, 4.0
    %v774 = vsub.f32 %v758, 4.0
    %v775 = vsub.f32 %v759, 4.0
    %v776 = vsub.f32 %v760, 4.0
    %v777 = vsub.f32 %v761, 4.0
    %v778 = vsub.f32 %v762, 4.0
    %v779 = vsub.f32 %v763, 4.0
    %v780 = vmul.f32 %v764, %v620
    %v781 = vmul.f32 %v765, %v621
    %v782 = vmul.f32 %v766, %v622
    %v783 = vmul.f32 %v767, %v623
    %v784 = vmul.f32 %v768, %v624
    %v785 = vmul.f32 %v769, %v625
    %v786 = vmul.f32 %v770, %v626
    %v787 = vmul.f32 %v771, %v627
    %v788 = vmul.f32 %v772, %v628
    %v789 = vmul.f32 %v773, %v629
    %v790 = vmul.f32 %v774, %v630
    %v791 = vmul.f32 %v775, %v631
    %v792 = vmul.f32 %v776, %v632
    %v793 = vmul.f32 %v777, %v633
    %v794 = vmul.f32 %v778, %v634
    %v795 = vmul.f32 %v779, %v635
    %v796 = vadd.f32 %v780, 2.0
    %v797 = vadd.f32 %v781, 2.0
    %v798 = vadd.f32 %v782, 2.0
    %v799 = vadd.f32 %v783, 2.0
    %v800 = vadd.f32 %v784, 2.0
    %v801 = vadd.f32 %v785, 2.0
    %v802 = vadd.f32 %v786, 2.0
    %v803 = vadd.f32 %v787, 2.0
    %v804 = vadd.f32 %v788, 2.0
    %v805 = vadd.f32 %v789, 2.0
    %v806 = vadd.f32 %v790, 2.0
    %v807 = vadd.f32 %v791, 2.0
    %v808 = vadd.f32 %v792, 2.0
    %v809 = vadd.f32 %v793, 2.0
    %v810 = vadd.f32 %v794, 2.0
    %v811 = vadd.f32 %v795, 2.0
    %vm812 = vcmp.lt.f32.partialorder %v620, 1.0
    %vm813 = vcmp.lt.f32.partialorder %v621, 1.0
    %vm814 = vcmp.lt.f32.partialorder %v622, 1.0
    %vm815 = vcmp.lt.f32.partialorder %v623, 1.0
    %vm816 = vcmp.lt.f32.partialorder %v624, 1.0
    %vm817 = vcmp.lt.f32.partialorder %v625, 1.0
    %vm818 = vcmp.lt.f32.partialorder %v626, 1.0
    %vm819 = vcmp.lt.f32.partialorder %v627, 1.0
    %vm820 = vcmp.lt.f32.partialorder %v628, 1.0
    %vm821 = vcmp.lt.f32.partialorder %v629, 1.0
    %vm822 = vcmp.lt.f32.partialorder %v630, 1.0
    %vm823 = vcmp.lt.f32.partialorder %v631, 1.0
    %vm824 = vcmp.lt.f32.partialorder %v632, 1.0
    %vm825 = vcmp.lt.f32.partialorder %v633, 1.0
    %vm826 = vcmp.lt.f32.partialorder %v634, 1.0
    %vm827 = vcmp.lt.f32.partialorder %v635, 1.0
    %vm828 = vcmp.lt.f32.partialorder %v620, 2.0
    %vm829 = vcmp.lt.f32.partialorder %v621, 2.0
    %vm830 = vcmp.lt.f32.partialorder %v622, 2.0
    %vm831 = vcmp.lt.f32.partialorder %v623, 2.0
    %vm832 = vcmp.lt.f32.partialorder %v624, 2.0
    %vm833 = vcmp.lt.f32.partialorder %v625, 2.0
    %vm834 = vcmp.lt.f32.partialorder %v626, 2.0
    %vm835 = vcmp.lt.f32.partialorder %v627, 2.0
    %vm836 = vcmp.lt.f32.partialorder %v628, 2.0
    %vm837 = vcmp.lt.f32.partialorder %v629, 2.0
    %vm838 = vcmp.lt.f32.partialorder %v630, 2.0
    %vm839 = vcmp.lt.f32.partialorder %v631, 2.0
    %vm840 = vcmp.lt.f32.partialorder %v632, 2.0
    %vm841 = vcmp.lt.f32.partialorder %v633, 2.0
    %vm842 = vcmp.lt.f32.partialorder %v634, 2.0
    %vm843 = vcmp.lt.f32.partialorder %v635, 2.0
    %v844 = vsel %vm828, %v796, 0.0
    %v845 = vsel %vm829, %v797, 0.0
    %v846 = vsel %vm830, %v798, 0.0
    %v847 = vsel %vm831, %v799, 0.0
    %v848 = vsel %vm832, %v800, 0.0
    %v849 = vsel %vm833, %v801, 0.0
    %v850 = vsel %vm834, %v802, 0.0
    %v851 = vsel %vm835, %v803, 0.0
    %v852 = vsel %vm836, %v804, 0.0
    %v853 = vsel %vm837, %v805, 0.0
    %v854 = vsel %vm838, %v806, 0.0
    %v855 = vsel %vm839, %v807, 0.0
    %v856 = vsel %vm840, %v808, 0.0
    %v857 = vsel %vm841, %v809, 0.0
    %v858 = vsel %vm842, %v810, 0.0
    %v859 = vsel %vm843, %v811, 0.0
    %v860 = vsel %vm812, %v700, %v844
    %v861 = vsel %vm813, %v701, %v845
    %v862 = vsel %vm814, %v702, %v846
    %v863 = vsel %vm815, %v703, %v847
    %v864 = vsel %vm816, %v704, %v848
    %v865 = vsel %vm817, %v705, %v849
    %v866 = vsel %vm818, %v706, %v850
    %v867 = vsel %vm819, %v707, %v851
    %v868 = vsel %vm820, %v708, %v852
    %v869 = vsel %vm821, %v709, %v853
    %v870 = vsel %vm822, %v710, %v854
    %v871 = vsel %vm823, %v711, %v855
    %v872 = vsel %vm824, %v712, %v856
    %v873 = vsel %vm825, %v713, %v857
    %v874 = vsel %vm826, %v714, %v858
    %v875 = vsel %vm827, %v715, %v859
    %v876 = vld [vmem:[%s5 + $0x1] sm:$0x1]
    %877 = vset.pattern.permute.xlu0 1
    %878 = vperm.xlu0 %877, %v470
    %v879 = vpop.permute.xlu0 %878
    %881 = vset.pattern.permute.xlu0 1
    %882 = vperm.xlu0 %881, %v471
    %v883 = vpop.permute.xlu0 %882
    %885 = vset.pattern.permute.xlu0 1
    %886 = vperm.xlu0 %885, %v472
    %v887 = vpop.permute.xlu0 %886
    %889 = vset.pattern.permute.xlu0 1
    %890 = vperm.xlu0 %889, %v473
    %v891 = vpop.permute.xlu0 %890
    %893 = vset.pattern.permute.xlu0 1
    %894 = vperm.xlu0 %893, %v474
    %v895 = vpop.permute.xlu0 %894
    %897 = vset.pattern.permute.xlu0 1
    %898 = vperm.xlu0 %897, %v475
    %v899 = vpop.permute.xlu0 %898
    %901 = vset.pattern.permute.xlu0 1
    %902 = vperm.xlu0 %901, %v476
    %v903 = vpop.permute.xlu0 %902
    %905 = vset.pattern.permute.xlu0 1
    %906 = vperm.xlu0 %905, %v477
    %v907 = vpop.permute.xlu0 %906
    %909 = vset.pattern.permute.xlu0 1
    %910 = vperm.xlu0 %909, %v478
    %v911 = vpop.permute.xlu0 %910
    %913 = vset.pattern.permute.xlu0 1
    %914 = vperm.xlu0 %913, %v479
    %v915 = vpop.permute.xlu0 %914
    %917 = vset.pattern.permute.xlu0 1
    %918 = vperm.xlu0 %917, %v480
    %v919 = vpop.permute.xlu0 %918
    %921 = vset.pattern.permute.xlu0 1
    %922 = vperm.xlu0 %921, %v481
    %v923 = vpop.permute.xlu0 %922
    %925 = vset.pattern.permute.xlu0 1
    %926 = vperm.xlu0 %925, %v482
    %v927 = vpop.permute.xlu0 %926
    %929 = vset.pattern.permute.xlu0 1
    %930 = vperm.xlu0 %929, %v483
    %v931 = vpop.permute.xlu0 %930
    %933 = vset.pattern.permute.xlu0 1
    %934 = vperm.xlu0 %933, %v484
    %v935 = vpop.permute.xlu0 %934
    %937 = vset.pattern.permute.xlu0 1
    %938 = vperm.xlu0 %937, %v485
    %v939 = vpop.permute.xlu0 %938
    %v941 = vlaneseq
    %v942 = vshrl.u32 %v941, 7
    %v943 = vsub.s32 0, %v942
    %v944 = vrot.slane %v876, %v943
    %v945 = vsub.f32 %v879, %v944
    %v946 = vsub.f32 %v883, %v944
    %v947 = vsub.f32 %v887, %v944
    %v948 = vsub.f32 %v891, %v944
    %v949 = vsub.f32 %v895, %v944
    %v950 = vsub.f32 %v899, %v944
    %v951 = vsub.f32 %v903, %v944
    %v952 = vsub.f32 %v907, %v944
    %v953 = vsub.f32 %v911, %v944
    %v954 = vsub.f32 %v915, %v944
    %v955 = vsub.f32 %v919, %v944
    %v956 = vsub.f32 %v923, %v944
    %v957 = vsub.f32 %v927, %v944
    %v958 = vsub.f32 %v931, %v944
    %v959 = vsub.f32 %v935, %v944
    %v960 = vsub.f32 %v939, %v944
    %v961 = vand.u32 2147483647, %v945
    %v962 = vand.u32 2147483647, %v946
    %v963 = vand.u32 2147483647, %v947
    %v964 = vand.u32 2147483647, %v948
    %v965 = vand.u32 2147483647, %v949
    %v966 = vand.u32 2147483647, %v950
    %v967 = vand.u32 2147483647, %v951
    %v968 = vand.u32 2147483647, %v952
    %v969 = vand.u32 2147483647, %v953
    %v970 = vand.u32 2147483647, %v954
    %v971 = vand.u32 2147483647, %v955
    %v972 = vand.u32 2147483647, %v956
    %v973 = vand.u32 2147483647, %v957
    %v974 = vand.u32 2147483647, %v958
    %v975 = vand.u32 2147483647, %v959
    %v976 = vand.u32 2147483647, %v960
    %v977 = vmul.f32 %v961, 3.1818182
    %v978 = vmul.f32 %v962, 3.1818182
    %v979 = vmul.f32 %v963, 3.1818182
    %v980 = vmul.f32 %v964, 3.1818182
    %v981 = vmul.f32 %v965, 3.1818182
    %v982 = vmul.f32 %v966, 3.1818182
    %v983 = vmul.f32 %v967, 3.1818182
    %v984 = vmul.f32 %v968, 3.1818182
    %v985 = vmul.f32 %v969, 3.1818182
    %v986 = vmul.f32 %v970, 3.1818182
    %v987 = vmul.f32 %v971, 3.1818182
    %v988 = vmul.f32 %v972, 3.1818182
    %v989 = vmul.f32 %v973, 3.1818182
    %v990 = vmul.f32 %v974, 3.1818182
    %v991 = vmul.f32 %v975, 3.1818182
    %v992 = vmul.f32 %v976, 3.1818182
    %v993 = vmul.f32 %v977, 1.5
    %v994 = vmul.f32 %v978, 1.5
    %v995 = vmul.f32 %v979, 1.5
    %v996 = vmul.f32 %v980, 1.5
    %v997 = vmul.f32 %v981, 1.5
    %v998 = vmul.f32 %v982, 1.5
    %v999 = vmul.f32 %v983, 1.5
    %v1000 = vmul.f32 %v984, 1.5
    %v1001 = vmul.f32 %v985, 1.5
    %v1002 = vmul.f32 %v986, 1.5
    %v1003 = vmul.f32 %v987, 1.5
    %v1004 = vmul.f32 %v988, 1.5
    %v1005 = vmul.f32 %v989, 1.5
    %v1006 = vmul.f32 %v990, 1.5
    %v1007 = vmul.f32 %v991, 1.5
    %v1008 = vmul.f32 %v992, 1.5
    %v1009 = vsub.f32 %v993, 2.5
    %v1010 = vsub.f32 %v994, 2.5
    %v1011 = vsub.f32 %v995, 2.5
    %v1012 = vsub.f32 %v996, 2.5
    %v1013 = vsub.f32 %v997, 2.5
    %v1014 = vsub.f32 %v998, 2.5
    %v1015 = vsub.f32 %v999, 2.5
    %v1016 = vsub.f32 %v1000, 2.5
    %v1017 = vsub.f32 %v1001, 2.5
    %v1018 = vsub.f32 %v1002, 2.5
    %v1019 = vsub.f32 %v1003, 2.5
    %v1020 = vsub.f32 %v1004, 2.5
    %v1021 = vsub.f32 %v1005, 2.5
    %v1022 = vsub.f32 %v1006, 2.5
    %v1023 = vsub.f32 %v1007, 2.5
    %v1024 = vsub.f32 %v1008, 2.5
    %v1025 = vmul.f32 %v1009, %v977
    %v1026 = vmul.f32 %v1010, %v978
    %v1027 = vmul.f32 %v1011, %v979
    %v1028 = vmul.f32 %v1012, %v980
    %v1029 = vmul.f32 %v1013, %v981
    %v1030 = vmul.f32 %v1014, %v982
    %v1031 = vmul.f32 %v1015, %v983
    %v1032 = vmul.f32 %v1016, %v984
    %v1033 = vmul.f32 %v1017, %v985
    %v1034 = vmul.f32 %v1018, %v986
    %v1035 = vmul.f32 %v1019, %v987
    %v1036 = vmul.f32 %v1020, %v988
    %v1037 = vmul.f32 %v1021, %v989
    %v1038 = vmul.f32 %v1022, %v990
    %v1039 = vmul.f32 %v1023, %v991
    %v1040 = vmul.f32 %v1024, %v992
    %v1041 = vmul.f32 %v1025, %v977
    %v1042 = vmul.f32 %v1026, %v978
    %v1043 = vmul.f32 %v1027, %v979
    %v1044 = vmul.f32 %v1028, %v980
    %v1045 = vmul.f32 %v1029, %v981
    %v1046 = vmul.f32 %v1030, %v982
    %v1047 = vmul.f32 %v1031, %v983
    %v1048 = vmul.f32 %v1032, %v984
    %v1049 = vmul.f32 %v1033, %v985
    %v1050 = vmul.f32 %v1034, %v986
    %v1051 = vmul.f32 %v1035, %v987
    %v1052 = vmul.f32 %v1036, %v988
    %v1053 = vmul.f32 %v1037, %v989
    %v1054 = vmul.f32 %v1038, %v990
    %v1055 = vmul.f32 %v1039, %v991
    %v1056 = vmul.f32 %v1040, %v992
    %v1057 = vadd.f32 %v1041, 1.0
    %v1058 = vadd.f32 %v1042, 1.0
    %v1059 = vadd.f32 %v1043, 1.0
    %v1060 = vadd.f32 %v1044, 1.0
    %v1061 = vadd.f32 %v1045, 1.0
    %v1062 = vadd.f32 %v1046, 1.0
    %v1063 = vadd.f32 %v1047, 1.0
    %v1064 = vadd.f32 %v1048, 1.0
    %v1065 = vadd.f32 %v1049, 1.0
    %v1066 = vadd.f32 %v1050, 1.0
    %v1067 = vadd.f32 %v1051, 1.0
    %v1068 = vadd.f32 %v1052, 1.0
    %v1069 = vadd.f32 %v1053, 1.0
    %v1070 = vadd.f32 %v1054, 1.0
    %v1071 = vadd.f32 %v1055, 1.0
    %v1072 = vadd.f32 %v1056, 1.0
    %v1073 = vmul.f32 %v977, -0.5
    %v1074 = vmul.f32 %v978, -0.5
    %v1075 = vmul.f32 %v979, -0.5
    %v1076 = vmul.f32 %v980, -0.5
    %v1077 = vmul.f32 %v981, -0.5
    %v1078 = vmul.f32 %v982, -0.5
    %v1079 = vmul.f32 %v983, -0.5
    %v1080 = vmul.f32 %v984, -0.5
    %v1081 = vmul.f32 %v985, -0.5
    %v1082 = vmul.f32 %v986, -0.5
    %v1083 = vmul.f32 %v987, -0.5
    %v1084 = vmul.f32 %v988, -0.5
    %v1085 = vmul.f32 %v989, -0.5
    %v1086 = vmul.f32 %v990, -0.5
    %v1087 = vmul.f32 %v991, -0.5
    %v1088 = vmul.f32 %v992, -0.5
    %v1089 = vadd.f32 %v1073, 2.5
    %v1090 = vadd.f32 %v1074, 2.5
    %v1091 = vadd.f32 %v1075, 2.5
    %v1092 = vadd.f32 %v1076, 2.5
    %v1093 = vadd.f32 %v1077, 2.5
    %v1094 = vadd.f32 %v1078, 2.5
    %v1095 = vadd.f32 %v1079, 2.5
    %v1096 = vadd.f32 %v1080, 2.5
    %v1097 = vadd.f32 %v1081, 2.5
    %v1098 = vadd.f32 %v1082, 2.5
    %v1099 = vadd.f32 %v1083, 2.5
    %v1100 = vadd.f32 %v1084, 2.5
    %v1101 = vadd.f32 %v1085, 2.5
    %v1102 = vadd.f32 %v1086, 2.5
    %v1103 = vadd.f32 %v1087, 2.5
    %v1104 = vadd.f32 %v1088, 2.5
    %v1105 = vmul.f32 %v1089, %v977
    %v1106 = vmul.f32 %v1090, %v978
    %v1107 = vmul.f32 %v1091, %v979
    %v1108 = vmul.f32 %v1092, %v980
    %v1109 = vmul.f32 %v1093, %v981
    %v1110 = vmul.f32 %v1094, %v982
    %v1111 = vmul.f32 %v1095, %v983
    %v1112 = vmul.f32 %v1096, %v984
    %v1113 = vmul.f32 %v1097, %v985
    %v1114 = vmul.f32 %v1098, %v986
    %v1115 = vmul.f32 %v1099, %v987
    %v1116 = vmul.f32 %v1100, %v988
    %v1117 = vmul.f32 %v1101, %v989
    %v1118 = vmul.f32 %v1102, %v990
    %v1119 = vmul.f32 %v1103, %v991
    %v1120 = vmul.f32 %v1104, %v992
    %v1121 = vsub.f32 %v1105, 4.0
    %v1122 = vsub.f32 %v1106, 4.0
    %v1123 = vsub.f32 %v1107, 4.0
    %v1124 = vsub.f32 %v1108, 4.0
    %v1125 = vsub.f32 %v1109, 4.0
    %v1126 = vsub.f32 %v1110, 4.0
    %v1127 = vsub.f32 %v1111, 4.0
    %v1128 = vsub.f32 %v1112, 4.0
    %v1129 = vsub.f32 %v1113, 4.0
    %v1130 = vsub.f32 %v1114, 4.0
    %v1131 = vsub.f32 %v1115, 4.0
    %v1132 = vsub.f32 %v1116, 4.0
    %v1133 = vsub.f32 %v1117, 4.0
    %v1134 = vsub.f32 %v1118, 4.0
    %v1135 = vsub.f32 %v1119, 4.0
    %v1136 = vsub.f32 %v1120, 4.0
    %v1137 = vmul.f32 %v1121, %v977
    %v1138 = vmul.f32 %v1122, %v978
    %v1139 = vmul.f32 %v1123, %v979
    %v1140 = vmul.f32 %v1124, %v980
    %v1141 = vmul.f32 %v1125, %v981
    %v1142 = vmul.f32 %v1126, %v982
    %v1143 = vmul.f32 %v1127, %v983
    %v1144 = vmul.f32 %v1128, %v984
    %v1145 = vmul.f32 %v1129, %v985
    %v1146 = vmul.f32 %v1130, %v986
    %v1147 = vmul.f32 %v1131, %v987
    %v1148 = vmul.f32 %v1132, %v988
    %v1149 = vmul.f32 %v1133, %v989
    %v1150 = vmul.f32 %v1134, %v990
    %v1151 = vmul.f32 %v1135, %v991
    %v1152 = vmul.f32 %v1136, %v992
    %v1153 = vadd.f32 %v1137, 2.0
    %v1154 = vadd.f32 %v1138, 2.0
    %v1155 = vadd.f32 %v1139, 2.0
    %v1156 = vadd.f32 %v1140, 2.0
    %v1157 = vadd.f32 %v1141, 2.0
    %v1158 = vadd.f32 %v1142, 2.0
    %v1159 = vadd.f32 %v1143, 2.0
    %v1160 = vadd.f32 %v1144, 2.0
    %v1161 = vadd.f32 %v1145, 2.0
    %v1162 = vadd.f32 %v1146, 2.0
    %v1163 = vadd.f32 %v1147, 2.0
    %v1164 = vadd.f32 %v1148, 2.0
    %v1165 = vadd.f32 %v1149, 2.0
    %v1166 = vadd.f32 %v1150, 2.0
    %v1167 = vadd.f32 %v1151, 2.0
    %v1168 = vadd.f32 %v1152, 2.0
    %vm1169 = vcmp.lt.f32.partialorder %v977, 1.0
    %vm1170 = vcmp.lt.f32.partialorder %v978, 1.0
    %vm1171 = vcmp.lt.f32.partialorder %v979, 1.0
    %vm1172 = vcmp.lt.f32.partialorder %v980, 1.0
    %vm1173 = vcmp.lt.f32.partialorder %v981, 1.0
    %vm1174 = vcmp.lt.f32.partialorder %v982, 1.0
    %vm1175 = vcmp.lt.f32.partialorder %v983, 1.0
    %vm1176 = vcmp.lt.f32.partialorder %v984, 1.0
    %vm1177 = vcmp.lt.f32.partialorder %v985, 1.0
    %vm1178 = vcmp.lt.f32.partialorder %v986, 1.0
    %vm1179 = vcmp.lt.f32.partialorder %v987, 1.0
    %vm1180 = vcmp.lt.f32.partialorder %v988, 1.0
    %vm1181 = vcmp.lt.f32.partialorder %v989, 1.0
    %vm1182 = vcmp.lt.f32.partialorder %v990, 1.0
    %vm1183 = vcmp.lt.f32.partialorder %v991, 1.0
    %vm1184 = vcmp.lt.f32.partialorder %v992, 1.0
    %vm1185 = vcmp.lt.f32.partialorder %v977, 2.0
    %vm1186 = vcmp.lt.f32.partialorder %v978, 2.0
    %vm1187 = vcmp.lt.f32.partialorder %v979, 2.0
    %vm1188 = vcmp.lt.f32.partialorder %v980, 2.0
    %vm1189 = vcmp.lt.f32.partialorder %v981, 2.0
    %vm1190 = vcmp.lt.f32.partialorder %v982, 2.0
    %vm1191 = vcmp.lt.f32.partialorder %v983, 2.0
    %vm1192 = vcmp.lt.f32.partialorder %v984, 2.0
    %vm1193 = vcmp.lt.f32.partialorder %v985, 2.0
    %vm1194 = vcmp.lt.f32.partialorder %v986, 2.0
    %vm1195 = vcmp.lt.f32.partialorder %v987, 2.0
    %vm1196 = vcmp.lt.f32.partialorder %v988, 2.0
    %vm1197 = vcmp.lt.f32.partialorder %v989, 2.0
    %vm1198 = vcmp.lt.f32.partialorder %v990, 2.0
    %vm1199 = vcmp.lt.f32.partialorder %v991, 2.0
    %vm1200 = vcmp.lt.f32.partialorder %v992, 2.0
    %v1201 = vsel %vm1185, %v1153, 0.0
    %v1202 = vsel %vm1186, %v1154, 0.0
    %v1203 = vsel %vm1187, %v1155, 0.0
    %v1204 = vsel %vm1188, %v1156, 0.0
    %v1205 = vsel %vm1189, %v1157, 0.0
    %v1206 = vsel %vm1190, %v1158, 0.0
    %v1207 = vsel %vm1191, %v1159, 0.0
    %v1208 = vsel %vm1192, %v1160, 0.0
    %v1209 = vsel %vm1193, %v1161, 0.0
    %v1210 = vsel %vm1194, %v1162, 0.0
    %v1211 = vsel %vm1195, %v1163, 0.0
    %v1212 = vsel %vm1196, %v1164, 0.0
    %v1213 = vsel %vm1197, %v1165, 0.0
    %v1214 = vsel %vm1198, %v1166, 0.0
    %v1215 = vsel %vm1199, %v1167, 0.0
    %v1216 = vsel %vm1200, %v1168, 0.0
    %v1217 = vsel %vm1169, %v1057, %v1201
    %v1218 = vsel %vm1170, %v1058, %v1202
    %v1219 = vsel %vm1171, %v1059, %v1203
    %v1220 = vsel %vm1172, %v1060, %v1204
    %v1221 = vsel %vm1173, %v1061, %v1205
    %v1222 = vsel %vm1174, %v1062, %v1206
    %v1223 = vsel %vm1175, %v1063, %v1207
    %v1224 = vsel %vm1176, %v1064, %v1208
    %v1225 = vsel %vm1177, %v1065, %v1209
    %v1226 = vsel %vm1178, %v1066, %v1210
    %v1227 = vsel %vm1179, %v1067, %v1211
    %v1228 = vsel %vm1180, %v1068, %v1212
    %v1229 = vsel %vm1181, %v1069, %v1213
    %v1230 = vsel %vm1182, %v1070, %v1214
    %v1231 = vsel %vm1183, %v1071, %v1215
    %v1232 = vsel %vm1184, %v1072, %v1216
    %v1233 = vlaneseq
    %v1234 = vshrl.u32 %v1233, 7
    %v1235 = vsub.s32 0, %v1234
    %v1236 = vrot.slane %v860, %v1235
    %1238 = vbcast.lane.b32.xlu0 %v1236, 256
    %v1239 = vpop.permute.xlu0 %1238
    %v1240 = vlaneseq
    %v1241 = vshrl.u32 %v1240, 7
    %v1242 = vsub.s32 1, %v1241
    %v1243 = vrot.slane %v860, %v1242
    %1245 = vbcast.lane.b32.xlu0 %v1243, 256
    %v1246 = vpop.permute.xlu0 %1245
    %v1247 = vlaneseq
    %v1248 = vshrl.u32 %v1247, 7
    %v1249 = vsub.s32 2, %v1248
    %v1250 = vrot.slane %v860, %v1249
    %1252 = vbcast.lane.b32.xlu0 %v1250, 256
    %v1253 = vpop.permute.xlu0 %1252
    %v1254 = vlaneseq
    %v1255 = vshrl.u32 %v1254, 7
    %v1256 = vsub.s32 3, %v1255
    %v1257 = vrot.slane %v860, %v1256
    %1259 = vbcast.lane.b32.xlu0 %v1257, 256
    %v1260 = vpop.permute.xlu0 %1259
    %v1261 = vlaneseq
    %v1262 = vshrl.u32 %v1261, 7
    %v1263 = vsub.s32 4, %v1262
    %v1264 = vrot.slane %v860, %v1263
    %1266 = vbcast.lane.b32.xlu0 %v1264, 256
    %v1267 = vpop.permute.xlu0 %1266
    %v1268 = vlaneseq
    %v1269 = vshrl.u32 %v1268, 7
    %v1270 = vsub.s32 5, %v1269
    %v1271 = vrot.slane %v860, %v1270
    %1273 = vbcast.lane.b32.xlu0 %v1271, 256
    %v1274 = vpop.permute.xlu0 %1273
    %v1275 = vlaneseq
    %v1276 = vshrl.u32 %v1275, 7
    %v1277 = vsub.s32 6, %v1276
    %v1278 = vrot.slane %v860, %v1277
    %1280 = vbcast.lane.b32.xlu0 %v1278, 256
    %v1281 = vpop.permute.xlu0 %1280
    %v1282 = vlaneseq
    %v1283 = vshrl.u32 %v1282, 7
    %v1284 = vsub.s32 7, %v1283
    %v1285 = vrot.slane %v860, %v1284
    %1287 = vbcast.lane.b32.xlu0 %v1285, 256
    %v1288 = vpop.permute.xlu0 %1287
    %v1289 = vlaneseq
    %v1290 = vshrl.u32 %v1289, 7
    %v1291 = vsub.s32 0, %v1290
    %v1292 = vrot.slane %v861, %v1291
    %1294 = vbcast.lane.b32.xlu0 %v1292, 256
    %v1295 = vpop.permute.xlu0 %1294
    %v1296 = vlaneseq
    %v1297 = vshrl.u32 %v1296, 7
    %v1298 = vsub.s32 1, %v1297
    %v1299 = vrot.slane %v861, %v1298
    %1301 = vbcast.lane.b32.xlu0 %v1299, 256
    %v1302 = vpop.permute.xlu0 %1301
    %v1303 = vlaneseq
    %v1304 = vshrl.u32 %v1303, 7
    %v1305 = vsub.s32 2, %v1304
    %v1306 = vrot.slane %v861, %v1305
    %1308 = vbcast.lane.b32.xlu0 %v1306, 256
    %v1309 = vpop.permute.xlu0 %1308
    %v1310 = vlaneseq
    %v1311 = vshrl.u32 %v1310, 7
    %v1312 = vsub.s32 3, %v1311
    %v1313 = vrot.slane %v861, %v1312
    %1315 = vbcast.lane.b32.xlu0 %v1313, 256
    %v1316 = vpop.permute.xlu0 %1315
    %v1317 = vlaneseq
    %v1318 = vshrl.u32 %v1317, 7
    %v1319 = vsub.s32 4, %v1318
    %v1320 = vrot.slane %v861, %v1319
    %1322 = vbcast.lane.b32.xlu0 %v1320, 256
    %v1323 = vpop.permute.xlu0 %1322
    %v1324 = vlaneseq
    %v1325 = vshrl.u32 %v1324, 7
    %v1326 = vsub.s32 5, %v1325
    %v1327 = vrot.slane %v861, %v1326
    %1329 = vbcast.lane.b32.xlu0 %v1327, 256
    %v1330 = vpop.permute.xlu0 %1329
    %v1331 = vlaneseq
    %v1332 = vshrl.u32 %v1331, 7
    %v1333 = vsub.s32 6, %v1332
    %v1334 = vrot.slane %v861, %v1333
    %1336 = vbcast.lane.b32.xlu0 %v1334, 256
    %v1337 = vpop.permute.xlu0 %1336
    %v1338 = vlaneseq
    %v1339 = vshrl.u32 %v1338, 7
    %v1340 = vsub.s32 7, %v1339
    %v1341 = vrot.slane %v861, %v1340
    %1343 = vbcast.lane.b32.xlu0 %v1341, 256
    %v1344 = vpop.permute.xlu0 %1343
    %v1345 = vlaneseq
    %v1346 = vshrl.u32 %v1345, 7
    %v1347 = vsub.s32 0, %v1346
    %v1348 = vrot.slane %v862, %v1347
    %1350 = vbcast.lane.b32.xlu0 %v1348, 256
    %v1351 = vpop.permute.xlu0 %1350
    %v1352 = vlaneseq
    %v1353 = vshrl.u32 %v1352, 7
    %v1354 = vsub.s32 1, %v1353
    %v1355 = vrot.slane %v862, %v1354
    %1357 = vbcast.lane.b32.xlu0 %v1355, 256
    %v1358 = vpop.permute.xlu0 %1357
    %v1359 = vlaneseq
    %v1360 = vshrl.u32 %v1359, 7
    %v1361 = vsub.s32 2, %v1360
    %v1362 = vrot.slane %v862, %v1361
    %1364 = vbcast.lane.b32.xlu0 %v1362, 256
    %v1365 = vpop.permute.xlu0 %1364
    %v1366 = vlaneseq
    %v1367 = vshrl.u32 %v1366, 7
    %v1368 = vsub.s32 3, %v1367
    %v1369 = vrot.slane %v862, %v1368
    %1371 = vbcast.lane.b32.xlu0 %v1369, 256
    %v1372 = vpop.permute.xlu0 %1371
    %v1373 = vlaneseq
    %v1374 = vshrl.u32 %v1373, 7
    %v1375 = vsub.s32 4, %v1374
    %v1376 = vrot.slane %v862, %v1375
    %1378 = vbcast.lane.b32.xlu0 %v1376, 256
    %v1379 = vpop.permute.xlu0 %1378
    %v1380 = vlaneseq
    %v1381 = vshrl.u32 %v1380, 7
    %v1382 = vsub.s32 5, %v1381
    %v1383 = vrot.slane %v862, %v1382
    %1385 = vbcast.lane.b32.xlu0 %v1383, 256
    %v1386 = vpop.permute.xlu0 %1385
    %v1387 = vlaneseq
    %v1388 = vshrl.u32 %v1387, 7
    %v1389 = vsub.s32 6, %v1388
    %v1390 = vrot.slane %v862, %v1389
    %1392 = vbcast.lane.b32.xlu0 %v1390, 256
    %v1393 = vpop.permute.xlu0 %1392
    %v1394 = vlaneseq
    %v1395 = vshrl.u32 %v1394, 7
    %v1396 = vsub.s32 7, %v1395
    %v1397 = vrot.slane %v862, %v1396
    %1399 = vbcast.lane.b32.xlu0 %v1397, 256
    %v1400 = vpop.permute.xlu0 %1399
    %v1401 = vlaneseq
    %v1402 = vshrl.u32 %v1401, 7
    %v1403 = vsub.s32 0, %v1402
    %v1404 = vrot.slane %v863, %v1403
    %1406 = vbcast.lane.b32.xlu0 %v1404, 256
    %v1407 = vpop.permute.xlu0 %1406
    %v1408 = vlaneseq
    %v1409 = vshrl.u32 %v1408, 7
    %v1410 = vsub.s32 1, %v1409
    %v1411 = vrot.slane %v863, %v1410
    %1413 = vbcast.lane.b32.xlu0 %v1411, 256
    %v1414 = vpop.permute.xlu0 %1413
    %v1415 = vlaneseq
    %v1416 = vshrl.u32 %v1415, 7
    %v1417 = vsub.s32 2, %v1416
    %v1418 = vrot.slane %v863, %v1417
    %1420 = vbcast.lane.b32.xlu0 %v1418, 256
    %v1421 = vpop.permute.xlu0 %1420
    %v1422 = vlaneseq
    %v1423 = vshrl.u32 %v1422, 7
    %v1424 = vsub.s32 3, %v1423
    %v1425 = vrot.slane %v863, %v1424
    %1427 = vbcast.lane.b32.xlu0 %v1425, 256
    %v1428 = vpop.permute.xlu0 %1427
    %v1429 = vlaneseq
    %v1430 = vshrl.u32 %v1429, 7
    %v1431 = vsub.s32 4, %v1430
    %v1432 = vrot.slane %v863, %v1431
    %1434 = vbcast.lane.b32.xlu0 %v1432, 256
    %v1435 = vpop.permute.xlu0 %1434
    %v1436 = vlaneseq
    %v1437 = vshrl.u32 %v1436, 7
    %v1438 = vsub.s32 5, %v1437
    %v1439 = vrot.slane %v863, %v1438
    %1441 = vbcast.lane.b32.xlu0 %v1439, 256
    %v1442 = vpop.permute.xlu0 %1441
    %v1443 = vlaneseq
    %v1444 = vshrl.u32 %v1443, 7
    %v1445 = vsub.s32 6, %v1444
    %v1446 = vrot.slane %v863, %v1445
    %1448 = vbcast.lane.b32.xlu0 %v1446, 256
    %v1449 = vpop.permute.xlu0 %1448
    %v1450 = vlaneseq
    %v1451 = vshrl.u32 %v1450, 7
    %v1452 = vsub.s32 7, %v1451
    %v1453 = vrot.slane %v863, %v1452
    %1455 = vbcast.lane.b32.xlu0 %v1453, 256
    %v1456 = vpop.permute.xlu0 %1455
    %v1457 = vlaneseq
    %v1458 = vshrl.u32 %v1457, 7
    %v1459 = vsub.s32 0, %v1458
    %v1460 = vrot.slane %v864, %v1459
    %1462 = vbcast.lane.b32.xlu0 %v1460, 256
    %v1463 = vpop.permute.xlu0 %1462
    %v1464 = vlaneseq
    %v1465 = vshrl.u32 %v1464, 7
    %v1466 = vsub.s32 1, %v1465
    %v1467 = vrot.slane %v864, %v1466
    %1469 = vbcast.lane.b32.xlu0 %v1467, 256
    %v1470 = vpop.permute.xlu0 %1469
    %v1471 = vlaneseq
    %v1472 = vshrl.u32 %v1471, 7
    %v1473 = vsub.s32 2, %v1472
    %v1474 = vrot.slane %v864, %v1473
    %1476 = vbcast.lane.b32.xlu0 %v1474, 256
    %v1477 = vpop.permute.xlu0 %1476
    %v1478 = vlaneseq
    %v1479 = vshrl.u32 %v1478, 7
    %v1480 = vsub.s32 3, %v1479
    %v1481 = vrot.slane %v864, %v1480
    %1483 = vbcast.lane.b32.xlu0 %v1481, 256
    %v1484 = vpop.permute.xlu0 %1483
    %v1485 = vlaneseq
    %v1486 = vshrl.u32 %v1485, 7
    %v1487 = vsub.s32 4, %v1486
    %v1488 = vrot.slane %v864, %v1487
    %1490 = vbcast.lane.b32.xlu0 %v1488, 256
    %v1491 = vpop.permute.xlu0 %1490
    %v1492 = vlaneseq
    %v1493 = vshrl.u32 %v1492, 7
    %v1494 = vsub.s32 5, %v1493
    %v1495 = vrot.slane %v864, %v1494
    %1497 = vbcast.lane.b32.xlu0 %v1495, 256
    %v1498 = vpop.permute.xlu0 %1497
    %v1499 = vlaneseq
    %v1500 = vshrl.u32 %v1499, 7
    %v1501 = vsub.s32 6, %v1500
    %v1502 = vrot.slane %v864, %v1501
    %1504 = vbcast.lane.b32.xlu0 %v1502, 256
    %v1505 = vpop.permute.xlu0 %1504
    %v1506 = vlaneseq
    %v1507 = vshrl.u32 %v1506, 7
    %v1508 = vsub.s32 7, %v1507
    %v1509 = vrot.slane %v864, %v1508
    %1511 = vbcast.lane.b32.xlu0 %v1509, 256
    %v1512 = vpop.permute.xlu0 %1511
    %v1513 = vlaneseq
    %v1514 = vshrl.u32 %v1513, 7
    %v1515 = vsub.s32 0, %v1514
    %v1516 = vrot.slane %v865, %v1515
    %1518 = vbcast.lane.b32.xlu0 %v1516, 256
    %v1519 = vpop.permute.xlu0 %1518
    %v1520 = vlaneseq
    %v1521 = vshrl.u32 %v1520, 7
    %v1522 = vsub.s32 1, %v1521
    %v1523 = vrot.slane %v865, %v1522
    %1525 = vbcast.lane.b32.xlu0 %v1523, 256
    %v1526 = vpop.permute.xlu0 %1525
    %v1527 = vlaneseq
    %v1528 = vshrl.u32 %v1527, 7
    %v1529 = vsub.s32 2, %v1528
    %v1530 = vrot.slane %v865, %v1529
    %1532 = vbcast.lane.b32.xlu0 %v1530, 256
    %v1533 = vpop.permute.xlu0 %1532
    %v1534 = vlaneseq
    %v1535 = vshrl.u32 %v1534, 7
    %v1536 = vsub.s32 3, %v1535
    %v1537 = vrot.slane %v865, %v1536
    %1539 = vbcast.lane.b32.xlu0 %v1537, 256
    %v1540 = vpop.permute.xlu0 %1539
    %v1541 = vlaneseq
    %v1542 = vshrl.u32 %v1541, 7
    %v1543 = vsub.s32 4, %v1542
    %v1544 = vrot.slane %v865, %v1543
    %1546 = vbcast.lane.b32.xlu0 %v1544, 256
    %v1547 = vpop.permute.xlu0 %1546
    %v1548 = vlaneseq
    %v1549 = vshrl.u32 %v1548, 7
    %v1550 = vsub.s32 5, %v1549
    %v1551 = vrot.slane %v865, %v1550
    %1553 = vbcast.lane.b32.xlu0 %v1551, 256
    %v1554 = vpop.permute.xlu0 %1553
    %v1555 = vlaneseq
    %v1556 = vshrl.u32 %v1555, 7
    %v1557 = vsub.s32 6, %v1556
    %v1558 = vrot.slane %v865, %v1557
    %1560 = vbcast.lane.b32.xlu0 %v1558, 256
    %v1561 = vpop.permute.xlu0 %1560
    %v1562 = vlaneseq
    %v1563 = vshrl.u32 %v1562, 7
    %v1564 = vsub.s32 7, %v1563
    %v1565 = vrot.slane %v865, %v1564
    %1567 = vbcast.lane.b32.xlu0 %v1565, 256
    %v1568 = vpop.permute.xlu0 %1567
    %v1569 = vlaneseq
    %v1570 = vshrl.u32 %v1569, 7
    %v1571 = vsub.s32 0, %v1570
    %v1572 = vrot.slane %v866, %v1571
    %1574 = vbcast.lane.b32.xlu0 %v1572, 256
    %v1575 = vpop.permute.xlu0 %1574
    %v1576 = vlaneseq
    %v1577 = vshrl.u32 %v1576, 7
    %v1578 = vsub.s32 1, %v1577
    %v1579 = vrot.slane %v866, %v1578
    %1581 = vbcast.lane.b32.xlu0 %v1579, 256
    %v1582 = vpop.permute.xlu0 %1581
    %v1583 = vlaneseq
    %v1584 = vshrl.u32 %v1583, 7
    %v1585 = vsub.s32 2, %v1584
    %v1586 = vrot.slane %v866, %v1585
    %1588 = vbcast.lane.b32.xlu0 %v1586, 256
    %v1589 = vpop.permute.xlu0 %1588
    %v1590 = vlaneseq
    %v1591 = vshrl.u32 %v1590, 7
    %v1592 = vsub.s32 3, %v1591
    %v1593 = vrot.slane %v866, %v1592
    %1595 = vbcast.lane.b32.xlu0 %v1593, 256
    %v1596 = vpop.permute.xlu0 %1595
    %v1597 = vlaneseq
    %v1598 = vshrl.u32 %v1597, 7
    %v1599 = vsub.s32 4, %v1598
    %v1600 = vrot.slane %v866, %v1599
    %1602 = vbcast.lane.b32.xlu0 %v1600, 256
    %v1603 = vpop.permute.xlu0 %1602
    %v1604 = vlaneseq
    %v1605 = vshrl.u32 %v1604, 7
    %v1606 = vsub.s32 5, %v1605
    %v1607 = vrot.slane %v866, %v1606
    %1609 = vbcast.lane.b32.xlu0 %v1607, 256
    %v1610 = vpop.permute.xlu0 %1609
    %v1611 = vlaneseq
    %v1612 = vshrl.u32 %v1611, 7
    %v1613 = vsub.s32 6, %v1612
    %v1614 = vrot.slane %v866, %v1613
    %1616 = vbcast.lane.b32.xlu0 %v1614, 256
    %v1617 = vpop.permute.xlu0 %1616
    %v1618 = vlaneseq
    %v1619 = vshrl.u32 %v1618, 7
    %v1620 = vsub.s32 7, %v1619
    %v1621 = vrot.slane %v866, %v1620
    %1623 = vbcast.lane.b32.xlu0 %v1621, 256
    %v1624 = vpop.permute.xlu0 %1623
    %v1625 = vlaneseq
    %v1626 = vshrl.u32 %v1625, 7
    %v1627 = vsub.s32 0, %v1626
    %v1628 = vrot.slane %v867, %v1627
    %1630 = vbcast.lane.b32.xlu0 %v1628, 256
    %v1631 = vpop.permute.xlu0 %1630
    %v1632 = vlaneseq
    %v1633 = vshrl.u32 %v1632, 7
    %v1634 = vsub.s32 1, %v1633
    %v1635 = vrot.slane %v867, %v1634
    %1637 = vbcast.lane.b32.xlu0 %v1635, 256
    %v1638 = vpop.permute.xlu0 %1637
    %v1639 = vlaneseq
    %v1640 = vshrl.u32 %v1639, 7
    %v1641 = vsub.s32 2, %v1640
    %v1642 = vrot.slane %v867, %v1641
    %1644 = vbcast.lane.b32.xlu0 %v1642, 256
    %v1645 = vpop.permute.xlu0 %1644
    %v1646 = vlaneseq
    %v1647 = vshrl.u32 %v1646, 7
    %v1648 = vsub.s32 3, %v1647
    %v1649 = vrot.slane %v867, %v1648
    %1651 = vbcast.lane.b32.xlu0 %v1649, 256
    %v1652 = vpop.permute.xlu0 %1651
    %v1653 = vlaneseq
    %v1654 = vshrl.u32 %v1653, 7
    %v1655 = vsub.s32 4, %v1654
    %v1656 = vrot.slane %v867, %v1655
    %1658 = vbcast.lane.b32.xlu0 %v1656, 256
    %v1659 = vpop.permute.xlu0 %1658
    %v1660 = vlaneseq
    %v1661 = vshrl.u32 %v1660, 7
    %v1662 = vsub.s32 5, %v1661
    %v1663 = vrot.slane %v867, %v1662
    %1665 = vbcast.lane.b32.xlu0 %v1663, 256
    %v1666 = vpop.permute.xlu0 %1665
    %v1667 = vlaneseq
    %v1668 = vshrl.u32 %v1667, 7
    %v1669 = vsub.s32 6, %v1668
    %v1670 = vrot.slane %v867, %v1669
    %1672 = vbcast.lane.b32.xlu0 %v1670, 256
    %v1673 = vpop.permute.xlu0 %1672
    %v1674 = vlaneseq
    %v1675 = vshrl.u32 %v1674, 7
    %v1676 = vsub.s32 7, %v1675
    %v1677 = vrot.slane %v867, %v1676
    %1679 = vbcast.lane.b32.xlu0 %v1677, 256
    %v1680 = vpop.permute.xlu0 %1679
    %v1681 = vlaneseq
    %v1682 = vshrl.u32 %v1681, 7
    %v1683 = vsub.s32 0, %v1682
    %v1684 = vrot.slane %v868, %v1683
    %1686 = vbcast.lane.b32.xlu0 %v1684, 256
    %v1687 = vpop.permute.xlu0 %1686
    %v1688 = vlaneseq
    %v1689 = vshrl.u32 %v1688, 7
    %v1690 = vsub.s32 1, %v1689
    %v1691 = vrot.slane %v868, %v1690
    %1693 = vbcast.lane.b32.xlu0 %v1691, 256
    %v1694 = vpop.permute.xlu0 %1693
    %v1695 = vlaneseq
    %v1696 = vshrl.u32 %v1695, 7
    %v1697 = vsub.s32 2, %v1696
    %v1698 = vrot.slane %v868, %v1697
    %1700 = vbcast.lane.b32.xlu0 %v1698, 256
    %v1701 = vpop.permute.xlu0 %1700
    %v1702 = vlaneseq
    %v1703 = vshrl.u32 %v1702, 7
    %v1704 = vsub.s32 3, %v1703
    %v1705 = vrot.slane %v868, %v1704
    %1707 = vbcast.lane.b32.xlu0 %v1705, 256
    %v1708 = vpop.permute.xlu0 %1707
    %v1709 = vlaneseq
    %v1710 = vshrl.u32 %v1709, 7
    %v1711 = vsub.s32 4, %v1710
    %v1712 = vrot.slane %v868, %v1711
    %1714 = vbcast.lane.b32.xlu0 %v1712, 256
    %v1715 = vpop.permute.xlu0 %1714
    %v1716 = vlaneseq
    %v1717 = vshrl.u32 %v1716, 7
    %v1718 = vsub.s32 5, %v1717
    %v1719 = vrot.slane %v868, %v1718
    %1721 = vbcast.lane.b32.xlu0 %v1719, 256
    %v1722 = vpop.permute.xlu0 %1721
    %v1723 = vlaneseq
    %v1724 = vshrl.u32 %v1723, 7
    %v1725 = vsub.s32 6, %v1724
    %v1726 = vrot.slane %v868, %v1725
    %1728 = vbcast.lane.b32.xlu0 %v1726, 256
    %v1729 = vpop.permute.xlu0 %1728
    %v1730 = vlaneseq
    %v1731 = vshrl.u32 %v1730, 7
    %v1732 = vsub.s32 7, %v1731
    %v1733 = vrot.slane %v868, %v1732
    %1735 = vbcast.lane.b32.xlu0 %v1733, 256
    %v1736 = vpop.permute.xlu0 %1735
    %v1737 = vlaneseq
    %v1738 = vshrl.u32 %v1737, 7
    %v1739 = vsub.s32 0, %v1738
    %v1740 = vrot.slane %v869, %v1739
    %1742 = vbcast.lane.b32.xlu0 %v1740, 256
    %v1743 = vpop.permute.xlu0 %1742
    %v1744 = vlaneseq
    %v1745 = vshrl.u32 %v1744, 7
    %v1746 = vsub.s32 1, %v1745
    %v1747 = vrot.slane %v869, %v1746
    %1749 = vbcast.lane.b32.xlu0 %v1747, 256
    %v1750 = vpop.permute.xlu0 %1749
    %v1751 = vlaneseq
    %v1752 = vshrl.u32 %v1751, 7
    %v1753 = vsub.s32 2, %v1752
    %v1754 = vrot.slane %v869, %v1753
    %1756 = vbcast.lane.b32.xlu0 %v1754, 256
    %v1757 = vpop.permute.xlu0 %1756
    %v1758 = vlaneseq
    %v1759 = vshrl.u32 %v1758, 7
    %v1760 = vsub.s32 3, %v1759
    %v1761 = vrot.slane %v869, %v1760
    %1763 = vbcast.lane.b32.xlu0 %v1761, 256
    %v1764 = vpop.permute.xlu0 %1763
    %v1765 = vlaneseq
    %v1766 = vshrl.u32 %v1765, 7
    %v1767 = vsub.s32 4, %v1766
    %v1768 = vrot.slane %v869, %v1767
    %1770 = vbcast.lane.b32.xlu0 %v1768, 256
    %v1771 = vpop.permute.xlu0 %1770
    %v1772 = vlaneseq
    %v1773 = vshrl.u32 %v1772, 7
    %v1774 = vsub.s32 5, %v1773
    %v1775 = vrot.slane %v869, %v1774
    %1777 = vbcast.lane.b32.xlu0 %v1775, 256
    %v1778 = vpop.permute.xlu0 %1777
    %v1779 = vlaneseq
    %v1780 = vshrl.u32 %v1779, 7
    %v1781 = vsub.s32 6, %v1780
    %v1782 = vrot.slane %v869, %v1781
    %1784 = vbcast.lane.b32.xlu0 %v1782, 256
    %v1785 = vpop.permute.xlu0 %1784
    %v1786 = vlaneseq
    %v1787 = vshrl.u32 %v1786, 7
    %v1788 = vsub.s32 7, %v1787
    %v1789 = vrot.slane %v869, %v1788
    %1791 = vbcast.lane.b32.xlu0 %v1789, 256
    %v1792 = vpop.permute.xlu0 %1791
    %v1793 = vlaneseq
    %v1794 = vshrl.u32 %v1793, 7
    %v1795 = vsub.s32 0, %v1794
    %v1796 = vrot.slane %v870, %v1795
    %1798 = vbcast.lane.b32.xlu0 %v1796, 256
    %v1799 = vpop.permute.xlu0 %1798
    %v1800 = vlaneseq
    %v1801 = vshrl.u32 %v1800, 7
    %v1802 = vsub.s32 1, %v1801
    %v1803 = vrot.slane %v870, %v1802
    %1805 = vbcast.lane.b32.xlu0 %v1803, 256
    %v1806 = vpop.permute.xlu0 %1805
    %v1807 = vlaneseq
    %v1808 = vshrl.u32 %v1807, 7
    %v1809 = vsub.s32 2, %v1808
    %v1810 = vrot.slane %v870, %v1809
    %1812 = vbcast.lane.b32.xlu0 %v1810, 256
    %v1813 = vpop.permute.xlu0 %1812
    %v1814 = vlaneseq
    %v1815 = vshrl.u32 %v1814, 7
    %v1816 = vsub.s32 3, %v1815
    %v1817 = vrot.slane %v870, %v1816
    %1819 = vbcast.lane.b32.xlu0 %v1817, 256
    %v1820 = vpop.permute.xlu0 %1819
    %v1821 = vlaneseq
    %v1822 = vshrl.u32 %v1821, 7
    %v1823 = vsub.s32 4, %v1822
    %v1824 = vrot.slane %v870, %v1823
    %1826 = vbcast.lane.b32.xlu0 %v1824, 256
    %v1827 = vpop.permute.xlu0 %1826
    %v1828 = vlaneseq
    %v1829 = vshrl.u32 %v1828, 7
    %v1830 = vsub.s32 5, %v1829
    %v1831 = vrot.slane %v870, %v1830
    %1833 = vbcast.lane.b32.xlu0 %v1831, 256
    %v1834 = vpop.permute.xlu0 %1833
    %v1835 = vlaneseq
    %v1836 = vshrl.u32 %v1835, 7
    %v1837 = vsub.s32 6, %v1836
    %v1838 = vrot.slane %v870, %v1837
    %1840 = vbcast.lane.b32.xlu0 %v1838, 256
    %v1841 = vpop.permute.xlu0 %1840
    %v1842 = vlaneseq
    %v1843 = vshrl.u32 %v1842, 7
    %v1844 = vsub.s32 7, %v1843
    %v1845 = vrot.slane %v870, %v1844
    %1847 = vbcast.lane.b32.xlu0 %v1845, 256
    %v1848 = vpop.permute.xlu0 %1847
    %v1849 = vlaneseq
    %v1850 = vshrl.u32 %v1849, 7
    %v1851 = vsub.s32 0, %v1850
    %v1852 = vrot.slane %v871, %v1851
    %1854 = vbcast.lane.b32.xlu0 %v1852, 256
    %v1855 = vpop.permute.xlu0 %1854
    %v1856 = vlaneseq
    %v1857 = vshrl.u32 %v1856, 7
    %v1858 = vsub.s32 1, %v1857
    %v1859 = vrot.slane %v871, %v1858
    %1861 = vbcast.lane.b32.xlu0 %v1859, 256
    %v1862 = vpop.permute.xlu0 %1861
    %v1863 = vlaneseq
    %v1864 = vshrl.u32 %v1863, 7
    %v1865 = vsub.s32 2, %v1864
    %v1866 = vrot.slane %v871, %v1865
    %1868 = vbcast.lane.b32.xlu0 %v1866, 256
    %v1869 = vpop.permute.xlu0 %1868
    %v1870 = vlaneseq
    %v1871 = vshrl.u32 %v1870, 7
    %v1872 = vsub.s32 3, %v1871
    %v1873 = vrot.slane %v871, %v1872
    %1875 = vbcast.lane.b32.xlu0 %v1873, 256
    %v1876 = vpop.permute.xlu0 %1875
    %v1877 = vlaneseq
    %v1878 = vshrl.u32 %v1877, 7
    %v1879 = vsub.s32 4, %v1878
    %v1880 = vrot.slane %v871, %v1879
    %1882 = vbcast.lane.b32.xlu0 %v1880, 256
    %v1883 = vpop.permute.xlu0 %1882
    %v1884 = vlaneseq
    %v1885 = vshrl.u32 %v1884, 7
    %v1886 = vsub.s32 5, %v1885
    %v1887 = vrot.slane %v871, %v1886
    %1889 = vbcast.lane.b32.xlu0 %v1887, 256
    %v1890 = vpop.permute.xlu0 %1889
    %v1891 = vlaneseq
    %v1892 = vshrl.u32 %v1891, 7
    %v1893 = vsub.s32 6, %v1892
    %v1894 = vrot.slane %v871, %v1893
    %1896 = vbcast.lane.b32.xlu0 %v1894, 256
    %v1897 = vpop.permute.xlu0 %1896
    %v1898 = vlaneseq
    %v1899 = vshrl.u32 %v1898, 7
    %v1900 = vsub.s32 7, %v1899
    %v1901 = vrot.slane %v871, %v1900
    %1903 = vbcast.lane.b32.xlu0 %v1901, 256
    %v1904 = vpop.permute.xlu0 %1903
    %v1905 = vlaneseq
    %v1906 = vshrl.u32 %v1905, 7
    %v1907 = vsub.s32 0, %v1906
    %v1908 = vrot.slane %v872, %v1907
    %1910 = vbcast.lane.b32.xlu0 %v1908, 256
    %v1911 = vpop.permute.xlu0 %1910
    %v1912 = vlaneseq
    %v1913 = vshrl.u32 %v1912, 7
    %v1914 = vsub.s32 1, %v1913
    %v1915 = vrot.slane %v872, %v1914
    %1917 = vbcast.lane.b32.xlu0 %v1915, 256
    %v1918 = vpop.permute.xlu0 %1917
    %v1919 = vlaneseq
    %v1920 = vshrl.u32 %v1919, 7
    %v1921 = vsub.s32 2, %v1920
    %v1922 = vrot.slane %v872, %v1921
    %1924 = vbcast.lane.b32.xlu0 %v1922, 256
    %v1925 = vpop.permute.xlu0 %1924
    %v1926 = vlaneseq
    %v1927 = vshrl.u32 %v1926, 7
    %v1928 = vsub.s32 3, %v1927
    %v1929 = vrot.slane %v872, %v1928
    %1931 = vbcast.lane.b32.xlu0 %v1929, 256
    %v1932 = vpop.permute.xlu0 %1931
    %v1933 = vlaneseq
    %v1934 = vshrl.u32 %v1933, 7
    %v1935 = vsub.s32 4, %v1934
    %v1936 = vrot.slane %v872, %v1935
    %1938 = vbcast.lane.b32.xlu0 %v1936, 256
    %v1939 = vpop.permute.xlu0 %1938
    %v1940 = vlaneseq
    %v1941 = vshrl.u32 %v1940, 7
    %v1942 = vsub.s32 5, %v1941
    %v1943 = vrot.slane %v872, %v1942
    %1945 = vbcast.lane.b32.xlu0 %v1943, 256
    %v1946 = vpop.permute.xlu0 %1945
    %v1947 = vlaneseq
    %v1948 = vshrl.u32 %v1947, 7
    %v1949 = vsub.s32 6, %v1948
    %v1950 = vrot.slane %v872, %v1949
    %1952 = vbcast.lane.b32.xlu0 %v1950, 256
    %v1953 = vpop.permute.xlu0 %1952
    %v1954 = vlaneseq
    %v1955 = vshrl.u32 %v1954, 7
    %v1956 = vsub.s32 7, %v1955
    %v1957 = vrot.slane %v872, %v1956
    %1959 = vbcast.lane.b32.xlu0 %v1957, 256
    %v1960 = vpop.permute.xlu0 %1959
    %v1961 = vlaneseq
    %v1962 = vshrl.u32 %v1961, 7
    %v1963 = vsub.s32 0, %v1962
    %v1964 = vrot.slane %v873, %v1963
    %1966 = vbcast.lane.b32.xlu0 %v1964, 256
    %v1967 = vpop.permute.xlu0 %1966
    %v1968 = vlaneseq
    %v1969 = vshrl.u32 %v1968, 7
    %v1970 = vsub.s32 1, %v1969
    %v1971 = vrot.slane %v873, %v1970
    %1973 = vbcast.lane.b32.xlu0 %v1971, 256
    %v1974 = vpop.permute.xlu0 %1973
    %v1975 = vlaneseq
    %v1976 = vshrl.u32 %v1975, 7
    %v1977 = vsub.s32 2, %v1976
    %v1978 = vrot.slane %v873, %v1977
    %1980 = vbcast.lane.b32.xlu0 %v1978, 256
    %v1981 = vpop.permute.xlu0 %1980
    %v1982 = vlaneseq
    %v1983 = vshrl.u32 %v1982, 7
    %v1984 = vsub.s32 3, %v1983
    %v1985 = vrot.slane %v873, %v1984
    %1987 = vbcast.lane.b32.xlu0 %v1985, 256
    %v1988 = vpop.permute.xlu0 %1987
    %v1989 = vlaneseq
    %v1990 = vshrl.u32 %v1989, 7
    %v1991 = vsub.s32 4, %v1990
    %v1992 = vrot.slane %v873, %v1991
    %1994 = vbcast.lane.b32.xlu0 %v1992, 256
    %v1995 = vpop.permute.xlu0 %1994
    %v1996 = vlaneseq
    %v1997 = vshrl.u32 %v1996, 7
    %v1998 = vsub.s32 5, %v1997
    %v1999 = vrot.slane %v873, %v1998
    %2001 = vbcast.lane.b32.xlu0 %v1999, 256
    %v2002 = vpop.permute.xlu0 %2001
    %v2003 = vlaneseq
    %v2004 = vshrl.u32 %v2003, 7
    %v2005 = vsub.s32 6, %v2004
    %v2006 = vrot.slane %v873, %v2005
    %2008 = vbcast.lane.b32.xlu0 %v2006, 256
    %v2009 = vpop.permute.xlu0 %2008
    %v2010 = vlaneseq
    %v2011 = vshrl.u32 %v2010, 7
    %v2012 = vsub.s32 7, %v2011
    %v2013 = vrot.slane %v873, %v2012
    %2015 = vbcast.lane.b32.xlu0 %v2013, 256
    %v2016 = vpop.permute.xlu0 %2015
    %v2017 = vlaneseq
    %v2018 = vshrl.u32 %v2017, 7
    %v2019 = vsub.s32 0, %v2018
    %v2020 = vrot.slane %v874, %v2019
    %2022 = vbcast.lane.b32.xlu0 %v2020, 256
    %v2023 = vpop.permute.xlu0 %2022
    %v2024 = vlaneseq
    %v2025 = vshrl.u32 %v2024, 7
    %v2026 = vsub.s32 1, %v2025
    %v2027 = vrot.slane %v874, %v2026
    %2029 = vbcast.lane.b32.xlu0 %v2027, 256
    %v2030 = vpop.permute.xlu0 %2029
    %v2031 = vlaneseq
    %v2032 = vshrl.u32 %v2031, 7
    %v2033 = vsub.s32 2, %v2032
    %v2034 = vrot.slane %v874, %v2033
    %2036 = vbcast.lane.b32.xlu0 %v2034, 256
    %v2037 = vpop.permute.xlu0 %2036
    %v2038 = vlaneseq
    %v2039 = vshrl.u32 %v2038, 7
    %v2040 = vsub.s32 3, %v2039
    %v2041 = vrot.slane %v874, %v2040
    %2043 = vbcast.lane.b32.xlu0 %v2041, 256
    %v2044 = vpop.permute.xlu0 %2043
    %v2045 = vlaneseq
    %v2046 = vshrl.u32 %v2045, 7
    %v2047 = vsub.s32 4, %v2046
    %v2048 = vrot.slane %v874, %v2047
    %2050 = vbcast.lane.b32.xlu0 %v2048, 256
    %v2051 = vpop.permute.xlu0 %2050
    %v2052 = vlaneseq
    %v2053 = vshrl.u32 %v2052, 7
    %v2054 = vsub.s32 5, %v2053
    %v2055 = vrot.slane %v874, %v2054
    %2057 = vbcast.lane.b32.xlu0 %v2055, 256
    %v2058 = vpop.permute.xlu0 %2057
    %v2059 = vlaneseq
    %v2060 = vshrl.u32 %v2059, 7
    %v2061 = vsub.s32 6, %v2060
    %v2062 = vrot.slane %v874, %v2061
    %2064 = vbcast.lane.b32.xlu0 %v2062, 256
    %v2065 = vpop.permute.xlu0 %2064
    %v2066 = vlaneseq
    %v2067 = vshrl.u32 %v2066, 7
    %v2068 = vsub.s32 7, %v2067
    %v2069 = vrot.slane %v874, %v2068
    %2071 = vbcast.lane.b32.xlu0 %v2069, 256
    %v2072 = vpop.permute.xlu0 %2071
    %v2073 = vlaneseq
    %v2074 = vshrl.u32 %v2073, 7
    %v2075 = vsub.s32 0, %v2074
    %v2076 = vrot.slane %v875, %v2075
    %2078 = vbcast.lane.b32.xlu0 %v2076, 256
    %v2079 = vpop.permute.xlu0 %2078
    %v2080 = vlaneseq
    %v2081 = vshrl.u32 %v2080, 7
    %v2082 = vsub.s32 1, %v2081
    %v2083 = vrot.slane %v875, %v2082
    %2085 = vbcast.lane.b32.xlu0 %v2083, 256
    %v2086 = vpop.permute.xlu0 %2085
    %v2087 = vlaneseq
    %v2088 = vshrl.u32 %v2087, 7
    %v2089 = vsub.s32 2, %v2088
    %v2090 = vrot.slane %v875, %v2089
    %2092 = vbcast.lane.b32.xlu0 %v2090, 256
    %v2093 = vpop.permute.xlu0 %2092
    %v2094 = vlaneseq
    %v2095 = vshrl.u32 %v2094, 7
    %v2096 = vsub.s32 3, %v2095
    %v2097 = vrot.slane %v875, %v2096
    %2099 = vbcast.lane.b32.xlu0 %v2097, 256
    %v2100 = vpop.permute.xlu0 %2099
    %v2101 = vlaneseq
    %v2102 = vshrl.u32 %v2101, 7
    %v2103 = vsub.s32 4, %v2102
    %v2104 = vrot.slane %v875, %v2103
    %2106 = vbcast.lane.b32.xlu0 %v2104, 256
    %v2107 = vpop.permute.xlu0 %2106
    %v2108 = vlaneseq
    %v2109 = vshrl.u32 %v2108, 7
    %v2110 = vsub.s32 5, %v2109
    %v2111 = vrot.slane %v875, %v2110
    %2113 = vbcast.lane.b32.xlu0 %v2111, 256
    %v2114 = vpop.permute.xlu0 %2113
    %v2115 = vlaneseq
    %v2116 = vshrl.u32 %v2115, 7
    %v2117 = vsub.s32 6, %v2116
    %v2118 = vrot.slane %v875, %v2117
    %2120 = vbcast.lane.b32.xlu0 %v2118, 256
    %v2121 = vpop.permute.xlu0 %2120
    %v2122 = vlaneseq
    %v2123 = vshrl.u32 %v2122, 7
    %v2124 = vsub.s32 7, %v2123
    %v2125 = vrot.slane %v875, %v2124
    %2127 = vbcast.lane.b32.xlu0 %v2125, 256
    %v2128 = vpop.permute.xlu0 %2127
    %v2129 = vcombine.low %v1239, %v1253
    %v2130 = vcombine.high %v1239, %v1253
    %v2132 = vunpack.c.l.s4 1983009808
    %v2133 = vunpack.c.0.s8 %v2132
    %v2134 = vlaneseq
    %v2135 = vshrl.u32 %v2134, 7
    %v2136 = vsub.s32 %v2133, %v2135
    %v2137 = vrot.slane %v2129, %v2136
    %v2139 = vunpack.c.l.s4 1983009808
    %v2140 = vunpack.c.0.s8 %v2139
    %v2141 = vlaneseq
    %v2142 = vshrl.u32 %v2141, 7
    %v2143 = vsub.s32 %v2140, %v2142
    %v2144 = vrot.slane %v2130, %v2143
    %v2145 = vcombine.low %v1246, %v1260
    %v2146 = vcombine.high %v1246, %v1260
    %v2148 = vunpack.c.l.s4 1983009808
    %v2149 = vunpack.c.0.s8 %v2148
    %v2150 = vlaneseq
    %v2151 = vshrl.u32 %v2150, 7
    %v2152 = vsub.s32 %v2149, %v2151
    %v2153 = vrot.slane %v2145, %v2152
    %v2155 = vunpack.c.l.s4 1983009808
    %v2156 = vunpack.c.0.s8 %v2155
    %v2157 = vlaneseq
    %v2158 = vshrl.u32 %v2157, 7
    %v2159 = vsub.s32 %v2156, %v2158
    %v2160 = vrot.slane %v2146, %v2159
    %v2161 = vcombine.low %v1267, %v1281
    %v2162 = vcombine.high %v1267, %v1281
    %v2164 = vunpack.c.l.s4 1983009808
    %v2165 = vunpack.c.0.s8 %v2164
    %v2166 = vlaneseq
    %v2167 = vshrl.u32 %v2166, 7
    %v2168 = vsub.s32 %v2165, %v2167
    %v2169 = vrot.slane %v2161, %v2168
    %v2171 = vunpack.c.l.s4 1983009808
    %v2172 = vunpack.c.0.s8 %v2171
    %v2173 = vlaneseq
    %v2174 = vshrl.u32 %v2173, 7
    %v2175 = vsub.s32 %v2172, %v2174
    %v2176 = vrot.slane %v2162, %v2175
    %v2177 = vcombine.low %v1274, %v1288
    %v2178 = vcombine.high %v1274, %v1288
    %v2180 = vunpack.c.l.s4 1983009808
    %v2181 = vunpack.c.0.s8 %v2180
    %v2182 = vlaneseq
    %v2183 = vshrl.u32 %v2182, 7
    %v2184 = vsub.s32 %v2181, %v2183
    %v2185 = vrot.slane %v2177, %v2184
    %v2187 = vunpack.c.l.s4 1983009808
    %v2188 = vunpack.c.0.s8 %v2187
    %v2189 = vlaneseq
    %v2190 = vshrl.u32 %v2189, 7
    %v2191 = vsub.s32 %v2188, %v2190
    %v2192 = vrot.slane %v2178, %v2191
    %v2193 = vcombine.low %v2137, %v2153
    %v2194 = vcombine.high %v2137, %v2153
    %v2196 = vunpack.c.l.s4 1934713408
    %v2197 = vunpack.c.0.s8 %v2196
    %v2198 = vlaneseq
    %v2199 = vshrl.u32 %v2198, 7
    %v2200 = vsub.s32 %v2197, %v2199
    %v2201 = vrot.slane %v2193, %v2200
    %v2203 = vunpack.c.l.s4 1934713408
    %v2204 = vunpack.c.0.s8 %v2203
    %v2205 = vlaneseq
    %v2206 = vshrl.u32 %v2205, 7
    %v2207 = vsub.s32 %v2204, %v2206
    %v2208 = vrot.slane %v2194, %v2207
    %v2209 = vcombine.low %v2144, %v2160
    %v2210 = vcombine.high %v2144, %v2160
    %v2212 = vunpack.c.l.s4 1934713408
    %v2213 = vunpack.c.0.s8 %v2212
    %v2214 = vlaneseq
    %v2215 = vshrl.u32 %v2214, 7
    %v2216 = vsub.s32 %v2213, %v2215
    %v2217 = vrot.slane %v2209, %v2216
    %v2219 = vunpack.c.l.s4 1934713408
    %v2220 = vunpack.c.0.s8 %v2219
    %v2221 = vlaneseq
    %v2222 = vshrl.u32 %v2221, 7
    %v2223 = vsub.s32 %v2220, %v2222
    %v2224 = vrot.slane %v2210, %v2223
    %v2225 = vcombine.low %v2169, %v2185
    %v2226 = vcombine.high %v2169, %v2185
    %v2228 = vunpack.c.l.s4 1934713408
    %v2229 = vunpack.c.0.s8 %v2228
    %v2230 = vlaneseq
    %v2231 = vshrl.u32 %v2230, 7
    %v2232 = vsub.s32 %v2229, %v2231
    %v2233 = vrot.slane %v2225, %v2232
    %v2235 = vunpack.c.l.s4 1934713408
    %v2236 = vunpack.c.0.s8 %v2235
    %v2237 = vlaneseq
    %v2238 = vshrl.u32 %v2237, 7
    %v2239 = vsub.s32 %v2236, %v2238
    %v2240 = vrot.slane %v2226, %v2239
    %v2241 = vcombine.low %v2176, %v2192
    %v2242 = vcombine.high %v2176, %v2192
    %v2244 = vunpack.c.l.s4 1934713408
    %v2245 = vunpack.c.0.s8 %v2244
    %v2246 = vlaneseq
    %v2247 = vshrl.u32 %v2246, 7
    %v2248 = vsub.s32 %v2245, %v2247
    %v2249 = vrot.slane %v2241, %v2248
    %v2251 = vunpack.c.l.s4 1934713408
    %v2252 = vunpack.c.0.s8 %v2251
    %v2253 = vlaneseq
    %v2254 = vshrl.u32 %v2253, 7
    %v2255 = vsub.s32 %v2252, %v2254
    %v2256 = vrot.slane %v2242, %v2255
    %v2257 = vcombine.low %v2201, %v2233
    %v2258 = vcombine.high %v2201, %v2233
    %v2259 = vcombine.low %v2208, %v2240
    %v2260 = vcombine.high %v2208, %v2240
    %v2261 = vcombine.low %v2217, %v2249
    %v2262 = vcombine.high %v2217, %v2249
    %v2263 = vcombine.low %v2224, %v2256
    %v2264 = vcombine.high %v2224, %v2256
    %v2265 = vcombine.low %v1295, %v1309
    %v2266 = vcombine.high %v1295, %v1309
    %v2268 = vunpack.c.l.s4 1983009808
    %v2269 = vunpack.c.0.s8 %v2268
    %v2270 = vlaneseq
    %v2271 = vshrl.u32 %v2270, 7
    %v2272 = vsub.s32 %v2269, %v2271
    %v2273 = vrot.slane %v2265, %v2272
    %v2275 = vunpack.c.l.s4 1983009808
    %v2276 = vunpack.c.0.s8 %v2275
    %v2277 = vlaneseq
    %v2278 = vshrl.u32 %v2277, 7
    %v2279 = vsub.s32 %v2276, %v2278
    %v2280 = vrot.slane %v2266, %v2279
    %v2281 = vcombine.low %v1302, %v1316
    %v2282 = vcombine.high %v1302, %v1316
    %v2284 = vunpack.c.l.s4 1983009808
    %v2285 = vunpack.c.0.s8 %v2284
    %v2286 = vlaneseq
    %v2287 = vshrl.u32 %v2286, 7
    %v2288 = vsub.s32 %v2285, %v2287
    %v2289 = vrot.slane %v2281, %v2288
    %v2291 = vunpack.c.l.s4 1983009808
    %v2292 = vunpack.c.0.s8 %v2291
    %v2293 = vlaneseq
    %v2294 = vshrl.u32 %v2293, 7
    %v2295 = vsub.s32 %v2292, %v2294
    %v2296 = vrot.slane %v2282, %v2295
    %v2297 = vcombine.low %v1323, %v1337
    %v2298 = vcombine.high %v1323, %v1337
    %v2300 = vunpack.c.l.s4 1983009808
    %v2301 = vunpack.c.0.s8 %v2300
    %v2302 = vlaneseq
    %v2303 = vshrl.u32 %v2302, 7
    %v2304 = vsub.s32 %v2301, %v2303
    %v2305 = vrot.slane %v2297, %v2304
    %v2307 = vunpack.c.l.s4 1983009808
    %v2308 = vunpack.c.0.s8 %v2307
    %v2309 = vlaneseq
    %v2310 = vshrl.u32 %v2309, 7
    %v2311 = vsub.s32 %v2308, %v2310
    %v2312 = vrot.slane %v2298, %v2311
    %v2313 = vcombine.low %v1330, %v1344
    %v2314 = vcombine.high %v1330, %v1344
    %v2316 = vunpack.c.l.s4 1983009808
    %v2317 = vunpack.c.0.s8 %v2316
    %v2318 = vlaneseq
    %v2319 = vshrl.u32 %v2318, 7
    %v2320 = vsub.s32 %v2317, %v2319
    %v2321 = vrot.slane %v2313, %v2320
    %v2323 = vunpack.c.l.s4 1983009808
    %v2324 = vunpack.c.0.s8 %v2323
    %v2325 = vlaneseq
    %v2326 = vshrl.u32 %v2325, 7
    %v2327 = vsub.s32 %v2324, %v2326
    %v2328 = vrot.slane %v2314, %v2327
    %v2329 = vcombine.low %v2273, %v2289
    %v2330 = vcombine.high %v2273, %v2289
    %v2332 = vunpack.c.l.s4 1934713408
    %v2333 = vunpack.c.0.s8 %v2332
    %v2334 = vlaneseq
    %v2335 = vshrl.u32 %v2334, 7
    %v2336 = vsub.s32 %v2333, %v2335
    %v2337 = vrot.slane %v2329, %v2336
    %v2339 = vunpack.c.l.s4 1934713408
    %v2340 = vunpack.c.0.s8 %v2339
    %v2341 = vlaneseq
    %v2342 = vshrl.u32 %v2341, 7
    %v2343 = vsub.s32 %v2340, %v2342
    %v2344 = vrot.slane %v2330, %v2343
    %v2345 = vcombine.low %v2280, %v2296
    %v2346 = vcombine.high %v2280, %v2296
    %v2348 = vunpack.c.l.s4 1934713408
    %v2349 = vunpack.c.0.s8 %v2348
    %v2350 = vlaneseq
    %v2351 = vshrl.u32 %v2350, 7
    %v2352 = vsub.s32 %v2349, %v2351
    %v2353 = vrot.slane %v2345, %v2352
    %v2355 = vunpack.c.l.s4 1934713408
    %v2356 = vunpack.c.0.s8 %v2355
    %v2357 = vlaneseq
    %v2358 = vshrl.u32 %v2357, 7
    %v2359 = vsub.s32 %v2356, %v2358
    %v2360 = vrot.slane %v2346, %v2359
    %v2361 = vcombine.low %v2305, %v2321
    %v2362 = vcombine.high %v2305, %v2321
    %v2364 = vunpack.c.l.s4 1934713408
    %v2365 = vunpack.c.0.s8 %v2364
    %v2366 = vlaneseq
    %v2367 = vshrl.u32 %v2366, 7
    %v2368 = vsub.s32 %v2365, %v2367
    %v2369 = vrot.slane %v2361, %v2368
    %v2371 = vunpack.c.l.s4 1934713408
    %v2372 = vunpack.c.0.s8 %v2371
    %v2373 = vlaneseq
    %v2374 = vshrl.u32 %v2373, 7
    %v2375 = vsub.s32 %v2372, %v2374
    %v2376 = vrot.slane %v2362, %v2375
    %v2377 = vcombine.low %v2312, %v2328
    %v2378 = vcombine.high %v2312, %v2328
    %v2380 = vunpack.c.l.s4 1934713408
    %v2381 = vunpack.c.0.s8 %v2380
    %v2382 = vlaneseq
    %v2383 = vshrl.u32 %v2382, 7
    %v2384 = vsub.s32 %v2381, %v2383
    %v2385 = vrot.slane %v2377, %v2384
    %v2387 = vunpack.c.l.s4 1934713408
    %v2388 = vunpack.c.0.s8 %v2387
    %v2389 = vlaneseq
    %v2390 = vshrl.u32 %v2389, 7
    %v2391 = vsub.s32 %v2388, %v2390
    %v2392 = vrot.slane %v2378, %v2391
    %v2393 = vcombine.low %v2337, %v2369
    %v2394 = vcombine.high %v2337, %v2369
    %v2395 = vcombine.low %v2344, %v2376
    %v2396 = vcombine.high %v2344, %v2376
    %v2397 = vcombine.low %v2353, %v2385
    %v2398 = vcombine.high %v2353, %v2385
    %v2399 = vcombine.low %v2360, %v2392
    %v2400 = vcombine.high %v2360, %v2392
    %v2401 = vcombine.low %v1351, %v1365
    %v2402 = vcombine.high %v1351, %v1365
    %v2404 = vunpack.c.l.s4 1983009808
    %v2405 = vunpack.c.0.s8 %v2404
    %v2406 = vlaneseq
    %v2407 = vshrl.u32 %v2406, 7
    %v2408 = vsub.s32 %v2405, %v2407
    %v2409 = vrot.slane %v2401, %v2408
    %v2411 = vunpack.c.l.s4 1983009808
    %v2412 = vunpack.c.0.s8 %v2411
    %v2413 = vlaneseq
    %v2414 = vshrl.u32 %v2413, 7
    %v2415 = vsub.s32 %v2412, %v2414
    %v2416 = vrot.slane %v2402, %v2415
    %v2417 = vcombine.low %v1358, %v1372
    %v2418 = vcombine.high %v1358, %v1372
    %v2420 = vunpack.c.l.s4 1983009808
    %v2421 = vunpack.c.0.s8 %v2420
    %v2422 = vlaneseq
    %v2423 = vshrl.u32 %v2422, 7
    %v2424 = vsub.s32 %v2421, %v2423
    %v2425 = vrot.slane %v2417, %v2424
    %v2427 = vunpack.c.l.s4 1983009808
    %v2428 = vunpack.c.0.s8 %v2427
    %v2429 = vlaneseq
    %v2430 = vshrl.u32 %v2429, 7
    %v2431 = vsub.s32 %v2428, %v2430
    %v2432 = vrot.slane %v2418, %v2431
    %v2433 = vcombine.low %v1379, %v1393
    %v2434 = vcombine.high %v1379, %v1393
    %v2436 = vunpack.c.l.s4 1983009808
    %v2437 = vunpack.c.0.s8 %v2436
    %v2438 = vlaneseq
    %v2439 = vshrl.u32 %v2438, 7
    %v2440 = vsub.s32 %v2437, %v2439
    %v2441 = vrot.slane %v2433, %v2440
    %v2443 = vunpack.c.l.s4 1983009808
    %v2444 = vunpack.c.0.s8 %v2443
    %v2445 = vlaneseq
    %v2446 = vshrl.u32 %v2445, 7
    %v2447 = vsub.s32 %v2444, %v2446
    %v2448 = vrot.slane %v2434, %v2447
    %v2449 = vcombine.low %v1386, %v1400
    %v2450 = vcombine.high %v1386, %v1400
    %v2452 = vunpack.c.l.s4 1983009808
    %v2453 = vunpack.c.0.s8 %v2452
    %v2454 = vlaneseq
    %v2455 = vshrl.u32 %v2454, 7
    %v2456 = vsub.s32 %v2453, %v2455
    %v2457 = vrot.slane %v2449, %v2456
    %v2459 = vunpack.c.l.s4 1983009808
    %v2460 = vunpack.c.0.s8 %v2459
    %v2461 = vlaneseq
    %v2462 = vshrl.u32 %v2461, 7
    %v2463 = vsub.s32 %v2460, %v2462
    %v2464 = vrot.slane %v2450, %v2463
    %v2465 = vcombine.low %v2409, %v2425
    %v2466 = vcombine.high %v2409, %v2425
    %v2468 = vunpack.c.l.s4 1934713408
    %v2469 = vunpack.c.0.s8 %v2468
    %v2470 = vlaneseq
    %v2471 = vshrl.u32 %v2470, 7
    %v2472 = vsub.s32 %v2469, %v2471
    %v2473 = vrot.slane %v2465, %v2472
    %v2475 = vunpack.c.l.s4 1934713408
    %v2476 = vunpack.c.0.s8 %v2475
    %v2477 = vlaneseq
    %v2478 = vshrl.u32 %v2477, 7
    %v2479 = vsub.s32 %v2476, %v2478
    %v2480 = vrot.slane %v2466, %v2479
    %v2481 = vcombine.low %v2416, %v2432
    %v2482 = vcombine.high %v2416, %v2432
    %v2484 = vunpack.c.l.s4 1934713408
    %v2485 = vunpack.c.0.s8 %v2484
    %v2486 = vlaneseq
    %v2487 = vshrl.u32 %v2486, 7
    %v2488 = vsub.s32 %v2485, %v2487
    %v2489 = vrot.slane %v2481, %v2488
    %v2491 = vunpack.c.l.s4 1934713408
    %v2492 = vunpack.c.0.s8 %v2491
    %v2493 = vlaneseq
    %v2494 = vshrl.u32 %v2493, 7
    %v2495 = vsub.s32 %v2492, %v2494
    %v2496 = vrot.slane %v2482, %v2495
    %v2497 = vcombine.low %v2441, %v2457
    %v2498 = vcombine.high %v2441, %v2457
    %v2500 = vunpack.c.l.s4 1934713408
    %v2501 = vunpack.c.0.s8 %v2500
    %v2502 = vlaneseq
    %v2503 = vshrl.u32 %v2502, 7
    %v2504 = vsub.s32 %v2501, %v2503
    %v2505 = vrot.slane %v2497, %v2504
    %v2507 = vunpack.c.l.s4 1934713408
    %v2508 = vunpack.c.0.s8 %v2507
    %v2509 = vlaneseq
    %v2510 = vshrl.u32 %v2509, 7
    %v2511 = vsub.s32 %v2508, %v2510
    %v2512 = vrot.slane %v2498, %v2511
    %v2513 = vcombine.low %v2448, %v2464
    %v2514 = vcombine.high %v2448, %v2464
    %v2516 = vunpack.c.l.s4 1934713408
    %v2517 = vunpack.c.0.s8 %v2516
    %v2518 = vlaneseq
    %v2519 = vshrl.u32 %v2518, 7
    %v2520 = vsub.s32 %v2517, %v2519
    %v2521 = vrot.slane %v2513, %v2520
    %v2523 = vunpack.c.l.s4 1934713408
    %v2524 = vunpack.c.0.s8 %v2523
    %v2525 = vlaneseq
    %v2526 = vshrl.u32 %v2525, 7
    %v2527 = vsub.s32 %v2524, %v2526
    %v2528 = vrot.slane %v2514, %v2527
    %v2529 = vcombine.low %v2473, %v2505
    %v2530 = vcombine.high %v2473, %v2505
    %v2531 = vcombine.low %v2480, %v2512
    %v2532 = vcombine.high %v2480, %v2512
    %v2533 = vcombine.low %v2489, %v2521
    %v2534 = vcombine.high %v2489, %v2521
    %v2535 = vcombine.low %v2496, %v2528
    %v2536 = vcombine.high %v2496, %v2528
    %v2537 = vcombine.low %v1407, %v1421
    %v2538 = vcombine.high %v1407, %v1421
    %v2540 = vunpack.c.l.s4 1983009808
    %v2541 = vunpack.c.0.s8 %v2540
    %v2542 = vlaneseq
    %v2543 = vshrl.u32 %v2542, 7
    %v2544 = vsub.s32 %v2541, %v2543
    %v2545 = vrot.slane %v2537, %v2544
    %v2547 = vunpack.c.l.s4 1983009808
    %v2548 = vunpack.c.0.s8 %v2547
    %v2549 = vlaneseq
    %v2550 = vshrl.u32 %v2549, 7
    %v2551 = vsub.s32 %v2548, %v2550
    %v2552 = vrot.slane %v2538, %v2551
    %v2553 = vcombine.low %v1414, %v1428
    %v2554 = vcombine.high %v1414, %v1428
    %v2556 = vunpack.c.l.s4 1983009808
    %v2557 = vunpack.c.0.s8 %v2556
    %v2558 = vlaneseq
    %v2559 = vshrl.u32 %v2558, 7
    %v2560 = vsub.s32 %v2557, %v2559
    %v2561 = vrot.slane %v2553, %v2560
    %v2563 = vunpack.c.l.s4 1983009808
    %v2564 = vunpack.c.0.s8 %v2563
    %v2565 = vlaneseq
    %v2566 = vshrl.u32 %v2565, 7
    %v2567 = vsub.s32 %v2564, %v2566
    %v2568 = vrot.slane %v2554, %v2567
    %v2569 = vcombine.low %v1435, %v1449
    %v2570 = vcombine.high %v1435, %v1449
    %v2572 = vunpack.c.l.s4 1983009808
    %v2573 = vunpack.c.0.s8 %v2572
    %v2574 = vlaneseq
    %v2575 = vshrl.u32 %v2574, 7
    %v2576 = vsub.s32 %v2573, %v2575
    %v2577 = vrot.slane %v2569, %v2576
    %v2579 = vunpack.c.l.s4 1983009808
    %v2580 = vunpack.c.0.s8 %v2579
    %v2581 = vlaneseq
    %v2582 = vshrl.u32 %v2581, 7
    %v2583 = vsub.s32 %v2580, %v2582
    %v2584 = vrot.slane %v2570, %v2583
    %v2585 = vcombine.low %v1442, %v1456
    %v2586 = vcombine.high %v1442, %v1456
    %v2588 = vunpack.c.l.s4 1983009808
    %v2589 = vunpack.c.0.s8 %v2588
    %v2590 = vlaneseq
    %v2591 = vshrl.u32 %v2590, 7
    %v2592 = vsub.s32 %v2589, %v2591
    %v2593 = vrot.slane %v2585, %v2592
    %v2595 = vunpack.c.l.s4 1983009808
    %v2596 = vunpack.c.0.s8 %v2595
    %v2597 = vlaneseq
    %v2598 = vshrl.u32 %v2597, 7
    %v2599 = vsub.s32 %v2596, %v2598
    %v2600 = vrot.slane %v2586, %v2599
    %v2601 = vcombine.low %v2545, %v2561
    %v2602 = vcombine.high %v2545, %v2561
    %v2604 = vunpack.c.l.s4 1934713408
    %v2605 = vunpack.c.0.s8 %v2604
    %v2606 = vlaneseq
    %v2607 = vshrl.u32 %v2606, 7
    %v2608 = vsub.s32 %v2605, %v2607
    %v2609 = vrot.slane %v2601, %v2608
    %v2611 = vunpack.c.l.s4 1934713408
    %v2612 = vunpack.c.0.s8 %v2611
    %v2613 = vlaneseq
    %v2614 = vshrl.u32 %v2613, 7
    %v2615 = vsub.s32 %v2612, %v2614
    %v2616 = vrot.slane %v2602, %v2615
    %v2617 = vcombine.low %v2552, %v2568
    %v2618 = vcombine.high %v2552, %v2568
    %v2620 = vunpack.c.l.s4 1934713408
    %v2621 = vunpack.c.0.s8 %v2620
    %v2622 = vlaneseq
    %v2623 = vshrl.u32 %v2622, 7
    %v2624 = vsub.s32 %v2621, %v2623
    %v2625 = vrot.slane %v2617, %v2624
    %v2627 = vunpack.c.l.s4 1934713408
    %v2628 = vunpack.c.0.s8 %v2627
    %v2629 = vlaneseq
    %v2630 = vshrl.u32 %v2629, 7
    %v2631 = vsub.s32 %v2628, %v2630
    %v2632 = vrot.slane %v2618, %v2631
    %v2633 = vcombine.low %v2577, %v2593
    %v2634 = vcombine.high %v2577, %v2593
    %v2636 = vunpack.c.l.s4 1934713408
    %v2637 = vunpack.c.0.s8 %v2636
    %v2638 = vlaneseq
    %v2639 = vshrl.u32 %v2638, 7
    %v2640 = vsub.s32 %v2637, %v2639
    %v2641 = vrot.slane %v2633, %v2640
    %v2643 = vunpack.c.l.s4 1934713408
    %v2644 = vunpack.c.0.s8 %v2643
    %v2645 = vlaneseq
    %v2646 = vshrl.u32 %v2645, 7
    %v2647 = vsub.s32 %v2644, %v2646
    %v2648 = vrot.slane %v2634, %v2647
    %v2649 = vcombine.low %v2584, %v2600
    %v2650 = vcombine.high %v2584, %v2600
    %v2652 = vunpack.c.l.s4 1934713408
    %v2653 = vunpack.c.0.s8 %v2652
    %v2654 = vlaneseq
    %v2655 = vshrl.u32 %v2654, 7
    %v2656 = vsub.s32 %v2653, %v2655
    %v2657 = vrot.slane %v2649, %v2656
    %v2659 = vunpack.c.l.s4 1934713408
    %v2660 = vunpack.c.0.s8 %v2659
    %v2661 = vlaneseq
    %v2662 = vshrl.u32 %v2661, 7
    %v2663 = vsub.s32 %v2660, %v2662
    %v2664 = vrot.slane %v2650, %v2663
    %v2665 = vcombine.low %v2609, %v2641
    %v2666 = vcombine.high %v2609, %v2641
    %v2667 = vcombine.low %v2616, %v2648
    %v2668 = vcombine.high %v2616, %v2648
    %v2669 = vcombine.low %v2625, %v2657
    %v2670 = vcombine.high %v2625, %v2657
    %v2671 = vcombine.low %v2632, %v2664
    %v2672 = vcombine.high %v2632, %v2664
    %v2673 = vcombine.low %v1463, %v1477
    %v2674 = vcombine.high %v1463, %v1477
    %v2676 = vunpack.c.l.s4 1983009808
    %v2677 = vunpack.c.0.s8 %v2676
    %v2678 = vlaneseq
    %v2679 = vshrl.u32 %v2678, 7
    %v2680 = vsub.s32 %v2677, %v2679
    %v2681 = vrot.slane %v2673, %v2680
    %v2683 = vunpack.c.l.s4 1983009808
    %v2684 = vunpack.c.0.s8 %v2683
    %v2685 = vlaneseq
    %v2686 = vshrl.u32 %v2685, 7
    %v2687 = vsub.s32 %v2684, %v2686
    %v2688 = vrot.slane %v2674, %v2687
    %v2689 = vcombine.low %v1470, %v1484
    %v2690 = vcombine.high %v1470, %v1484
    %v2692 = vunpack.c.l.s4 1983009808
    %v2693 = vunpack.c.0.s8 %v2692
    %v2694 = vlaneseq
    %v2695 = vshrl.u32 %v2694, 7
    %v2696 = vsub.s32 %v2693, %v2695
    %v2697 = vrot.slane %v2689, %v2696
    %v2699 = vunpack.c.l.s4 1983009808
    %v2700 = vunpack.c.0.s8 %v2699
    %v2701 = vlaneseq
    %v2702 = vshrl.u32 %v2701, 7
    %v2703 = vsub.s32 %v2700, %v2702
    %v2704 = vrot.slane %v2690, %v2703
    %v2705 = vcombine.low %v1491, %v1505
    %v2706 = vcombine.high %v1491, %v1505
    %v2708 = vunpack.c.l.s4 1983009808
    %v2709 = vunpack.c.0.s8 %v2708
    %v2710 = vlaneseq
    %v2711 = vshrl.u32 %v2710, 7
    %v2712 = vsub.s32 %v2709, %v2711
    %v2713 = vrot.slane %v2705, %v2712
    %v2715 = vunpack.c.l.s4 1983009808
    %v2716 = vunpack.c.0.s8 %v2715
    %v2717 = vlaneseq
    %v2718 = vshrl.u32 %v2717, 7
    %v2719 = vsub.s32 %v2716, %v2718
    %v2720 = vrot.slane %v2706, %v2719
    %v2721 = vcombine.low %v1498, %v1512
    %v2722 = vcombine.high %v1498, %v1512
    %v2724 = vunpack.c.l.s4 1983009808
    %v2725 = vunpack.c.0.s8 %v2724
    %v2726 = vlaneseq
    %v2727 = vshrl.u32 %v2726, 7
    %v2728 = vsub.s32 %v2725, %v2727
    %v2729 = vrot.slane %v2721, %v2728
    %v2731 = vunpack.c.l.s4 1983009808
    %v2732 = vunpack.c.0.s8 %v2731
    %v2733 = vlaneseq
    %v2734 = vshrl.u32 %v2733, 7
    %v2735 = vsub.s32 %v2732, %v2734
    %v2736 = vrot.slane %v2722, %v2735
    %v2737 = vcombine.low %v2681, %v2697
    %v2738 = vcombine.high %v2681, %v2697
    %v2740 = vunpack.c.l.s4 1934713408
    %v2741 = vunpack.c.0.s8 %v2740
    %v2742 = vlaneseq
    %v2743 = vshrl.u32 %v2742, 7
    %v2744 = vsub.s32 %v2741, %v2743
    %v2745 = vrot.slane %v2737, %v2744
    %v2747 = vunpack.c.l.s4 1934713408
    %v2748 = vunpack.c.0.s8 %v2747
    %v2749 = vlaneseq
    %v2750 = vshrl.u32 %v2749, 7
    %v2751 = vsub.s32 %v2748, %v2750
    %v2752 = vrot.slane %v2738, %v2751
    %v2753 = vcombine.low %v2688, %v2704
    %v2754 = vcombine.high %v2688, %v2704
    %v2756 = vunpack.c.l.s4 1934713408
    %v2757 = vunpack.c.0.s8 %v2756
    %v2758 = vlaneseq
    %v2759 = vshrl.u32 %v2758, 7
    %v2760 = vsub.s32 %v2757, %v2759
    %v2761 = vrot.slane %v2753, %v2760
    %v2763 = vunpack.c.l.s4 1934713408
    %v2764 = vunpack.c.0.s8 %v2763
    %v2765 = vlaneseq
    %v2766 = vshrl.u32 %v2765, 7
    %v2767 = vsub.s32 %v2764, %v2766
    %v2768 = vrot.slane %v2754, %v2767
    %v2769 = vcombine.low %v2713, %v2729
    %v2770 = vcombine.high %v2713, %v2729
    %v2772 = vunpack.c.l.s4 1934713408
    %v2773 = vunpack.c.0.s8 %v2772
    %v2774 = vlaneseq
    %v2775 = vshrl.u32 %v2774, 7
    %v2776 = vsub.s32 %v2773, %v2775
    %v2777 = vrot.slane %v2769, %v2776
    %v2779 = vunpack.c.l.s4 1934713408
    %v2780 = vunpack.c.0.s8 %v2779
    %v2781 = vlaneseq
    %v2782 = vshrl.u32 %v2781, 7
    %v2783 = vsub.s32 %v2780, %v2782
    %v2784 = vrot.slane %v2770, %v2783
    %v2785 = vcombine.low %v2720, %v2736
    %v2786 = vcombine.high %v2720, %v2736
    %v2788 = vunpack.c.l.s4 1934713408
    %v2789 = vunpack.c.0.s8 %v2788
    %v2790 = vlaneseq
    %v2791 = vshrl.u32 %v2790, 7
    %v2792 = vsub.s32 %v2789, %v2791
    %v2793 = vrot.slane %v2785, %v2792
    %v2795 = vunpack.c.l.s4 1934713408
    %v2796 = vunpack.c.0.s8 %v2795
    %v2797 = vlaneseq
    %v2798 = vshrl.u32 %v2797, 7
    %v2799 = vsub.s32 %v2796, %v2798
    %v2800 = vrot.slane %v2786, %v2799
    %v2801 = vcombine.low %v2745, %v2777
    %v2802 = vcombine.high %v2745, %v2777
    %v2803 = vcombine.low %v2752, %v2784
    %v2804 = vcombine.high %v2752, %v2784
    %v2805 = vcombine.low %v2761, %v2793
    %v2806 = vcombine.high %v2761, %v2793
    %v2807 = vcombine.low %v2768, %v2800
    %v2808 = vcombine.high %v2768, %v2800
    %v2809 = vcombine.low %v1519, %v1533
    %v2810 = vcombine.high %v1519, %v1533
    %v2812 = vunpack.c.l.s4 1983009808
    %v2813 = vunpack.c.0.s8 %v2812
    %v2814 = vlaneseq
    %v2815 = vshrl.u32 %v2814, 7
    %v2816 = vsub.s32 %v2813, %v2815
    %v2817 = vrot.slane %v2809, %v2816
    %v2819 = vunpack.c.l.s4 1983009808
    %v2820 = vunpack.c.0.s8 %v2819
    %v2821 = vlaneseq
    %v2822 = vshrl.u32 %v2821, 7
    %v2823 = vsub.s32 %v2820, %v2822
    %v2824 = vrot.slane %v2810, %v2823
    %v2825 = vcombine.low %v1526, %v1540
    %v2826 = vcombine.high %v1526, %v1540
    %v2828 = vunpack.c.l.s4 1983009808
    %v2829 = vunpack.c.0.s8 %v2828
    %v2830 = vlaneseq
    %v2831 = vshrl.u32 %v2830, 7
    %v2832 = vsub.s32 %v2829, %v2831
    %v2833 = vrot.slane %v2825, %v2832
    %v2835 = vunpack.c.l.s4 1983009808
    %v2836 = vunpack.c.0.s8 %v2835
    %v2837 = vlaneseq
    %v2838 = vshrl.u32 %v2837, 7
    %v2839 = vsub.s32 %v2836, %v2838
    %v2840 = vrot.slane %v2826, %v2839
    %v2841 = vcombine.low %v1547, %v1561
    %v2842 = vcombine.high %v1547, %v1561
    %v2844 = vunpack.c.l.s4 1983009808
    %v2845 = vunpack.c.0.s8 %v2844
    %v2846 = vlaneseq
    %v2847 = vshrl.u32 %v2846, 7
    %v2848 = vsub.s32 %v2845, %v2847
    %v2849 = vrot.slane %v2841, %v2848
    %v2851 = vunpack.c.l.s4 1983009808
    %v2852 = vunpack.c.0.s8 %v2851
    %v2853 = vlaneseq
    %v2854 = vshrl.u32 %v2853, 7
    %v2855 = vsub.s32 %v2852, %v2854
    %v2856 = vrot.slane %v2842, %v2855
    %v2857 = vcombine.low %v1554, %v1568
    %v2858 = vcombine.high %v1554, %v1568
    %v2860 = vunpack.c.l.s4 1983009808
    %v2861 = vunpack.c.0.s8 %v2860
    %v2862 = vlaneseq
    %v2863 = vshrl.u32 %v2862, 7
    %v2864 = vsub.s32 %v2861, %v2863
    %v2865 = vrot.slane %v2857, %v2864
    %v2867 = vunpack.c.l.s4 1983009808
    %v2868 = vunpack.c.0.s8 %v2867
    %v2869 = vlaneseq
    %v2870 = vshrl.u32 %v2869, 7
    %v2871 = vsub.s32 %v2868, %v2870
    %v2872 = vrot.slane %v2858, %v2871
    %v2873 = vcombine.low %v2817, %v2833
    %v2874 = vcombine.high %v2817, %v2833
    %v2876 = vunpack.c.l.s4 1934713408
    %v2877 = vunpack.c.0.s8 %v2876
    %v2878 = vlaneseq
    %v2879 = vshrl.u32 %v2878, 7
    %v2880 = vsub.s32 %v2877, %v2879
    %v2881 = vrot.slane %v2873, %v2880
    %v2883 = vunpack.c.l.s4 1934713408
    %v2884 = vunpack.c.0.s8 %v2883
    %v2885 = vlaneseq
    %v2886 = vshrl.u32 %v2885, 7
    %v2887 = vsub.s32 %v2884, %v2886
    %v2888 = vrot.slane %v2874, %v2887
    %v2889 = vcombine.low %v2824, %v2840
    %v2890 = vcombine.high %v2824, %v2840
    %v2892 = vunpack.c.l.s4 1934713408
    %v2893 = vunpack.c.0.s8 %v2892
    %v2894 = vlaneseq
    %v2895 = vshrl.u32 %v2894, 7
    %v2896 = vsub.s32 %v2893, %v2895
    %v2897 = vrot.slane %v2889, %v2896
    %v2899 = vunpack.c.l.s4 1934713408
    %v2900 = vunpack.c.0.s8 %v2899
    %v2901 = vlaneseq
    %v2902 = vshrl.u32 %v2901, 7
    %v2903 = vsub.s32 %v2900, %v2902
    %v2904 = vrot.slane %v2890, %v2903
    %v2905 = vcombine.low %v2849, %v2865
    %v2906 = vcombine.high %v2849, %v2865
    %v2908 = vunpack.c.l.s4 1934713408
    %v2909 = vunpack.c.0.s8 %v2908
    %v2910 = vlaneseq
    %v2911 = vshrl.u32 %v2910, 7
    %v2912 = vsub.s32 %v2909, %v2911
    %v2913 = vrot.slane %v2905, %v2912
    %v2915 = vunpack.c.l.s4 1934713408
    %v2916 = vunpack.c.0.s8 %v2915
    %v2917 = vlaneseq
    %v2918 = vshrl.u32 %v2917, 7
    %v2919 = vsub.s32 %v2916, %v2918
    %v2920 = vrot.slane %v2906, %v2919
    %v2921 = vcombine.low %v2856, %v2872
    %v2922 = vcombine.high %v2856, %v2872
    %v2924 = vunpack.c.l.s4 1934713408
    %v2925 = vunpack.c.0.s8 %v2924
    %v2926 = vlaneseq
    %v2927 = vshrl.u32 %v2926, 7
    %v2928 = vsub.s32 %v2925, %v2927
    %v2929 = vrot.slane %v2921, %v2928
    %v2931 = vunpack.c.l.s4 1934713408
    %v2932 = vunpack.c.0.s8 %v2931
    %v2933 = vlaneseq
    %v2934 = vshrl.u32 %v2933, 7
    %v2935 = vsub.s32 %v2932, %v2934
    %v2936 = vrot.slane %v2922, %v2935
    %v2937 = vcombine.low %v2881, %v2913
    %v2938 = vcombine.high %v2881, %v2913
    %v2939 = vcombine.low %v2888, %v2920
    %v2940 = vcombine.high %v2888, %v2920
    %v2941 = vcombine.low %v2897, %v2929
    %v2942 = vcombine.high %v2897, %v2929
    %v2943 = vcombine.low %v2904, %v2936
    %v2944 = vcombine.high %v2904, %v2936
    %v2945 = vcombine.low %v1575, %v1589
    %v2946 = vcombine.high %v1575, %v1589
    %v2948 = vunpack.c.l.s4 1983009808
    %v2949 = vunpack.c.0.s8 %v2948
    %v2950 = vlaneseq
    %v2951 = vshrl.u32 %v2950, 7
    %v2952 = vsub.s32 %v2949, %v2951
    %v2953 = vrot.slane %v2945, %v2952
    %v2955 = vunpack.c.l.s4 1983009808
    %v2956 = vunpack.c.0.s8 %v2955
    %v2957 = vlaneseq
    %v2958 = vshrl.u32 %v2957, 7
    %v2959 = vsub.s32 %v2956, %v2958
    %v2960 = vrot.slane %v2946, %v2959
    %v2961 = vcombine.low %v1582, %v1596
    %v2962 = vcombine.high %v1582, %v1596
    %v2964 = vunpack.c.l.s4 1983009808
    %v2965 = vunpack.c.0.s8 %v2964
    %v2966 = vlaneseq
    %v2967 = vshrl.u32 %v2966, 7
    %v2968 = vsub.s32 %v2965, %v2967
    %v2969 = vrot.slane %v2961, %v2968
    %v2971 = vunpack.c.l.s4 1983009808
    %v2972 = vunpack.c.0.s8 %v2971
    %v2973 = vlaneseq
    %v2974 = vshrl.u32 %v2973, 7
    %v2975 = vsub.s32 %v2972, %v2974
    %v2976 = vrot.slane %v2962, %v2975
    %v2977 = vcombine.low %v1603, %v1617
    %v2978 = vcombine.high %v1603, %v1617
    %v2980 = vunpack.c.l.s4 1983009808
    %v2981 = vunpack.c.0.s8 %v2980
    %v2982 = vlaneseq
    %v2983 = vshrl.u32 %v2982, 7
    %v2984 = vsub.s32 %v2981, %v2983
    %v2985 = vrot.slane %v2977, %v2984
    %v2987 = vunpack.c.l.s4 1983009808
    %v2988 = vunpack.c.0.s8 %v2987
    %v2989 = vlaneseq
    %v2990 = vshrl.u32 %v2989, 7
    %v2991 = vsub.s32 %v2988, %v2990
    %v2992 = vrot.slane %v2978, %v2991
    %v2993 = vcombine.low %v1610, %v1624
    %v2994 = vcombine.high %v1610, %v1624
    %v2996 = vunpack.c.l.s4 1983009808
    %v2997 = vunpack.c.0.s8 %v2996
    %v2998 = vlaneseq
    %v2999 = vshrl.u32 %v2998, 7
    %v3000 = vsub.s32 %v2997, %v2999
    %v3001 = vrot.slane %v2993, %v3000
    %v3003 = vunpack.c.l.s4 1983009808
    %v3004 = vunpack.c.0.s8 %v3003
    %v3005 = vlaneseq
    %v3006 = vshrl.u32 %v3005, 7
    %v3007 = vsub.s32 %v3004, %v3006
    %v3008 = vrot.slane %v2994, %v3007
    %v3009 = vcombine.low %v2953, %v2969
    %v3010 = vcombine.high %v2953, %v2969
    %v3012 = vunpack.c.l.s4 1934713408
    %v3013 = vunpack.c.0.s8 %v3012
    %v3014 = vlaneseq
    %v3015 = vshrl.u32 %v3014, 7
    %v3016 = vsub.s32 %v3013, %v3015
    %v3017 = vrot.slane %v3009, %v3016
    %v3019 = vunpack.c.l.s4 1934713408
    %v3020 = vunpack.c.0.s8 %v3019
    %v3021 = vlaneseq
    %v3022 = vshrl.u32 %v3021, 7
    %v3023 = vsub.s32 %v3020, %v3022
    %v3024 = vrot.slane %v3010, %v3023
    %v3025 = vcombine.low %v2960, %v2976
    %v3026 = vcombine.high %v2960, %v2976
    %v3028 = vunpack.c.l.s4 1934713408
    %v3029 = vunpack.c.0.s8 %v3028
    %v3030 = vlaneseq
    %v3031 = vshrl.u32 %v3030, 7
    %v3032 = vsub.s32 %v3029, %v3031
    %v3033 = vrot.slane %v3025, %v3032
    %v3035 = vunpack.c.l.s4 1934713408
    %v3036 = vunpack.c.0.s8 %v3035
    %v3037 = vlaneseq
    %v3038 = vshrl.u32 %v3037, 7
    %v3039 = vsub.s32 %v3036, %v3038
    %v3040 = vrot.slane %v3026, %v3039
    %v3041 = vcombine.low %v2985, %v3001
    %v3042 = vcombine.high %v2985, %v3001
    %v3044 = vunpack.c.l.s4 1934713408
    %v3045 = vunpack.c.0.s8 %v3044
    %v3046 = vlaneseq
    %v3047 = vshrl.u32 %v3046, 7
    %v3048 = vsub.s32 %v3045, %v3047
    %v3049 = vrot.slane %v3041, %v3048
    %v3051 = vunpack.c.l.s4 1934713408
    %v3052 = vunpack.c.0.s8 %v3051
    %v3053 = vlaneseq
    %v3054 = vshrl.u32 %v3053, 7
    %v3055 = vsub.s32 %v3052, %v3054
    %v3056 = vrot.slane %v3042, %v3055
    %v3057 = vcombine.low %v2992, %v3008
    %v3058 = vcombine.high %v2992, %v3008
    %v3060 = vunpack.c.l.s4 1934713408
    %v3061 = vunpack.c.0.s8 %v3060
    %v3062 = vlaneseq
    %v3063 = vshrl.u32 %v3062, 7
    %v3064 = vsub.s32 %v3061, %v3063
    %v3065 = vrot.slane %v3057, %v3064
    %v3067 = vunpack.c.l.s4 1934713408
    %v3068 = vunpack.c.0.s8 %v3067
    %v3069 = vlaneseq
    %v3070 = vshrl.u32 %v3069, 7
    %v3071 = vsub.s32 %v3068, %v3070
    %v3072 = vrot.slane %v3058, %v3071
    %v3073 = vcombine.low %v3017, %v3049
    %v3074 = vcombine.high %v3017, %v3049
    %v3075 = vcombine.low %v3024, %v3056
    %v3076 = vcombine.high %v3024, %v3056
    %v3077 = vcombine.low %v3033, %v3065
    %v3078 = vcombine.high %v3033, %v3065
    %v3079 = vcombine.low %v3040, %v3072
    %v3080 = vcombine.high %v3040, %v3072
    %v3081 = vcombine.low %v1631, %v1645
    %v3082 = vcombine.high %v1631, %v1645
    %v3084 = vunpack.c.l.s4 1983009808
    %v3085 = vunpack.c.0.s8 %v3084
    %v3086 = vlaneseq
    %v3087 = vshrl.u32 %v3086, 7
    %v3088 = vsub.s32 %v3085, %v3087
    %v3089 = vrot.slane %v3081, %v3088
    %v3091 = vunpack.c.l.s4 1983009808
    %v3092 = vunpack.c.0.s8 %v3091
    %v3093 = vlaneseq
    %v3094 = vshrl.u32 %v3093, 7
    %v3095 = vsub.s32 %v3092, %v3094
    %v3096 = vrot.slane %v3082, %v3095
    %v3097 = vcombine.low %v1638, %v1652
    %v3098 = vcombine.high %v1638, %v1652
    %v3100 = vunpack.c.l.s4 1983009808
    %v3101 = vunpack.c.0.s8 %v3100
    %v3102 = vlaneseq
    %v3103 = vshrl.u32 %v3102, 7
    %v3104 = vsub.s32 %v3101, %v3103
    %v3105 = vrot.slane %v3097, %v3104
    %v3107 = vunpack.c.l.s4 1983009808
    %v3108 = vunpack.c.0.s8 %v3107
    %v3109 = vlaneseq
    %v3110 = vshrl.u32 %v3109, 7
    %v3111 = vsub.s32 %v3108, %v3110
    %v3112 = vrot.slane %v3098, %v3111
    %v3113 = vcombine.low %v1659, %v1673
    %v3114 = vcombine.high %v1659, %v1673
    %v3116 = vunpack.c.l.s4 1983009808
    %v3117 = vunpack.c.0.s8 %v3116
    %v3118 = vlaneseq
    %v3119 = vshrl.u32 %v3118, 7
    %v3120 = vsub.s32 %v3117, %v3119
    %v3121 = vrot.slane %v3113, %v3120
    %v3123 = vunpack.c.l.s4 1983009808
    %v3124 = vunpack.c.0.s8 %v3123
    %v3125 = vlaneseq
    %v3126 = vshrl.u32 %v3125, 7
    %v3127 = vsub.s32 %v3124, %v3126
    %v3128 = vrot.slane %v3114, %v3127
    %v3129 = vcombine.low %v1666, %v1680
    %v3130 = vcombine.high %v1666, %v1680
    %v3132 = vunpack.c.l.s4 1983009808
    %v3133 = vunpack.c.0.s8 %v3132
    %v3134 = vlaneseq
    %v3135 = vshrl.u32 %v3134, 7
    %v3136 = vsub.s32 %v3133, %v3135
    %v3137 = vrot.slane %v3129, %v3136
    %v3139 = vunpack.c.l.s4 1983009808
    %v3140 = vunpack.c.0.s8 %v3139
    %v3141 = vlaneseq
    %v3142 = vshrl.u32 %v3141, 7
    %v3143 = vsub.s32 %v3140, %v3142
    %v3144 = vrot.slane %v3130, %v3143
    %v3145 = vcombine.low %v3089, %v3105
    %v3146 = vcombine.high %v3089, %v3105
    %v3148 = vunpack.c.l.s4 1934713408
    %v3149 = vunpack.c.0.s8 %v3148
    %v3150 = vlaneseq
    %v3151 = vshrl.u32 %v3150, 7
    %v3152 = vsub.s32 %v3149, %v3151
    %v3153 = vrot.slane %v3145, %v3152
    %v3155 = vunpack.c.l.s4 1934713408
    %v3156 = vunpack.c.0.s8 %v3155
    %v3157 = vlaneseq
    %v3158 = vshrl.u32 %v3157, 7
    %v3159 = vsub.s32 %v3156, %v3158
    %v3160 = vrot.slane %v3146, %v3159
    %v3161 = vcombine.low %v3096, %v3112
    %v3162 = vcombine.high %v3096, %v3112
    %v3164 = vunpack.c.l.s4 1934713408
    %v3165 = vunpack.c.0.s8 %v3164
    %v3166 = vlaneseq
    %v3167 = vshrl.u32 %v3166, 7
    %v3168 = vsub.s32 %v3165, %v3167
    %v3169 = vrot.slane %v3161, %v3168
    %v3171 = vunpack.c.l.s4 1934713408
    %v3172 = vunpack.c.0.s8 %v3171
    %v3173 = vlaneseq
    %v3174 = vshrl.u32 %v3173, 7
    %v3175 = vsub.s32 %v3172, %v3174
    %v3176 = vrot.slane %v3162, %v3175
    %v3177 = vcombine.low %v3121, %v3137
    %v3178 = vcombine.high %v3121, %v3137
    %v3180 = vunpack.c.l.s4 1934713408
    %v3181 = vunpack.c.0.s8 %v3180
    %v3182 = vlaneseq
    %v3183 = vshrl.u32 %v3182, 7
    %v3184 = vsub.s32 %v3181, %v3183
    %v3185 = vrot.slane %v3177, %v3184
    %v3187 = vunpack.c.l.s4 1934713408
    %v3188 = vunpack.c.0.s8 %v3187
    %v3189 = vlaneseq
    %v3190 = vshrl.u32 %v3189, 7
    %v3191 = vsub.s32 %v3188, %v3190
    %v3192 = vrot.slane %v3178, %v3191
    %v3193 = vcombine.low %v3128, %v3144
    %v3194 = vcombine.high %v3128, %v3144
    %v3196 = vunpack.c.l.s4 1934713408
    %v3197 = vunpack.c.0.s8 %v3196
    %v3198 = vlaneseq
    %v3199 = vshrl.u32 %v3198, 7
    %v3200 = vsub.s32 %v3197, %v3199
    %v3201 = vrot.slane %v3193, %v3200
    %v3203 = vunpack.c.l.s4 1934713408
    %v3204 = vunpack.c.0.s8 %v3203
    %v3205 = vlaneseq
    %v3206 = vshrl.u32 %v3205, 7
    %v3207 = vsub.s32 %v3204, %v3206
    %v3208 = vrot.slane %v3194, %v3207
    %v3209 = vcombine.low %v3153, %v3185
    %v3210 = vcombine.high %v3153, %v3185
    %v3211 = vcombine.low %v3160, %v3192
    %v3212 = vcombine.high %v3160, %v3192
    %v3213 = vcombine.low %v3169, %v3201
    %v3214 = vcombine.high %v3169, %v3201
    %v3215 = vcombine.low %v3176, %v3208
    %v3216 = vcombine.high %v3176, %v3208
    %v3217 = vcombine.low %v1687, %v1701
    %v3218 = vcombine.high %v1687, %v1701
    %v3220 = vunpack.c.l.s4 1983009808
    %v3221 = vunpack.c.0.s8 %v3220
    %v3222 = vlaneseq
    %v3223 = vshrl.u32 %v3222, 7
    %v3224 = vsub.s32 %v3221, %v3223
    %v3225 = vrot.slane %v3217, %v3224
    %v3227 = vunpack.c.l.s4 1983009808
    %v3228 = vunpack.c.0.s8 %v3227
    %v3229 = vlaneseq
    %v3230 = vshrl.u32 %v3229, 7
    %v3231 = vsub.s32 %v3228, %v3230
    %v3232 = vrot.slane %v3218, %v3231
    %v3233 = vcombine.low %v1694, %v1708
    %v3234 = vcombine.high %v1694, %v1708
    %v3236 = vunpack.c.l.s4 1983009808
    %v3237 = vunpack.c.0.s8 %v3236
    %v3238 = vlaneseq
    %v3239 = vshrl.u32 %v3238, 7
    %v3240 = vsub.s32 %v3237, %v3239
    %v3241 = vrot.slane %v3233, %v3240
    %v3243 = vunpack.c.l.s4 1983009808
    %v3244 = vunpack.c.0.s8 %v3243
    %v3245 = vlaneseq
    %v3246 = vshrl.u32 %v3245, 7
    %v3247 = vsub.s32 %v3244, %v3246
    %v3248 = vrot.slane %v3234, %v3247
    %v3249 = vcombine.low %v1715, %v1729
    %v3250 = vcombine.high %v1715, %v1729
    %v3252 = vunpack.c.l.s4 1983009808
    %v3253 = vunpack.c.0.s8 %v3252
    %v3254 = vlaneseq
    %v3255 = vshrl.u32 %v3254, 7
    %v3256 = vsub.s32 %v3253, %v3255
    %v3257 = vrot.slane %v3249, %v3256
    %v3259 = vunpack.c.l.s4 1983009808
    %v3260 = vunpack.c.0.s8 %v3259
    %v3261 = vlaneseq
    %v3262 = vshrl.u32 %v3261, 7
    %v3263 = vsub.s32 %v3260, %v3262
    %v3264 = vrot.slane %v3250, %v3263
    %v3265 = vcombine.low %v1722, %v1736
    %v3266 = vcombine.high %v1722, %v1736
    %v3268 = vunpack.c.l.s4 1983009808
    %v3269 = vunpack.c.0.s8 %v3268
    %v3270 = vlaneseq
    %v3271 = vshrl.u32 %v3270, 7
    %v3272 = vsub.s32 %v3269, %v3271
    %v3273 = vrot.slane %v3265, %v3272
    %v3275 = vunpack.c.l.s4 1983009808
    %v3276 = vunpack.c.0.s8 %v3275
    %v3277 = vlaneseq
    %v3278 = vshrl.u32 %v3277, 7
    %v3279 = vsub.s32 %v3276, %v3278
    %v3280 = vrot.slane %v3266, %v3279
    %v3281 = vcombine.low %v3225, %v3241
    %v3282 = vcombine.high %v3225, %v3241
    %v3284 = vunpack.c.l.s4 1934713408
    %v3285 = vunpack.c.0.s8 %v3284
    %v3286 = vlaneseq
    %v3287 = vshrl.u32 %v3286, 7
    %v3288 = vsub.s32 %v3285, %v3287
    %v3289 = vrot.slane %v3281, %v3288
    %v3291 = vunpack.c.l.s4 1934713408
    %v3292 = vunpack.c.0.s8 %v3291
    %v3293 = vlaneseq
    %v3294 = vshrl.u32 %v3293, 7
    %v3295 = vsub.s32 %v3292, %v3294
    %v3296 = vrot.slane %v3282, %v3295
    %v3297 = vcombine.low %v3232, %v3248
    %v3298 = vcombine.high %v3232, %v3248
    %v3300 = vunpack.c.l.s4 1934713408
    %v3301 = vunpack.c.0.s8 %v3300
    %v3302 = vlaneseq
    %v3303 = vshrl.u32 %v3302, 7
    %v3304 = vsub.s32 %v3301, %v3303
    %v3305 = vrot.slane %v3297, %v3304
    %v3307 = vunpack.c.l.s4 1934713408
    %v3308 = vunpack.c.0.s8 %v3307
    %v3309 = vlaneseq
    %v3310 = vshrl.u32 %v3309, 7
    %v3311 = vsub.s32 %v3308, %v3310
    %v3312 = vrot.slane %v3298, %v3311
    %v3313 = vcombine.low %v3257, %v3273
    %v3314 = vcombine.high %v3257, %v3273
    %v3316 = vunpack.c.l.s4 1934713408
    %v3317 = vunpack.c.0.s8 %v3316
    %v3318 = vlaneseq
    %v3319 = vshrl.u32 %v3318, 7
    %v3320 = vsub.s32 %v3317, %v3319
    %v3321 = vrot.slane %v3313, %v3320
    %v3323 = vunpack.c.l.s4 1934713408
    %v3324 = vunpack.c.0.s8 %v3323
    %v3325 = vlaneseq
    %v3326 = vshrl.u32 %v3325, 7
    %v3327 = vsub.s32 %v3324, %v3326
    %v3328 = vrot.slane %v3314, %v3327
    %v3329 = vcombine.low %v3264, %v3280
    %v3330 = vcombine.high %v3264, %v3280
    %v3332 = vunpack.c.l.s4 1934713408
    %v3333 = vunpack.c.0.s8 %v3332
    %v3334 = vlaneseq
    %v3335 = vshrl.u32 %v3334, 7
    %v3336 = vsub.s32 %v3333, %v3335
    %v3337 = vrot.slane %v3329, %v3336
    %v3339 = vunpack.c.l.s4 1934713408
    %v3340 = vunpack.c.0.s8 %v3339
    %v3341 = vlaneseq
    %v3342 = vshrl.u32 %v3341, 7
    %v3343 = vsub.s32 %v3340, %v3342
    %v3344 = vrot.slane %v3330, %v3343
    %v3345 = vcombine.low %v3289, %v3321
    %v3346 = vcombine.high %v3289, %v3321
    %v3347 = vcombine.low %v3296, %v3328
    %v3348 = vcombine.high %v3296, %v3328
    %v3349 = vcombine.low %v3305, %v3337
    %v3350 = vcombine.high %v3305, %v3337
    %v3351 = vcombine.low %v3312, %v3344
    %v3352 = vcombine.high %v3312, %v3344
    %v3353 = vcombine.low %v1743, %v1757
    %v3354 = vcombine.high %v1743, %v1757
    %v3356 = vunpack.c.l.s4 1983009808
    %v3357 = vunpack.c.0.s8 %v3356
    %v3358 = vlaneseq
    %v3359 = vshrl.u32 %v3358, 7
    %v3360 = vsub.s32 %v3357, %v3359
    %v3361 = vrot.slane %v3353, %v3360
    %v3363 = vunpack.c.l.s4 1983009808
    %v3364 = vunpack.c.0.s8 %v3363
    %v3365 = vlaneseq
    %v3366 = vshrl.u32 %v3365, 7
    %v3367 = vsub.s32 %v3364, %v3366
    %v3368 = vrot.slane %v3354, %v3367
    %v3369 = vcombine.low %v1750, %v1764
    %v3370 = vcombine.high %v1750, %v1764
    %v3372 = vunpack.c.l.s4 1983009808
    %v3373 = vunpack.c.0.s8 %v3372
    %v3374 = vlaneseq
    %v3375 = vshrl.u32 %v3374, 7
    %v3376 = vsub.s32 %v3373, %v3375
    %v3377 = vrot.slane %v3369, %v3376
    %v3379 = vunpack.c.l.s4 1983009808
    %v3380 = vunpack.c.0.s8 %v3379
    %v3381 = vlaneseq
    %v3382 = vshrl.u32 %v3381, 7
    %v3383 = vsub.s32 %v3380, %v3382
    %v3384 = vrot.slane %v3370, %v3383
    %v3385 = vcombine.low %v1771, %v1785
    %v3386 = vcombine.high %v1771, %v1785
    %v3388 = vunpack.c.l.s4 1983009808
    %v3389 = vunpack.c.0.s8 %v3388
    %v3390 = vlaneseq
    %v3391 = vshrl.u32 %v3390, 7
    %v3392 = vsub.s32 %v3389, %v3391
    %v3393 = vrot.slane %v3385, %v3392
    %v3395 = vunpack.c.l.s4 1983009808
    %v3396 = vunpack.c.0.s8 %v3395
    %v3397 = vlaneseq
    %v3398 = vshrl.u32 %v3397, 7
    %v3399 = vsub.s32 %v3396, %v3398
    %v3400 = vrot.slane %v3386, %v3399
    %v3401 = vcombine.low %v1778, %v1792
    %v3402 = vcombine.high %v1778, %v1792
    %v3404 = vunpack.c.l.s4 1983009808
    %v3405 = vunpack.c.0.s8 %v3404
    %v3406 = vlaneseq
    %v3407 = vshrl.u32 %v3406, 7
    %v3408 = vsub.s32 %v3405, %v3407
    %v3409 = vrot.slane %v3401, %v3408
    %v3411 = vunpack.c.l.s4 1983009808
    %v3412 = vunpack.c.0.s8 %v3411
    %v3413 = vlaneseq
    %v3414 = vshrl.u32 %v3413, 7
    %v3415 = vsub.s32 %v3412, %v3414
    %v3416 = vrot.slane %v3402, %v3415
    %v3417 = vcombine.low %v3361, %v3377
    %v3418 = vcombine.high %v3361, %v3377
    %v3420 = vunpack.c.l.s4 1934713408
    %v3421 = vunpack.c.0.s8 %v3420
    %v3422 = vlaneseq
    %v3423 = vshrl.u32 %v3422, 7
    %v3424 = vsub.s32 %v3421, %v3423
    %v3425 = vrot.slane %v3417, %v3424
    %v3427 = vunpack.c.l.s4 1934713408
    %v3428 = vunpack.c.0.s8 %v3427
    %v3429 = vlaneseq
    %v3430 = vshrl.u32 %v3429, 7
    %v3431 = vsub.s32 %v3428, %v3430
    %v3432 = vrot.slane %v3418, %v3431
    %v3433 = vcombine.low %v3368, %v3384
    %v3434 = vcombine.high %v3368, %v3384
    %v3436 = vunpack.c.l.s4 1934713408
    %v3437 = vunpack.c.0.s8 %v3436
    %v3438 = vlaneseq
    %v3439 = vshrl.u32 %v3438, 7
    %v3440 = vsub.s32 %v3437, %v3439
    %v3441 = vrot.slane %v3433, %v3440
    %v3443 = vunpack.c.l.s4 1934713408
    %v3444 = vunpack.c.0.s8 %v3443
    %v3445 = vlaneseq
    %v3446 = vshrl.u32 %v3445, 7
    %v3447 = vsub.s32 %v3444, %v3446
    %v3448 = vrot.slane %v3434, %v3447
    %v3449 = vcombine.low %v3393, %v3409
    %v3450 = vcombine.high %v3393, %v3409
    %v3452 = vunpack.c.l.s4 1934713408
    %v3453 = vunpack.c.0.s8 %v3452
    %v3454 = vlaneseq
    %v3455 = vshrl.u32 %v3454, 7
    %v3456 = vsub.s32 %v3453, %v3455
    %v3457 = vrot.slane %v3449, %v3456
    %v3459 = vunpack.c.l.s4 1934713408
    %v3460 = vunpack.c.0.s8 %v3459
    %v3461 = vlaneseq
    %v3462 = vshrl.u32 %v3461, 7
    %v3463 = vsub.s32 %v3460, %v3462
    %v3464 = vrot.slane %v3450, %v3463
    %v3465 = vcombine.low %v3400, %v3416
    %v3466 = vcombine.high %v3400, %v3416
    %v3468 = vunpack.c.l.s4 1934713408
    %v3469 = vunpack.c.0.s8 %v3468
    %v3470 = vlaneseq
    %v3471 = vshrl.u32 %v3470, 7
    %v3472 = vsub.s32 %v3469, %v3471
    %v3473 = vrot.slane %v3465, %v3472
    %v3475 = vunpack.c.l.s4 1934713408
    %v3476 = vunpack.c.0.s8 %v3475
    %v3477 = vlaneseq
    %v3478 = vshrl.u32 %v3477, 7
    %v3479 = vsub.s32 %v3476, %v3478
    %v3480 = vrot.slane %v3466, %v3479
    %v3481 = vcombine.low %v3425, %v3457
    %v3482 = vcombine.high %v3425, %v3457
    %v3483 = vcombine.low %v3432, %v3464
    %v3484 = vcombine.high %v3432, %v3464
    %v3485 = vcombine.low %v3441, %v3473
    %v3486 = vcombine.high %v3441, %v3473
    %v3487 = vcombine.low %v3448, %v3480
    %v3488 = vcombine.high %v3448, %v3480
    %v3489 = vcombine.low %v1799, %v1813
    %v3490 = vcombine.high %v1799, %v1813
    %v3492 = vunpack.c.l.s4 1983009808
    %v3493 = vunpack.c.0.s8 %v3492
    %v3494 = vlaneseq
    %v3495 = vshrl.u32 %v3494, 7
    %v3496 = vsub.s32 %v3493, %v3495
    %v3497 = vrot.slane %v3489, %v3496
    %v3499 = vunpack.c.l.s4 1983009808
    %v3500 = vunpack.c.0.s8 %v3499
    %v3501 = vlaneseq
    %v3502 = vshrl.u32 %v3501, 7
    %v3503 = vsub.s32 %v3500, %v3502
    %v3504 = vrot.slane %v3490, %v3503
    %v3505 = vcombine.low %v1806, %v1820
    %v3506 = vcombine.high %v1806, %v1820
    %v3508 = vunpack.c.l.s4 1983009808
    %v3509 = vunpack.c.0.s8 %v3508
    %v3510 = vlaneseq
    %v3511 = vshrl.u32 %v3510, 7
    %v3512 = vsub.s32 %v3509, %v3511
    %v3513 = vrot.slane %v3505, %v3512
    %v3515 = vunpack.c.l.s4 1983009808
    %v3516 = vunpack.c.0.s8 %v3515
    %v3517 = vlaneseq
    %v3518 = vshrl.u32 %v3517, 7
    %v3519 = vsub.s32 %v3516, %v3518
    %v3520 = vrot.slane %v3506, %v3519
    %v3521 = vcombine.low %v1827, %v1841
    %v3522 = vcombine.high %v1827, %v1841
    %v3524 = vunpack.c.l.s4 1983009808
    %v3525 = vunpack.c.0.s8 %v3524
    %v3526 = vlaneseq
    %v3527 = vshrl.u32 %v3526, 7
    %v3528 = vsub.s32 %v3525, %v3527
    %v3529 = vrot.slane %v3521, %v3528
    %v3531 = vunpack.c.l.s4 1983009808
    %v3532 = vunpack.c.0.s8 %v3531
    %v3533 = vlaneseq
    %v3534 = vshrl.u32 %v3533, 7
    %v3535 = vsub.s32 %v3532, %v3534
    %v3536 = vrot.slane %v3522, %v3535
    %v3537 = vcombine.low %v1834, %v1848
    %v3538 = vcombine.high %v1834, %v1848
    %v3540 = vunpack.c.l.s4 1983009808
    %v3541 = vunpack.c.0.s8 %v3540
    %v3542 = vlaneseq
    %v3543 = vshrl.u32 %v3542, 7
    %v3544 = vsub.s32 %v3541, %v3543
    %v3545 = vrot.slane %v3537, %v3544
    %v3547 = vunpack.c.l.s4 1983009808
    %v3548 = vunpack.c.0.s8 %v3547
    %v3549 = vlaneseq
    %v3550 = vshrl.u32 %v3549, 7
    %v3551 = vsub.s32 %v3548, %v3550
    %v3552 = vrot.slane %v3538, %v3551
    %v3553 = vcombine.low %v3497, %v3513
    %v3554 = vcombine.high %v3497, %v3513
    %v3556 = vunpack.c.l.s4 1934713408
    %v3557 = vunpack.c.0.s8 %v3556
    %v3558 = vlaneseq
    %v3559 = vshrl.u32 %v3558, 7
    %v3560 = vsub.s32 %v3557, %v3559
    %v3561 = vrot.slane %v3553, %v3560
    %v3563 = vunpack.c.l.s4 1934713408
    %v3564 = vunpack.c.0.s8 %v3563
    %v3565 = vlaneseq
    %v3566 = vshrl.u32 %v3565, 7
    %v3567 = vsub.s32 %v3564, %v3566
    %v3568 = vrot.slane %v3554, %v3567
    %v3569 = vcombine.low %v3504, %v3520
    %v3570 = vcombine.high %v3504, %v3520
    %v3572 = vunpack.c.l.s4 1934713408
    %v3573 = vunpack.c.0.s8 %v3572
    %v3574 = vlaneseq
    %v3575 = vshrl.u32 %v3574, 7
    %v3576 = vsub.s32 %v3573, %v3575
    %v3577 = vrot.slane %v3569, %v3576
    %v3579 = vunpack.c.l.s4 1934713408
    %v3580 = vunpack.c.0.s8 %v3579
    %v3581 = vlaneseq
    %v3582 = vshrl.u32 %v3581, 7
    %v3583 = vsub.s32 %v3580, %v3582
    %v3584 = vrot.slane %v3570, %v3583
    %v3585 = vcombine.low %v3529, %v3545
    %v3586 = vcombine.high %v3529, %v3545
    %v3588 = vunpack.c.l.s4 1934713408
    %v3589 = vunpack.c.0.s8 %v3588
    %v3590 = vlaneseq
    %v3591 = vshrl.u32 %v3590, 7
    %v3592 = vsub.s32 %v3589, %v3591
    %v3593 = vrot.slane %v3585, %v3592
    %v3595 = vunpack.c.l.s4 1934713408
    %v3596 = vunpack.c.0.s8 %v3595
    %v3597 = vlaneseq
    %v3598 = vshrl.u32 %v3597, 7
    %v3599 = vsub.s32 %v3596, %v3598
    %v3600 = vrot.slane %v3586, %v3599
    %v3601 = vcombine.low %v3536, %v3552
    %v3602 = vcombine.high %v3536, %v3552
    %v3604 = vunpack.c.l.s4 1934713408
    %v3605 = vunpack.c.0.s8 %v3604
    %v3606 = vlaneseq
    %v3607 = vshrl.u32 %v3606, 7
    %v3608 = vsub.s32 %v3605, %v3607
    %v3609 = vrot.slane %v3601, %v3608
    %v3611 = vunpack.c.l.s4 1934713408
    %v3612 = vunpack.c.0.s8 %v3611
    %v3613 = vlaneseq
    %v3614 = vshrl.u32 %v3613, 7
    %v3615 = vsub.s32 %v3612, %v3614
    %v3616 = vrot.slane %v3602, %v3615
    %v3617 = vcombine.low %v3561, %v3593
    %v3618 = vcombine.high %v3561, %v3593
    %v3619 = vcombine.low %v3568, %v3600
    %v3620 = vcombine.high %v3568, %v3600
    %v3621 = vcombine.low %v3577, %v3609
    %v3622 = vcombine.high %v3577, %v3609
    %v3623 = vcombine.low %v3584, %v3616
    %v3624 = vcombine.high %v3584, %v3616
    %v3625 = vcombine.low %v1855, %v1869
    %v3626 = vcombine.high %v1855, %v1869
    %v3628 = vunpack.c.l.s4 1983009808
    %v3629 = vunpack.c.0.s8 %v3628
    %v3630 = vlaneseq
    %v3631 = vshrl.u32 %v3630, 7
    %v3632 = vsub.s32 %v3629, %v3631
    %v3633 = vrot.slane %v3625, %v3632
    %v3635 = vunpack.c.l.s4 1983009808
    %v3636 = vunpack.c.0.s8 %v3635
    %v3637 = vlaneseq
    %v3638 = vshrl.u32 %v3637, 7
    %v3639 = vsub.s32 %v3636, %v3638
    %v3640 = vrot.slane %v3626, %v3639
    %v3641 = vcombine.low %v1862, %v1876
    %v3642 = vcombine.high %v1862, %v1876
    %v3644 = vunpack.c.l.s4 1983009808
    %v3645 = vunpack.c.0.s8 %v3644
    %v3646 = vlaneseq
    %v3647 = vshrl.u32 %v3646, 7
    %v3648 = vsub.s32 %v3645, %v3647
    %v3649 = vrot.slane %v3641, %v3648
    %v3651 = vunpack.c.l.s4 1983009808
    %v3652 = vunpack.c.0.s8 %v3651
    %v3653 = vlaneseq
    %v3654 = vshrl.u32 %v3653, 7
    %v3655 = vsub.s32 %v3652, %v3654
    %v3656 = vrot.slane %v3642, %v3655
    %v3657 = vcombine.low %v1883, %v1897
    %v3658 = vcombine.high %v1883, %v1897
    %v3660 = vunpack.c.l.s4 1983009808
    %v3661 = vunpack.c.0.s8 %v3660
    %v3662 = vlaneseq
    %v3663 = vshrl.u32 %v3662, 7
    %v3664 = vsub.s32 %v3661, %v3663
    %v3665 = vrot.slane %v3657, %v3664
    %v3667 = vunpack.c.l.s4 1983009808
    %v3668 = vunpack.c.0.s8 %v3667
    %v3669 = vlaneseq
    %v3670 = vshrl.u32 %v3669, 7
    %v3671 = vsub.s32 %v3668, %v3670
    %v3672 = vrot.slane %v3658, %v3671
    %v3673 = vcombine.low %v1890, %v1904
    %v3674 = vcombine.high %v1890, %v1904
    %v3676 = vunpack.c.l.s4 1983009808
    %v3677 = vunpack.c.0.s8 %v3676
    %v3678 = vlaneseq
    %v3679 = vshrl.u32 %v3678, 7
    %v3680 = vsub.s32 %v3677, %v3679
    %v3681 = vrot.slane %v3673, %v3680
    %v3683 = vunpack.c.l.s4 1983009808
    %v3684 = vunpack.c.0.s8 %v3683
    %v3685 = vlaneseq
    %v3686 = vshrl.u32 %v3685, 7
    %v3687 = vsub.s32 %v3684, %v3686
    %v3688 = vrot.slane %v3674, %v3687
    %v3689 = vcombine.low %v3633, %v3649
    %v3690 = vcombine.high %v3633, %v3649
    %v3692 = vunpack.c.l.s4 1934713408
    %v3693 = vunpack.c.0.s8 %v3692
    %v3694 = vlaneseq
    %v3695 = vshrl.u32 %v3694, 7
    %v3696 = vsub.s32 %v3693, %v3695
    %v3697 = vrot.slane %v3689, %v3696
    %v3699 = vunpack.c.l.s4 1934713408
    %v3700 = vunpack.c.0.s8 %v3699
    %v3701 = vlaneseq
    %v3702 = vshrl.u32 %v3701, 7
    %v3703 = vsub.s32 %v3700, %v3702
    %v3704 = vrot.slane %v3690, %v3703
    %v3705 = vcombine.low %v3640, %v3656
    %v3706 = vcombine.high %v3640, %v3656
    %v3708 = vunpack.c.l.s4 1934713408
    %v3709 = vunpack.c.0.s8 %v3708
    %v3710 = vlaneseq
    %v3711 = vshrl.u32 %v3710, 7
    %v3712 = vsub.s32 %v3709, %v3711
    %v3713 = vrot.slane %v3705, %v3712
    %v3715 = vunpack.c.l.s4 1934713408
    %v3716 = vunpack.c.0.s8 %v3715
    %v3717 = vlaneseq
    %v3718 = vshrl.u32 %v3717, 7
    %v3719 = vsub.s32 %v3716, %v3718
    %v3720 = vrot.slane %v3706, %v3719
    %v3721 = vcombine.low %v3665, %v3681
    %v3722 = vcombine.high %v3665, %v3681
    %v3724 = vunpack.c.l.s4 1934713408
    %v3725 = vunpack.c.0.s8 %v3724
    %v3726 = vlaneseq
    %v3727 = vshrl.u32 %v3726, 7
    %v3728 = vsub.s32 %v3725, %v3727
    %v3729 = vrot.slane %v3721, %v3728
    %v3731 = vunpack.c.l.s4 1934713408
    %v3732 = vunpack.c.0.s8 %v3731
    %v3733 = vlaneseq
    %v3734 = vshrl.u32 %v3733, 7
    %v3735 = vsub.s32 %v3732, %v3734
    %v3736 = vrot.slane %v3722, %v3735
    %v3737 = vcombine.low %v3672, %v3688
    %v3738 = vcombine.high %v3672, %v3688
    %v3740 = vunpack.c.l.s4 1934713408
    %v3741 = vunpack.c.0.s8 %v3740
    %v3742 = vlaneseq
    %v3743 = vshrl.u32 %v3742, 7
    %v3744 = vsub.s32 %v3741, %v3743
    %v3745 = vrot.slane %v3737, %v3744
    %v3747 = vunpack.c.l.s4 1934713408
    %v3748 = vunpack.c.0.s8 %v3747
    %v3749 = vlaneseq
    %v3750 = vshrl.u32 %v3749, 7
    %v3751 = vsub.s32 %v3748, %v3750
    %v3752 = vrot.slane %v3738, %v3751
    %v3753 = vcombine.low %v3697, %v3729
    %v3754 = vcombine.high %v3697, %v3729
    %v3755 = vcombine.low %v3704, %v3736
    %v3756 = vcombine.high %v3704, %v3736
    %v3757 = vcombine.low %v3713, %v3745
    %v3758 = vcombine.high %v3713, %v3745
    %v3759 = vcombine.low %v3720, %v3752
    %v3760 = vcombine.high %v3720, %v3752
    %v3761 = vcombine.low %v1911, %v1925
    %v3762 = vcombine.high %v1911, %v1925
    %v3764 = vunpack.c.l.s4 1983009808
    %v3765 = vunpack.c.0.s8 %v3764
    %v3766 = vlaneseq
    %v3767 = vshrl.u32 %v3766, 7
    %v3768 = vsub.s32 %v3765, %v3767
    %v3769 = vrot.slane %v3761, %v3768
    %v3771 = vunpack.c.l.s4 1983009808
    %v3772 = vunpack.c.0.s8 %v3771
    %v3773 = vlaneseq
    %v3774 = vshrl.u32 %v3773, 7
    %v3775 = vsub.s32 %v3772, %v3774
    %v3776 = vrot.slane %v3762, %v3775
    %v3777 = vcombine.low %v1918, %v1932
    %v3778 = vcombine.high %v1918, %v1932
    %v3780 = vunpack.c.l.s4 1983009808
    %v3781 = vunpack.c.0.s8 %v3780
    %v3782 = vlaneseq
    %v3783 = vshrl.u32 %v3782, 7
    %v3784 = vsub.s32 %v3781, %v3783
    %v3785 = vrot.slane %v3777, %v3784
    %v3787 = vunpack.c.l.s4 1983009808
    %v3788 = vunpack.c.0.s8 %v3787
    %v3789 = vlaneseq
    %v3790 = vshrl.u32 %v3789, 7
    %v3791 = vsub.s32 %v3788, %v3790
    %v3792 = vrot.slane %v3778, %v3791
    %v3793 = vcombine.low %v1939, %v1953
    %v3794 = vcombine.high %v1939, %v1953
    %v3796 = vunpack.c.l.s4 1983009808
    %v3797 = vunpack.c.0.s8 %v3796
    %v3798 = vlaneseq
    %v3799 = vshrl.u32 %v3798, 7
    %v3800 = vsub.s32 %v3797, %v3799
    %v3801 = vrot.slane %v3793, %v3800
    %v3803 = vunpack.c.l.s4 1983009808
    %v3804 = vunpack.c.0.s8 %v3803
    %v3805 = vlaneseq
    %v3806 = vshrl.u32 %v3805, 7
    %v3807 = vsub.s32 %v3804, %v3806
    %v3808 = vrot.slane %v3794, %v3807
    %v3809 = vcombine.low %v1946, %v1960
    %v3810 = vcombine.high %v1946, %v1960
    %v3812 = vunpack.c.l.s4 1983009808
    %v3813 = vunpack.c.0.s8 %v3812
    %v3814 = vlaneseq
    %v3815 = vshrl.u32 %v3814, 7
    %v3816 = vsub.s32 %v3813, %v3815
    %v3817 = vrot.slane %v3809, %v3816
    %v3819 = vunpack.c.l.s4 1983009808
    %v3820 = vunpack.c.0.s8 %v3819
    %v3821 = vlaneseq
    %v3822 = vshrl.u32 %v3821, 7
    %v3823 = vsub.s32 %v3820, %v3822
    %v3824 = vrot.slane %v3810, %v3823
    %v3825 = vcombine.low %v3769, %v3785
    %v3826 = vcombine.high %v3769, %v3785
    %v3828 = vunpack.c.l.s4 1934713408
    %v3829 = vunpack.c.0.s8 %v3828
    %v3830 = vlaneseq
    %v3831 = vshrl.u32 %v3830, 7
    %v3832 = vsub.s32 %v3829, %v3831
    %v3833 = vrot.slane %v3825, %v3832
    %v3835 = vunpack.c.l.s4 1934713408
    %v3836 = vunpack.c.0.s8 %v3835
    %v3837 = vlaneseq
    %v3838 = vshrl.u32 %v3837, 7
    %v3839 = vsub.s32 %v3836, %v3838
    %v3840 = vrot.slane %v3826, %v3839
    %v3841 = vcombine.low %v3776, %v3792
    %v3842 = vcombine.high %v3776, %v3792
    %v3844 = vunpack.c.l.s4 1934713408
    %v3845 = vunpack.c.0.s8 %v3844
    %v3846 = vlaneseq
    %v3847 = vshrl.u32 %v3846, 7
    %v3848 = vsub.s32 %v3845, %v3847
    %v3849 = vrot.slane %v3841, %v3848
    %v3851 = vunpack.c.l.s4 1934713408
    %v3852 = vunpack.c.0.s8 %v3851
    %v3853 = vlaneseq
    %v3854 = vshrl.u32 %v3853, 7
    %v3855 = vsub.s32 %v3852, %v3854
    %v3856 = vrot.slane %v3842, %v3855
    %v3857 = vcombine.low %v3801, %v3817
    %v3858 = vcombine.high %v3801, %v3817
    %v3860 = vunpack.c.l.s4 1934713408
    %v3861 = vunpack.c.0.s8 %v3860
    %v3862 = vlaneseq
    %v3863 = vshrl.u32 %v3862, 7
    %v3864 = vsub.s32 %v3861, %v3863
    %v3865 = vrot.slane %v3857, %v3864
    %v3867 = vunpack.c.l.s4 1934713408
    %v3868 = vunpack.c.0.s8 %v3867
    %v3869 = vlaneseq
    %v3870 = vshrl.u32 %v3869, 7
    %v3871 = vsub.s32 %v3868, %v3870
    %v3872 = vrot.slane %v3858, %v3871
    %v3873 = vcombine.low %v3808, %v3824
    %v3874 = vcombine.high %v3808, %v3824
    %v3876 = vunpack.c.l.s4 1934713408
    %v3877 = vunpack.c.0.s8 %v3876
    %v3878 = vlaneseq
    %v3879 = vshrl.u32 %v3878, 7
    %v3880 = vsub.s32 %v3877, %v3879
    %v3881 = vrot.slane %v3873, %v3880
    %v3883 = vunpack.c.l.s4 1934713408
    %v3884 = vunpack.c.0.s8 %v3883
    %v3885 = vlaneseq
    %v3886 = vshrl.u32 %v3885, 7
    %v3887 = vsub.s32 %v3884, %v3886
    %v3888 = vrot.slane %v3874, %v3887
    %v3889 = vcombine.low %v3833, %v3865
    %v3890 = vcombine.high %v3833, %v3865
    %v3891 = vcombine.low %v3840, %v3872
    %v3892 = vcombine.high %v3840, %v3872
    %v3893 = vcombine.low %v3849, %v3881
    %v3894 = vcombine.high %v3849, %v3881
    %v3895 = vcombine.low %v3856, %v3888
    %v3896 = vcombine.high %v3856, %v3888
    %v3897 = vcombine.low %v1967, %v1981
    %v3898 = vcombine.high %v1967, %v1981
    %v3900 = vunpack.c.l.s4 1983009808
    %v3901 = vunpack.c.0.s8 %v3900
    %v3902 = vlaneseq
    %v3903 = vshrl.u32 %v3902, 7
    %v3904 = vsub.s32 %v3901, %v3903
    %v3905 = vrot.slane %v3897, %v3904
    %v3907 = vunpack.c.l.s4 1983009808
    %v3908 = vunpack.c.0.s8 %v3907
    %v3909 = vlaneseq
    %v3910 = vshrl.u32 %v3909, 7
    %v3911 = vsub.s32 %v3908, %v3910
    %v3912 = vrot.slane %v3898, %v3911
    %v3913 = vcombine.low %v1974, %v1988
    %v3914 = vcombine.high %v1974, %v1988
    %v3916 = vunpack.c.l.s4 1983009808
    %v3917 = vunpack.c.0.s8 %v3916
    %v3918 = vlaneseq
    %v3919 = vshrl.u32 %v3918, 7
    %v3920 = vsub.s32 %v3917, %v3919
    %v3921 = vrot.slane %v3913, %v3920
    %v3923 = vunpack.c.l.s4 1983009808
    %v3924 = vunpack.c.0.s8 %v3923
    %v3925 = vlaneseq
    %v3926 = vshrl.u32 %v3925, 7
    %v3927 = vsub.s32 %v3924, %v3926
    %v3928 = vrot.slane %v3914, %v3927
    %v3929 = vcombine.low %v1995, %v2009
    %v3930 = vcombine.high %v1995, %v2009
    %v3932 = vunpack.c.l.s4 1983009808
    %v3933 = vunpack.c.0.s8 %v3932
    %v3934 = vlaneseq
    %v3935 = vshrl.u32 %v3934, 7
    %v3936 = vsub.s32 %v3933, %v3935
    %v3937 = vrot.slane %v3929, %v3936
    %v3939 = vunpack.c.l.s4 1983009808
    %v3940 = vunpack.c.0.s8 %v3939
    %v3941 = vlaneseq
    %v3942 = vshrl.u32 %v3941, 7
    %v3943 = vsub.s32 %v3940, %v3942
    %v3944 = vrot.slane %v3930, %v3943
    %v3945 = vcombine.low %v2002, %v2016
    %v3946 = vcombine.high %v2002, %v2016
    %v3948 = vunpack.c.l.s4 1983009808
    %v3949 = vunpack.c.0.s8 %v3948
    %v3950 = vlaneseq
    %v3951 = vshrl.u32 %v3950, 7
    %v3952 = vsub.s32 %v3949, %v3951
    %v3953 = vrot.slane %v3945, %v3952
    %v3955 = vunpack.c.l.s4 1983009808
    %v3956 = vunpack.c.0.s8 %v3955
    %v3957 = vlaneseq
    %v3958 = vshrl.u32 %v3957, 7
    %v3959 = vsub.s32 %v3956, %v3958
    %v3960 = vrot.slane %v3946, %v3959
    %v3961 = vcombine.low %v3905, %v3921
    %v3962 = vcombine.high %v3905, %v3921
    %v3964 = vunpack.c.l.s4 1934713408
    %v3965 = vunpack.c.0.s8 %v3964
    %v3966 = vlaneseq
    %v3967 = vshrl.u32 %v3966, 7
    %v3968 = vsub.s32 %v3965, %v3967
    %v3969 = vrot.slane %v3961, %v3968
    %v3971 = vunpack.c.l.s4 1934713408
    %v3972 = vunpack.c.0.s8 %v3971
    %v3973 = vlaneseq
    %v3974 = vshrl.u32 %v3973, 7
    %v3975 = vsub.s32 %v3972, %v3974
    %v3976 = vrot.slane %v3962, %v3975
    %v3977 = vcombine.low %v3912, %v3928
    %v3978 = vcombine.high %v3912, %v3928
    %v3980 = vunpack.c.l.s4 1934713408
    %v3981 = vunpack.c.0.s8 %v3980
    %v3982 = vlaneseq
    %v3983 = vshrl.u32 %v3982, 7
    %v3984 = vsub.s32 %v3981, %v3983
    %v3985 = vrot.slane %v3977, %v3984
    %v3987 = vunpack.c.l.s4 1934713408
    %v3988 = vunpack.c.0.s8 %v3987
    %v3989 = vlaneseq
    %v3990 = vshrl.u32 %v3989, 7
    %v3991 = vsub.s32 %v3988, %v3990
    %v3992 = vrot.slane %v3978, %v3991
    %v3993 = vcombine.low %v3937, %v3953
    %v3994 = vcombine.high %v3937, %v3953
    %v3996 = vunpack.c.l.s4 1934713408
    %v3997 = vunpack.c.0.s8 %v3996
    %v3998 = vlaneseq
    %v3999 = vshrl.u32 %v3998, 7
    %v4000 = vsub.s32 %v3997, %v3999
    %v4001 = vrot.slane %v3993, %v4000
    %v4003 = vunpack.c.l.s4 1934713408
    %v4004 = vunpack.c.0.s8 %v4003
    %v4005 = vlaneseq
    %v4006 = vshrl.u32 %v4005, 7
    %v4007 = vsub.s32 %v4004, %v4006
    %v4008 = vrot.slane %v3994, %v4007
    %v4009 = vcombine.low %v3944, %v3960
    %v4010 = vcombine.high %v3944, %v3960
    %v4012 = vunpack.c.l.s4 1934713408
    %v4013 = vunpack.c.0.s8 %v4012
    %v4014 = vlaneseq
    %v4015 = vshrl.u32 %v4014, 7
    %v4016 = vsub.s32 %v4013, %v4015
    %v4017 = vrot.slane %v4009, %v4016
    %v4019 = vunpack.c.l.s4 1934713408
    %v4020 = vunpack.c.0.s8 %v4019
    %v4021 = vlaneseq
    %v4022 = vshrl.u32 %v4021, 7
    %v4023 = vsub.s32 %v4020, %v4022
    %v4024 = vrot.slane %v4010, %v4023
    %v4025 = vcombine.low %v3969, %v4001
    %v4026 = vcombine.high %v3969, %v4001
    %v4027 = vcombine.low %v3976, %v4008
    %v4028 = vcombine.high %v3976, %v4008
    %v4029 = vcombine.low %v3985, %v4017
    %v4030 = vcombine.high %v3985, %v4017
    %v4031 = vcombine.low %v3992, %v4024
    %v4032 = vcombine.high %v3992, %v4024
    %v4033 = vcombine.low %v2023, %v2037
    %v4034 = vcombine.high %v2023, %v2037
    %v4036 = vunpack.c.l.s4 1983009808
    %v4037 = vunpack.c.0.s8 %v4036
    %v4038 = vlaneseq
    %v4039 = vshrl.u32 %v4038, 7
    %v4040 = vsub.s32 %v4037, %v4039
    %v4041 = vrot.slane %v4033, %v4040
    %v4043 = vunpack.c.l.s4 1983009808
    %v4044 = vunpack.c.0.s8 %v4043
    %v4045 = vlaneseq
    %v4046 = vshrl.u32 %v4045, 7
    %v4047 = vsub.s32 %v4044, %v4046
    %v4048 = vrot.slane %v4034, %v4047
    %v4049 = vcombine.low %v2030, %v2044
    %v4050 = vcombine.high %v2030, %v2044
    %v4052 = vunpack.c.l.s4 1983009808
    %v4053 = vunpack.c.0.s8 %v4052
    %v4054 = vlaneseq
    %v4055 = vshrl.u32 %v4054, 7
    %v4056 = vsub.s32 %v4053, %v4055
    %v4057 = vrot.slane %v4049, %v4056
    %v4059 = vunpack.c.l.s4 1983009808
    %v4060 = vunpack.c.0.s8 %v4059
    %v4061 = vlaneseq
    %v4062 = vshrl.u32 %v4061, 7
    %v4063 = vsub.s32 %v4060, %v4062
    %v4064 = vrot.slane %v4050, %v4063
    %v4065 = vcombine.low %v2051, %v2065
    %v4066 = vcombine.high %v2051, %v2065
    %v4068 = vunpack.c.l.s4 1983009808
    %v4069 = vunpack.c.0.s8 %v4068
    %v4070 = vlaneseq
    %v4071 = vshrl.u32 %v4070, 7
    %v4072 = vsub.s32 %v4069, %v4071
    %v4073 = vrot.slane %v4065, %v4072
    %v4075 = vunpack.c.l.s4 1983009808
    %v4076 = vunpack.c.0.s8 %v4075
    %v4077 = vlaneseq
    %v4078 = vshrl.u32 %v4077, 7
    %v4079 = vsub.s32 %v4076, %v4078
    %v4080 = vrot.slane %v4066, %v4079
    %v4081 = vcombine.low %v2058, %v2072
    %v4082 = vcombine.high %v2058, %v2072
    %v4084 = vunpack.c.l.s4 1983009808
    %v4085 = vunpack.c.0.s8 %v4084
    %v4086 = vlaneseq
    %v4087 = vshrl.u32 %v4086, 7
    %v4088 = vsub.s32 %v4085, %v4087
    %v4089 = vrot.slane %v4081, %v4088
    %v4091 = vunpack.c.l.s4 1983009808
    %v4092 = vunpack.c.0.s8 %v4091
    %v4093 = vlaneseq
    %v4094 = vshrl.u32 %v4093, 7
    %v4095 = vsub.s32 %v4092, %v4094
    %v4096 = vrot.slane %v4082, %v4095
    %v4097 = vcombine.low %v4041, %v4057
    %v4098 = vcombine.high %v4041, %v4057
    %v4100 = vunpack.c.l.s4 1934713408
    %v4101 = vunpack.c.0.s8 %v4100
    %v4102 = vlaneseq
    %v4103 = vshrl.u32 %v4102, 7
    %v4104 = vsub.s32 %v4101, %v4103
    %v4105 = vrot.slane %v4097, %v4104
    %v4107 = vunpack.c.l.s4 1934713408
    %v4108 = vunpack.c.0.s8 %v4107
    %v4109 = vlaneseq
    %v4110 = vshrl.u32 %v4109, 7
    %v4111 = vsub.s32 %v4108, %v4110
    %v4112 = vrot.slane %v4098, %v4111
    %v4113 = vcombine.low %v4048, %v4064
    %v4114 = vcombine.high %v4048, %v4064
    %v4116 = vunpack.c.l.s4 1934713408
    %v4117 = vunpack.c.0.s8 %v4116
    %v4118 = vlaneseq
    %v4119 = vshrl.u32 %v4118, 7
    %v4120 = vsub.s32 %v4117, %v4119
    %v4121 = vrot.slane %v4113, %v4120
    %v4123 = vunpack.c.l.s4 1934713408
    %v4124 = vunpack.c.0.s8 %v4123
    %v4125 = vlaneseq
    %v4126 = vshrl.u32 %v4125, 7
    %v4127 = vsub.s32 %v4124, %v4126
    %v4128 = vrot.slane %v4114, %v4127
    %v4129 = vcombine.low %v4073, %v4089
    %v4130 = vcombine.high %v4073, %v4089
    %v4132 = vunpack.c.l.s4 1934713408
    %v4133 = vunpack.c.0.s8 %v4132
    %v4134 = vlaneseq
    %v4135 = vshrl.u32 %v4134, 7
    %v4136 = vsub.s32 %v4133, %v4135
    %v4137 = vrot.slane %v4129, %v4136
    %v4139 = vunpack.c.l.s4 1934713408
    %v4140 = vunpack.c.0.s8 %v4139
    %v4141 = vlaneseq
    %v4142 = vshrl.u32 %v4141, 7
    %v4143 = vsub.s32 %v4140, %v4142
    %v4144 = vrot.slane %v4130, %v4143
    %v4145 = vcombine.low %v4080, %v4096
    %v4146 = vcombine.high %v4080, %v4096
    %v4148 = vunpack.c.l.s4 1934713408
    %v4149 = vunpack.c.0.s8 %v4148
    %v4150 = vlaneseq
    %v4151 = vshrl.u32 %v4150, 7
    %v4152 = vsub.s32 %v4149, %v4151
    %v4153 = vrot.slane %v4145, %v4152
    %v4155 = vunpack.c.l.s4 1934713408
    %v4156 = vunpack.c.0.s8 %v4155
    %v4157 = vlaneseq
    %v4158 = vshrl.u32 %v4157, 7
    %v4159 = vsub.s32 %v4156, %v4158
    %v4160 = vrot.slane %v4146, %v4159
    %v4161 = vcombine.low %v4105, %v4137
    %v4162 = vcombine.high %v4105, %v4137
    %v4163 = vcombine.low %v4112, %v4144
    %v4164 = vcombine.high %v4112, %v4144
    %v4165 = vcombine.low %v4121, %v4153
    %v4166 = vcombine.high %v4121, %v4153
    %v4167 = vcombine.low %v4128, %v4160
    %v4168 = vcombine.high %v4128, %v4160
    %v4169 = vcombine.low %v2079, %v2093
    %v4170 = vcombine.high %v2079, %v2093
    %v4172 = vunpack.c.l.s4 1983009808
    %v4173 = vunpack.c.0.s8 %v4172
    %v4174 = vlaneseq
    %v4175 = vshrl.u32 %v4174, 7
    %v4176 = vsub.s32 %v4173, %v4175
    %v4177 = vrot.slane %v4169, %v4176
    %v4179 = vunpack.c.l.s4 1983009808
    %v4180 = vunpack.c.0.s8 %v4179
    %v4181 = vlaneseq
    %v4182 = vshrl.u32 %v4181, 7
    %v4183 = vsub.s32 %v4180, %v4182
    %v4184 = vrot.slane %v4170, %v4183
    %v4185 = vcombine.low %v2086, %v2100
    %v4186 = vcombine.high %v2086, %v2100
    %v4188 = vunpack.c.l.s4 1983009808
    %v4189 = vunpack.c.0.s8 %v4188
    %v4190 = vlaneseq
    %v4191 = vshrl.u32 %v4190, 7
    %v4192 = vsub.s32 %v4189, %v4191
    %v4193 = vrot.slane %v4185, %v4192
    %v4195 = vunpack.c.l.s4 1983009808
    %v4196 = vunpack.c.0.s8 %v4195
    %v4197 = vlaneseq
    %v4198 = vshrl.u32 %v4197, 7
    %v4199 = vsub.s32 %v4196, %v4198
    %v4200 = vrot.slane %v4186, %v4199
    %v4201 = vcombine.low %v2107, %v2121
    %v4202 = vcombine.high %v2107, %v2121
    %v4204 = vunpack.c.l.s4 1983009808
    %v4205 = vunpack.c.0.s8 %v4204
    %v4206 = vlaneseq
    %v4207 = vshrl.u32 %v4206, 7
    %v4208 = vsub.s32 %v4205, %v4207
    %v4209 = vrot.slane %v4201, %v4208
    %v4211 = vunpack.c.l.s4 1983009808
    %v4212 = vunpack.c.0.s8 %v4211
    %v4213 = vlaneseq
    %v4214 = vshrl.u32 %v4213, 7
    %v4215 = vsub.s32 %v4212, %v4214
    %v4216 = vrot.slane %v4202, %v4215
    %v4217 = vcombine.low %v2114, %v2128
    %v4218 = vcombine.high %v2114, %v2128
    %v4220 = vunpack.c.l.s4 1983009808
    %v4221 = vunpack.c.0.s8 %v4220
    %v4222 = vlaneseq
    %v4223 = vshrl.u32 %v4222, 7
    %v4224 = vsub.s32 %v4221, %v4223
    %v4225 = vrot.slane %v4217, %v4224
    %v4227 = vunpack.c.l.s4 1983009808
    %v4228 = vunpack.c.0.s8 %v4227
    %v4229 = vlaneseq
    %v4230 = vshrl.u32 %v4229, 7
    %v4231 = vsub.s32 %v4228, %v4230
    %v4232 = vrot.slane %v4218, %v4231
    %v4233 = vcombine.low %v4177, %v4193
    %v4234 = vcombine.high %v4177, %v4193
    %v4236 = vunpack.c.l.s4 1934713408
    %v4237 = vunpack.c.0.s8 %v4236
    %v4238 = vlaneseq
    %v4239 = vshrl.u32 %v4238, 7
    %v4240 = vsub.s32 %v4237, %v4239
    %v4241 = vrot.slane %v4233, %v4240
    %v4243 = vunpack.c.l.s4 1934713408
    %v4244 = vunpack.c.0.s8 %v4243
    %v4245 = vlaneseq
    %v4246 = vshrl.u32 %v4245, 7
    %v4247 = vsub.s32 %v4244, %v4246
    %v4248 = vrot.slane %v4234, %v4247
    %v4249 = vcombine.low %v4184, %v4200
    %v4250 = vcombine.high %v4184, %v4200
    %v4252 = vunpack.c.l.s4 1934713408
    %v4253 = vunpack.c.0.s8 %v4252
    %v4254 = vlaneseq
    %v4255 = vshrl.u32 %v4254, 7
    %v4256 = vsub.s32 %v4253, %v4255
    %v4257 = vrot.slane %v4249, %v4256
    %v4259 = vunpack.c.l.s4 1934713408
    %v4260 = vunpack.c.0.s8 %v4259
    %v4261 = vlaneseq
    %v4262 = vshrl.u32 %v4261, 7
    %v4263 = vsub.s32 %v4260, %v4262
    %v4264 = vrot.slane %v4250, %v4263
    %v4265 = vcombine.low %v4209, %v4225
    %v4266 = vcombine.high %v4209, %v4225
    %v4268 = vunpack.c.l.s4 1934713408
    %v4269 = vunpack.c.0.s8 %v4268
    %v4270 = vlaneseq
    %v4271 = vshrl.u32 %v4270, 7
    %v4272 = vsub.s32 %v4269, %v4271
    %v4273 = vrot.slane %v4265, %v4272
    %v4275 = vunpack.c.l.s4 1934713408
    %v4276 = vunpack.c.0.s8 %v4275
    %v4277 = vlaneseq
    %v4278 = vshrl.u32 %v4277, 7
    %v4279 = vsub.s32 %v4276, %v4278
    %v4280 = vrot.slane %v4266, %v4279
    %v4281 = vcombine.low %v4216, %v4232
    %v4282 = vcombine.high %v4216, %v4232
    %v4284 = vunpack.c.l.s4 1934713408
    %v4285 = vunpack.c.0.s8 %v4284
    %v4286 = vlaneseq
    %v4287 = vshrl.u32 %v4286, 7
    %v4288 = vsub.s32 %v4285, %v4287
    %v4289 = vrot.slane %v4281, %v4288
    %v4291 = vunpack.c.l.s4 1934713408
    %v4292 = vunpack.c.0.s8 %v4291
    %v4293 = vlaneseq
    %v4294 = vshrl.u32 %v4293, 7
    %v4295 = vsub.s32 %v4292, %v4294
    %v4296 = vrot.slane %v4282, %v4295
    %v4297 = vcombine.low %v4241, %v4273
    %v4298 = vcombine.high %v4241, %v4273
    %v4299 = vcombine.low %v4248, %v4280
    %v4300 = vcombine.high %v4248, %v4280
    %v4301 = vcombine.low %v4257, %v4289
    %v4302 = vcombine.high %v4257, %v4289
    %v4303 = vcombine.low %v4264, %v4296
    %v4304 = vcombine.high %v4264, %v4296
    %4321 = vrot.lane.b32.xlu0 %v2258, 8
    %v4322 = vpop.permute.xlu0 %4321
    %4323 = vrot.lane.b32.xlu0 %v2394, 8
    %v4324 = vpop.permute.xlu0 %4323
    %4325 = vrot.lane.b32.xlu0 %v2530, 8
    %v4326 = vpop.permute.xlu0 %4325
    %4327 = vrot.lane.b32.xlu0 %v2666, 8
    %v4328 = vpop.permute.xlu0 %4327
    %4329 = vrot.lane.b32.xlu0 %v2802, 8
    %v4330 = vpop.permute.xlu0 %4329
    %4331 = vrot.lane.b32.xlu0 %v2938, 8
    %v4332 = vpop.permute.xlu0 %4331
    %4333 = vrot.lane.b32.xlu0 %v3074, 8
    %v4334 = vpop.permute.xlu0 %4333
    %4335 = vrot.lane.b32.xlu0 %v3210, 8
    %v4336 = vpop.permute.xlu0 %4335
    %4337 = vrot.lane.b32.xlu0 %v3346, 8
    %v4338 = vpop.permute.xlu0 %4337
    %4339 = vrot.lane.b32.xlu0 %v3482, 8
    %v4340 = vpop.permute.xlu0 %4339
    %4341 = vrot.lane.b32.xlu0 %v3618, 8
    %v4342 = vpop.permute.xlu0 %4341
    %4343 = vrot.lane.b32.xlu0 %v3754, 8
    %v4344 = vpop.permute.xlu0 %4343
    %4345 = vrot.lane.b32.xlu0 %v3890, 8
    %v4346 = vpop.permute.xlu0 %4345
    %4347 = vrot.lane.b32.xlu0 %v4026, 8
    %v4348 = vpop.permute.xlu0 %4347
    %4349 = vrot.lane.b32.xlu0 %v4162, 8
    %v4350 = vpop.permute.xlu0 %4349
    %4351 = vrot.lane.b32.xlu0 %v4298, 8
    %v4352 = vpop.permute.xlu0 %4351
    %4385 = vrot.lane.b32.xlu0 %v2259, 16
    %v4386 = vpop.permute.xlu0 %4385
    %4387 = vrot.lane.b32.xlu0 %v2395, 16
    %v4388 = vpop.permute.xlu0 %4387
    %4389 = vrot.lane.b32.xlu0 %v2531, 16
    %v4390 = vpop.permute.xlu0 %4389
    %4391 = vrot.lane.b32.xlu0 %v2667, 16
    %v4392 = vpop.permute.xlu0 %4391
    %4393 = vrot.lane.b32.xlu0 %v2803, 16
    %v4394 = vpop.permute.xlu0 %4393
    %4395 = vrot.lane.b32.xlu0 %v2939, 16
    %v4396 = vpop.permute.xlu0 %4395
    %4397 = vrot.lane.b32.xlu0 %v3075, 16
    %v4398 = vpop.permute.xlu0 %4397
    %4399 = vrot.lane.b32.xlu0 %v3211, 16
    %v4400 = vpop.permute.xlu0 %4399
    %4401 = vrot.lane.b32.xlu0 %v3347, 16
    %v4402 = vpop.permute.xlu0 %4401
    %4403 = vrot.lane.b32.xlu0 %v3483, 16
    %v4404 = vpop.permute.xlu0 %4403
    %4405 = vrot.lane.b32.xlu0 %v3619, 16
    %v4406 = vpop.permute.xlu0 %4405
    %4407 = vrot.lane.b32.xlu0 %v3755, 16
    %v4408 = vpop.permute.xlu0 %4407
    %4409 = vrot.lane.b32.xlu0 %v3891, 16
    %v4410 = vpop.permute.xlu0 %4409
    %4411 = vrot.lane.b32.xlu0 %v4027, 16
    %v4412 = vpop.permute.xlu0 %4411
    %4413 = vrot.lane.b32.xlu0 %v4163, 16
    %v4414 = vpop.permute.xlu0 %4413
    %4415 = vrot.lane.b32.xlu0 %v4299, 16
    %v4416 = vpop.permute.xlu0 %4415
    %4449 = vrot.lane.b32.xlu0 %v2260, 24
    %v4450 = vpop.permute.xlu0 %4449
    %4451 = vrot.lane.b32.xlu0 %v2396, 24
    %v4452 = vpop.permute.xlu0 %4451
    %4453 = vrot.lane.b32.xlu0 %v2532, 24
    %v4454 = vpop.permute.xlu0 %4453
    %4455 = vrot.lane.b32.xlu0 %v2668, 24
    %v4456 = vpop.permute.xlu0 %4455
    %4457 = vrot.lane.b32.xlu0 %v2804, 24
    %v4458 = vpop.permute.xlu0 %4457
    %4459 = vrot.lane.b32.xlu0 %v2940, 24
    %v4460 = vpop.permute.xlu0 %4459
    %4461 = vrot.lane.b32.xlu0 %v3076, 24
    %v4462 = vpop.permute.xlu0 %4461
    %4463 = vrot.lane.b32.xlu0 %v3212, 24
    %v4464 = vpop.permute.xlu0 %4463
    %4465 = vrot.lane.b32.xlu0 %v3348, 24
    %v4466 = vpop.permute.xlu0 %4465
    %4467 = vrot.lane.b32.xlu0 %v3484, 24
    %v4468 = vpop.permute.xlu0 %4467
    %4469 = vrot.lane.b32.xlu0 %v3620, 24
    %v4470 = vpop.permute.xlu0 %4469
    %4471 = vrot.lane.b32.xlu0 %v3756, 24
    %v4472 = vpop.permute.xlu0 %4471
    %4473 = vrot.lane.b32.xlu0 %v3892, 24
    %v4474 = vpop.permute.xlu0 %4473
    %4475 = vrot.lane.b32.xlu0 %v4028, 24
    %v4476 = vpop.permute.xlu0 %4475
    %4477 = vrot.lane.b32.xlu0 %v4164, 24
    %v4478 = vpop.permute.xlu0 %4477
    %4479 = vrot.lane.b32.xlu0 %v4300, 24
    %v4480 = vpop.permute.xlu0 %4479
    %4513 = vrot.lane.b32.xlu0 %v2261, 32
    %v4514 = vpop.permute.xlu0 %4513
    %4515 = vrot.lane.b32.xlu0 %v2397, 32
    %v4516 = vpop.permute.xlu0 %4515
    %4517 = vrot.lane.b32.xlu0 %v2533, 32
    %v4518 = vpop.permute.xlu0 %4517
    %4519 = vrot.lane.b32.xlu0 %v2669, 32
    %v4520 = vpop.permute.xlu0 %4519
    %4521 = vrot.lane.b32.xlu0 %v2805, 32
    %v4522 = vpop.permute.xlu0 %4521
    %4523 = vrot.lane.b32.xlu0 %v2941, 32
    %v4524 = vpop.permute.xlu0 %4523
    %4525 = vrot.lane.b32.xlu0 %v3077, 32
    %v4526 = vpop.permute.xlu0 %4525
    %4527 = vrot.lane.b32.xlu0 %v3213, 32
    %v4528 = vpop.permute.xlu0 %4527
    %4529 = vrot.lane.b32.xlu0 %v3349, 32
    %v4530 = vpop.permute.xlu0 %4529
    %4531 = vrot.lane.b32.xlu0 %v3485, 32
    %v4532 = vpop.permute.xlu0 %4531
    %4533 = vrot.lane.b32.xlu0 %v3621, 32
    %v4534 = vpop.permute.xlu0 %4533
    %4535 = vrot.lane.b32.xlu0 %v3757, 32
    %v4536 = vpop.permute.xlu0 %4535
    %4537 = vrot.lane.b32.xlu0 %v3893, 32
    %v4538 = vpop.permute.xlu0 %4537
    %4539 = vrot.lane.b32.xlu0 %v4029, 32
    %v4540 = vpop.permute.xlu0 %4539
    %4541 = vrot.lane.b32.xlu0 %v4165, 32
    %v4542 = vpop.permute.xlu0 %4541
    %4543 = vrot.lane.b32.xlu0 %v4301, 32
    %v4544 = vpop.permute.xlu0 %4543
    %4577 = vrot.lane.b32.xlu0 %v2262, 40
    %v4578 = vpop.permute.xlu0 %4577
    %4579 = vrot.lane.b32.xlu0 %v2398, 40
    %v4580 = vpop.permute.xlu0 %4579
    %4581 = vrot.lane.b32.xlu0 %v2534, 40
    %v4582 = vpop.permute.xlu0 %4581
    %4583 = vrot.lane.b32.xlu0 %v2670, 40
    %v4584 = vpop.permute.xlu0 %4583
    %4585 = vrot.lane.b32.xlu0 %v2806, 40
    %v4586 = vpop.permute.xlu0 %4585
    %4587 = vrot.lane.b32.xlu0 %v2942, 40
    %v4588 = vpop.permute.xlu0 %4587
    %4589 = vrot.lane.b32.xlu0 %v3078, 40
    %v4590 = vpop.permute.xlu0 %4589
    %4591 = vrot.lane.b32.xlu0 %v3214, 40
    %v4592 = vpop.permute.xlu0 %4591
    %4593 = vrot.lane.b32.xlu0 %v3350, 40
    %v4594 = vpop.permute.xlu0 %4593
    %4595 = vrot.lane.b32.xlu0 %v3486, 40
    %v4596 = vpop.permute.xlu0 %4595
    %4597 = vrot.lane.b32.xlu0 %v3622, 40
    %v4598 = vpop.permute.xlu0 %4597
    %4599 = vrot.lane.b32.xlu0 %v3758, 40
    %v4600 = vpop.permute.xlu0 %4599
    %4601 = vrot.lane.b32.xlu0 %v3894, 40
    %v4602 = vpop.permute.xlu0 %4601
    %4603 = vrot.lane.b32.xlu0 %v4030, 40
    %v4604 = vpop.permute.xlu0 %4603
    %4605 = vrot.lane.b32.xlu0 %v4166, 40
    %v4606 = vpop.permute.xlu0 %4605
    %4607 = vrot.lane.b32.xlu0 %v4302, 40
    %v4608 = vpop.permute.xlu0 %4607
    %4641 = vrot.lane.b32.xlu0 %v2263, 48
    %v4642 = vpop.permute.xlu0 %4641
    %4643 = vrot.lane.b32.xlu0 %v2399, 48
    %v4644 = vpop.permute.xlu0 %4643
    %4645 = vrot.lane.b32.xlu0 %v2535, 48
    %v4646 = vpop.permute.xlu0 %4645
    %4647 = vrot.lane.b32.xlu0 %v2671, 48
    %v4648 = vpop.permute.xlu0 %4647
    %4649 = vrot.lane.b32.xlu0 %v2807, 48
    %v4650 = vpop.permute.xlu0 %4649
    %4651 = vrot.lane.b32.xlu0 %v2943, 48
    %v4652 = vpop.permute.xlu0 %4651
    %4653 = vrot.lane.b32.xlu0 %v3079, 48
    %v4654 = vpop.permute.xlu0 %4653
    %4655 = vrot.lane.b32.xlu0 %v3215, 48
    %v4656 = vpop.permute.xlu0 %4655
    %4657 = vrot.lane.b32.xlu0 %v3351, 48
    %v4658 = vpop.permute.xlu0 %4657
    %4659 = vrot.lane.b32.xlu0 %v3487, 48
    %v4660 = vpop.permute.xlu0 %4659
    %4661 = vrot.lane.b32.xlu0 %v3623, 48
    %v4662 = vpop.permute.xlu0 %4661
    %4663 = vrot.lane.b32.xlu0 %v3759, 48
    %v4664 = vpop.permute.xlu0 %4663
    %4665 = vrot.lane.b32.xlu0 %v3895, 48
    %v4666 = vpop.permute.xlu0 %4665
    %4667 = vrot.lane.b32.xlu0 %v4031, 48
    %v4668 = vpop.permute.xlu0 %4667
    %4669 = vrot.lane.b32.xlu0 %v4167, 48
    %v4670 = vpop.permute.xlu0 %4669
    %4671 = vrot.lane.b32.xlu0 %v4303, 48
    %v4672 = vpop.permute.xlu0 %4671
    %4705 = vrot.lane.b32.xlu0 %v2264, 56
    %v4706 = vpop.permute.xlu0 %4705
    %4707 = vrot.lane.b32.xlu0 %v2400, 56
    %v4708 = vpop.permute.xlu0 %4707
    %4709 = vrot.lane.b32.xlu0 %v2536, 56
    %v4710 = vpop.permute.xlu0 %4709
    %4711 = vrot.lane.b32.xlu0 %v2672, 56
    %v4712 = vpop.permute.xlu0 %4711
    %4713 = vrot.lane.b32.xlu0 %v2808, 56
    %v4714 = vpop.permute.xlu0 %4713
    %4715 = vrot.lane.b32.xlu0 %v2944, 56
    %v4716 = vpop.permute.xlu0 %4715
    %4717 = vrot.lane.b32.xlu0 %v3080, 56
    %v4718 = vpop.permute.xlu0 %4717
    %4719 = vrot.lane.b32.xlu0 %v3216, 56
    %v4720 = vpop.permute.xlu0 %4719
    %4721 = vrot.lane.b32.xlu0 %v3352, 56
    %v4722 = vpop.permute.xlu0 %4721
    %4723 = vrot.lane.b32.xlu0 %v3488, 56
    %v4724 = vpop.permute.xlu0 %4723
    %4725 = vrot.lane.b32.xlu0 %v3624, 56
    %v4726 = vpop.permute.xlu0 %4725
    %4727 = vrot.lane.b32.xlu0 %v3760, 56
    %v4728 = vpop.permute.xlu0 %4727
    %4729 = vrot.lane.b32.xlu0 %v3896, 56
    %v4730 = vpop.permute.xlu0 %4729
    %4731 = vrot.lane.b32.xlu0 %v4032, 56
    %v4732 = vpop.permute.xlu0 %4731
    %4733 = vrot.lane.b32.xlu0 %v4168, 56
    %v4734 = vpop.permute.xlu0 %4733
    %4735 = vrot.lane.b32.xlu0 %v4304, 56
    %v4736 = vpop.permute.xlu0 %4735
    %v4753 = vsel %vm55, %v2257, %v4322
    %v4754 = vsel %vm55, %v2393, %v4324
    %v4755 = vsel %vm55, %v2529, %v4326
    %v4756 = vsel %vm55, %v2665, %v4328
    %v4757 = vsel %vm55, %v2801, %v4330
    %v4758 = vsel %vm55, %v2937, %v4332
    %v4759 = vsel %vm55, %v3073, %v4334
    %v4760 = vsel %vm55, %v3209, %v4336
    %v4761 = vsel %vm55, %v3345, %v4338
    %v4762 = vsel %vm55, %v3481, %v4340
    %v4763 = vsel %vm55, %v3617, %v4342
    %v4764 = vsel %vm55, %v3753, %v4344
    %v4765 = vsel %vm55, %v3889, %v4346
    %v4766 = vsel %vm55, %v4025, %v4348
    %v4767 = vsel %vm55, %v4161, %v4350
    %v4768 = vsel %vm55, %v4297, %v4352
    %vm4769 = vcmask 130048
    %v4770 = vsel %vm4769, %v4753, %v4386
    %v4771 = vsel %vm4769, %v4754, %v4388
    %v4772 = vsel %vm4769, %v4755, %v4390
    %v4773 = vsel %vm4769, %v4756, %v4392
    %v4774 = vsel %vm4769, %v4757, %v4394
    %v4775 = vsel %vm4769, %v4758, %v4396
    %v4776 = vsel %vm4769, %v4759, %v4398
    %v4777 = vsel %vm4769, %v4760, %v4400
    %v4778 = vsel %vm4769, %v4761, %v4402
    %v4779 = vsel %vm4769, %v4762, %v4404
    %v4780 = vsel %vm4769, %v4763, %v4406
    %v4781 = vsel %vm4769, %v4764, %v4408
    %v4782 = vsel %vm4769, %v4765, %v4410
    %v4783 = vsel %vm4769, %v4766, %v4412
    %v4784 = vsel %vm4769, %v4767, %v4414
    %v4785 = vsel %vm4769, %v4768, %v4416
    %vm4786 = vcmask 195584
    %v4787 = vsel %vm4786, %v4770, %v4450
    %v4788 = vsel %vm4786, %v4771, %v4452
    %v4789 = vsel %vm4786, %v4772, %v4454
    %v4790 = vsel %vm4786, %v4773, %v4456
    %v4791 = vsel %vm4786, %v4774, %v4458
    %v4792 = vsel %vm4786, %v4775, %v4460
    %v4793 = vsel %vm4786, %v4776, %v4462
    %v4794 = vsel %vm4786, %v4777, %v4464
    %v4795 = vsel %vm4786, %v4778, %v4466
    %v4796 = vsel %vm4786, %v4779, %v4468
    %v4797 = vsel %vm4786, %v4780, %v4470
    %v4798 = vsel %vm4786, %v4781, %v4472
    %v4799 = vsel %vm4786, %v4782, %v4474
    %v4800 = vsel %vm4786, %v4783, %v4476
    %v4801 = vsel %vm4786, %v4784, %v4478
    %v4802 = vsel %vm4786, %v4785, %v4480
    %v4803 = vsel %vm276, %v4787, %v4514
    %v4804 = vsel %vm276, %v4788, %v4516
    %v4805 = vsel %vm276, %v4789, %v4518
    %v4806 = vsel %vm276, %v4790, %v4520
    %v4807 = vsel %vm276, %v4791, %v4522
    %v4808 = vsel %vm276, %v4792, %v4524
    %v4809 = vsel %vm276, %v4793, %v4526
    %v4810 = vsel %vm276, %v4794, %v4528
    %v4811 = vsel %vm276, %v4795, %v4530
    %v4812 = vsel %vm276, %v4796, %v4532
    %v4813 = vsel %vm276, %v4797, %v4534
    %v4814 = vsel %vm276, %v4798, %v4536
    %v4815 = vsel %vm276, %v4799, %v4538
    %v4816 = vsel %vm276, %v4800, %v4540
    %v4817 = vsel %vm276, %v4801, %v4542
    %v4818 = vsel %vm276, %v4802, %v4544
    %vm4819 = vcmask 326656
    %v4820 = vsel %vm4819, %v4803, %v4578
    %v4821 = vsel %vm4819, %v4804, %v4580
    %v4822 = vsel %vm4819, %v4805, %v4582
    %v4823 = vsel %vm4819, %v4806, %v4584
    %v4824 = vsel %vm4819, %v4807, %v4586
    %v4825 = vsel %vm4819, %v4808, %v4588
    %v4826 = vsel %vm4819, %v4809, %v4590
    %v4827 = vsel %vm4819, %v4810, %v4592
    %v4828 = vsel %vm4819, %v4811, %v4594
    %v4829 = vsel %vm4819, %v4812, %v4596
    %v4830 = vsel %vm4819, %v4813, %v4598
    %v4831 = vsel %vm4819, %v4814, %v4600
    %v4832 = vsel %vm4819, %v4815, %v4602
    %v4833 = vsel %vm4819, %v4816, %v4604
    %v4834 = vsel %vm4819, %v4817, %v4606
    %v4835 = vsel %vm4819, %v4818, %v4608
    %vm4836 = vcmask 392192
    %v4837 = vsel %vm4836, %v4820, %v4642
    %v4838 = vsel %vm4836, %v4821, %v4644
    %v4839 = vsel %vm4836, %v4822, %v4646
    %v4840 = vsel %vm4836, %v4823, %v4648
    %v4841 = vsel %vm4836, %v4824, %v4650
    %v4842 = vsel %vm4836, %v4825, %v4652
    %v4843 = vsel %vm4836, %v4826, %v4654
    %v4844 = vsel %vm4836, %v4827, %v4656
    %v4845 = vsel %vm4836, %v4828, %v4658
    %v4846 = vsel %vm4836, %v4829, %v4660
    %v4847 = vsel %vm4836, %v4830, %v4662
    %v4848 = vsel %vm4836, %v4831, %v4664
    %v4849 = vsel %vm4836, %v4832, %v4666
    %v4850 = vsel %vm4836, %v4833, %v4668
    %v4851 = vsel %vm4836, %v4834, %v4670
    %v4852 = vsel %vm4836, %v4835, %v4672
    %vm4853 = vcmask 457728
    %v4854 = vsel %vm4853, %v4837, %v4706
    %v4855 = vsel %vm4853, %v4838, %v4708
    %v4856 = vsel %vm4853, %v4839, %v4710
    %v4857 = vsel %vm4853, %v4840, %v4712
    %v4858 = vsel %vm4853, %v4841, %v4714
    %v4859 = vsel %vm4853, %v4842, %v4716
    %v4860 = vsel %vm4853, %v4843, %v4718
    %v4861 = vsel %vm4853, %v4844, %v4720
    %v4862 = vsel %vm4853, %v4845, %v4722
    %v4863 = vsel %vm4853, %v4846, %v4724
    %v4864 = vsel %vm4853, %v4847, %v4726
    %v4865 = vsel %vm4853, %v4848, %v4728
    %v4866 = vsel %vm4853, %v4849, %v4730
    %v4867 = vsel %vm4853, %v4850, %v4732
    %v4868 = vsel %vm4853, %v4851, %v4734
    %v4869 = vsel %vm4853, %v4852, %v4736
    %4886 = vrot.lane.b32.xlu0 %v1217, 8
    %v4887 = vpop.permute.xlu0 %4886
    %4888 = vrot.lane.b32.xlu0 %v1218, 8
    %v4889 = vpop.permute.xlu0 %4888
    %4890 = vrot.lane.b32.xlu0 %v1219, 8
    %v4891 = vpop.permute.xlu0 %4890
    %4892 = vrot.lane.b32.xlu0 %v1220, 8
    %v4893 = vpop.permute.xlu0 %4892
    %4894 = vrot.lane.b32.xlu0 %v1221, 8
    %v4895 = vpop.permute.xlu0 %4894
    %4896 = vrot.lane.b32.xlu0 %v1222, 8
    %v4897 = vpop.permute.xlu0 %4896
    %4898 = vrot.lane.b32.xlu0 %v1223, 8
    %v4899 = vpop.permute.xlu0 %4898
    %4900 = vrot.lane.b32.xlu0 %v1224, 8
    %v4901 = vpop.permute.xlu0 %4900
    %4902 = vrot.lane.b32.xlu0 %v1225, 8
    %v4903 = vpop.permute.xlu0 %4902
    %4904 = vrot.lane.b32.xlu0 %v1226, 8
    %v4905 = vpop.permute.xlu0 %4904
    %4906 = vrot.lane.b32.xlu0 %v1227, 8
    %v4907 = vpop.permute.xlu0 %4906
    %4908 = vrot.lane.b32.xlu0 %v1228, 8
    %v4909 = vpop.permute.xlu0 %4908
    %4910 = vrot.lane.b32.xlu0 %v1229, 8
    %v4911 = vpop.permute.xlu0 %4910
    %4912 = vrot.lane.b32.xlu0 %v1230, 8
    %v4913 = vpop.permute.xlu0 %4912
    %4914 = vrot.lane.b32.xlu0 %v1231, 8
    %v4915 = vpop.permute.xlu0 %4914
    %4916 = vrot.lane.b32.xlu0 %v1232, 8
    %v4917 = vpop.permute.xlu0 %4916
    %4934 = vrot.lane.b32.xlu0 %v1217, 16
    %v4935 = vpop.permute.xlu0 %4934
    %4936 = vrot.lane.b32.xlu0 %v1218, 16
    %v4937 = vpop.permute.xlu0 %4936
    %4938 = vrot.lane.b32.xlu0 %v1219, 16
    %v4939 = vpop.permute.xlu0 %4938
    %4940 = vrot.lane.b32.xlu0 %v1220, 16
    %v4941 = vpop.permute.xlu0 %4940
    %4942 = vrot.lane.b32.xlu0 %v1221, 16
    %v4943 = vpop.permute.xlu0 %4942
    %4944 = vrot.lane.b32.xlu0 %v1222, 16
    %v4945 = vpop.permute.xlu0 %4944
    %4946 = vrot.lane.b32.xlu0 %v1223, 16
    %v4947 = vpop.permute.xlu0 %4946
    %4948 = vrot.lane.b32.xlu0 %v1224, 16
    %v4949 = vpop.permute.xlu0 %4948
    %4950 = vrot.lane.b32.xlu0 %v1225, 16
    %v4951 = vpop.permute.xlu0 %4950
    %4952 = vrot.lane.b32.xlu0 %v1226, 16
    %v4953 = vpop.permute.xlu0 %4952
    %4954 = vrot.lane.b32.xlu0 %v1227, 16
    %v4955 = vpop.permute.xlu0 %4954
    %4956 = vrot.lane.b32.xlu0 %v1228, 16
    %v4957 = vpop.permute.xlu0 %4956
    %4958 = vrot.lane.b32.xlu0 %v1229, 16
    %v4959 = vpop.permute.xlu0 %4958
    %4960 = vrot.lane.b32.xlu0 %v1230, 16
    %v4961 = vpop.permute.xlu0 %4960
    %4962 = vrot.lane.b32.xlu0 %v1231, 16
    %v4963 = vpop.permute.xlu0 %4962
    %4964 = vrot.lane.b32.xlu0 %v1232, 16
    %v4965 = vpop.permute.xlu0 %4964
    %4982 = vrot.lane.b32.xlu0 %v1217, 24
    %v4983 = vpop.permute.xlu0 %4982
    %4984 = vrot.lane.b32.xlu0 %v1218, 24
    %v4985 = vpop.permute.xlu0 %4984
    %4986 = vrot.lane.b32.xlu0 %v1219, 24
    %v4987 = vpop.permute.xlu0 %4986
    %4988 = vrot.lane.b32.xlu0 %v1220, 24
    %v4989 = vpop.permute.xlu0 %4988
    %4990 = vrot.lane.b32.xlu0 %v1221, 24
    %v4991 = vpop.permute.xlu0 %4990
    %4992 = vrot.lane.b32.xlu0 %v1222, 24
    %v4993 = vpop.permute.xlu0 %4992
    %4994 = vrot.lane.b32.xlu0 %v1223, 24
    %v4995 = vpop.permute.xlu0 %4994
    %4996 = vrot.lane.b32.xlu0 %v1224, 24
    %v4997 = vpop.permute.xlu0 %4996
    %4998 = vrot.lane.b32.xlu0 %v1225, 24
    %v4999 = vpop.permute.xlu0 %4998
    %5000 = vrot.lane.b32.xlu0 %v1226, 24
    %v5001 = vpop.permute.xlu0 %5000
    %5002 = vrot.lane.b32.xlu0 %v1227, 24
    %v5003 = vpop.permute.xlu0 %5002
    %5004 = vrot.lane.b32.xlu0 %v1228, 24
    %v5005 = vpop.permute.xlu0 %5004
    %5006 = vrot.lane.b32.xlu0 %v1229, 24
    %v5007 = vpop.permute.xlu0 %5006
    %5008 = vrot.lane.b32.xlu0 %v1230, 24
    %v5009 = vpop.permute.xlu0 %5008
    %5010 = vrot.lane.b32.xlu0 %v1231, 24
    %v5011 = vpop.permute.xlu0 %5010
    %5012 = vrot.lane.b32.xlu0 %v1232, 24
    %v5013 = vpop.permute.xlu0 %5012
    %5030 = vrot.lane.b32.xlu0 %v1217, 32
    %v5031 = vpop.permute.xlu0 %5030
    %5032 = vrot.lane.b32.xlu0 %v1218, 32
    %v5033 = vpop.permute.xlu0 %5032
    %5034 = vrot.lane.b32.xlu0 %v1219, 32
    %v5035 = vpop.permute.xlu0 %5034
    %5036 = vrot.lane.b32.xlu0 %v1220, 32
    %v5037 = vpop.permute.xlu0 %5036
    %5038 = vrot.lane.b32.xlu0 %v1221, 32
    %v5039 = vpop.permute.xlu0 %5038
    %5040 = vrot.lane.b32.xlu0 %v1222, 32
    %v5041 = vpop.permute.xlu0 %5040
    %5042 = vrot.lane.b32.xlu0 %v1223, 32
    %v5043 = vpop.permute.xlu0 %5042
    %5044 = vrot.lane.b32.xlu0 %v1224, 32
    %v5045 = vpop.permute.xlu0 %5044
    %5046 = vrot.lane.b32.xlu0 %v1225, 32
    %v5047 = vpop.permute.xlu0 %5046
    %5048 = vrot.lane.b32.xlu0 %v1226, 32
    %v5049 = vpop.permute.xlu0 %5048
    %5050 = vrot.lane.b32.xlu0 %v1227, 32
    %v5051 = vpop.permute.xlu0 %5050
    %5052 = vrot.lane.b32.xlu0 %v1228, 32
    %v5053 = vpop.permute.xlu0 %5052
    %5054 = vrot.lane.b32.xlu0 %v1229, 32
    %v5055 = vpop.permute.xlu0 %5054
    %5056 = vrot.lane.b32.xlu0 %v1230, 32
    %v5057 = vpop.permute.xlu0 %5056
    %5058 = vrot.lane.b32.xlu0 %v1231, 32
    %v5059 = vpop.permute.xlu0 %5058
    %5060 = vrot.lane.b32.xlu0 %v1232, 32
    %v5061 = vpop.permute.xlu0 %5060
    %5078 = vrot.lane.b32.xlu0 %v1217, 40
    %v5079 = vpop.permute.xlu0 %5078
    %5080 = vrot.lane.b32.xlu0 %v1218, 40
    %v5081 = vpop.permute.xlu0 %5080
    %5082 = vrot.lane.b32.xlu0 %v1219, 40
    %v5083 = vpop.permute.xlu0 %5082
    %5084 = vrot.lane.b32.xlu0 %v1220, 40
    %v5085 = vpop.permute.xlu0 %5084
    %5086 = vrot.lane.b32.xlu0 %v1221, 40
    %v5087 = vpop.permute.xlu0 %5086
    %5088 = vrot.lane.b32.xlu0 %v1222, 40
    %v5089 = vpop.permute.xlu0 %5088
    %5090 = vrot.lane.b32.xlu0 %v1223, 40
    %v5091 = vpop.permute.xlu0 %5090
    %5092 = vrot.lane.b32.xlu0 %v1224, 40
    %v5093 = vpop.permute.xlu0 %5092
    %5094 = vrot.lane.b32.xlu0 %v1225, 40
    %v5095 = vpop.permute.xlu0 %5094
    %5096 = vrot.lane.b32.xlu0 %v1226, 40
    %v5097 = vpop.permute.xlu0 %5096
    %5098 = vrot.lane.b32.xlu0 %v1227, 40
    %v5099 = vpop.permute.xlu0 %5098
    %5100 = vrot.lane.b32.xlu0 %v1228, 40
    %v5101 = vpop.permute.xlu0 %5100
    %5102 = vrot.lane.b32.xlu0 %v1229, 40
    %v5103 = vpop.permute.xlu0 %5102
    %5104 = vrot.lane.b32.xlu0 %v1230, 40
    %v5105 = vpop.permute.xlu0 %5104
    %5106 = vrot.lane.b32.xlu0 %v1231, 40
    %v5107 = vpop.permute.xlu0 %5106
    %5108 = vrot.lane.b32.xlu0 %v1232, 40
    %v5109 = vpop.permute.xlu0 %5108
    %5126 = vrot.lane.b32.xlu0 %v1217, 48
    %v5127 = vpop.permute.xlu0 %5126
    %5128 = vrot.lane.b32.xlu0 %v1218, 48
    %v5129 = vpop.permute.xlu0 %5128
    %5130 = vrot.lane.b32.xlu0 %v1219, 48
    %v5131 = vpop.permute.xlu0 %5130
    %5132 = vrot.lane.b32.xlu0 %v1220, 48
    %v5133 = vpop.permute.xlu0 %5132
    %5134 = vrot.lane.b32.xlu0 %v1221, 48
    %v5135 = vpop.permute.xlu0 %5134
    %5136 = vrot.lane.b32.xlu0 %v1222, 48
    %v5137 = vpop.permute.xlu0 %5136
    %5138 = vrot.lane.b32.xlu0 %v1223, 48
    %v5139 = vpop.permute.xlu0 %5138
    %5140 = vrot.lane.b32.xlu0 %v1224, 48
    %v5141 = vpop.permute.xlu0 %5140
    %5142 = vrot.lane.b32.xlu0 %v1225, 48
    %v5143 = vpop.permute.xlu0 %5142
    %5144 = vrot.lane.b32.xlu0 %v1226, 48
    %v5145 = vpop.permute.xlu0 %5144
    %5146 = vrot.lane.b32.xlu0 %v1227, 48
    %v5147 = vpop.permute.xlu0 %5146
    %5148 = vrot.lane.b32.xlu0 %v1228, 48
    %v5149 = vpop.permute.xlu0 %5148
    %5150 = vrot.lane.b32.xlu0 %v1229, 48
    %v5151 = vpop.permute.xlu0 %5150
    %5152 = vrot.lane.b32.xlu0 %v1230, 48
    %v5153 = vpop.permute.xlu0 %5152
    %5154 = vrot.lane.b32.xlu0 %v1231, 48
    %v5155 = vpop.permute.xlu0 %5154
    %5156 = vrot.lane.b32.xlu0 %v1232, 48
    %v5157 = vpop.permute.xlu0 %5156
    %5174 = vrot.lane.b32.xlu0 %v1217, 56
    %v5175 = vpop.permute.xlu0 %5174
    %5176 = vrot.lane.b32.xlu0 %v1218, 56
    %v5177 = vpop.permute.xlu0 %5176
    %5178 = vrot.lane.b32.xlu0 %v1219, 56
    %v5179 = vpop.permute.xlu0 %5178
    %5180 = vrot.lane.b32.xlu0 %v1220, 56
    %v5181 = vpop.permute.xlu0 %5180
    %5182 = vrot.lane.b32.xlu0 %v1221, 56
    %v5183 = vpop.permute.xlu0 %5182
    %5184 = vrot.lane.b32.xlu0 %v1222, 56
    %v5185 = vpop.permute.xlu0 %5184
    %5186 = vrot.lane.b32.xlu0 %v1223, 56
    %v5187 = vpop.permute.xlu0 %5186
    %5188 = vrot.lane.b32.xlu0 %v1224, 56
    %v5189 = vpop.permute.xlu0 %5188
    %5190 = vrot.lane.b32.xlu0 %v1225, 56
    %v5191 = vpop.permute.xlu0 %5190
    %5192 = vrot.lane.b32.xlu0 %v1226, 56
    %v5193 = vpop.permute.xlu0 %5192
    %5194 = vrot.lane.b32.xlu0 %v1227, 56
    %v5195 = vpop.permute.xlu0 %5194
    %5196 = vrot.lane.b32.xlu0 %v1228, 56
    %v5197 = vpop.permute.xlu0 %5196
    %5198 = vrot.lane.b32.xlu0 %v1229, 56
    %v5199 = vpop.permute.xlu0 %5198
    %5200 = vrot.lane.b32.xlu0 %v1230, 56
    %v5201 = vpop.permute.xlu0 %5200
    %5202 = vrot.lane.b32.xlu0 %v1231, 56
    %v5203 = vpop.permute.xlu0 %5202
    %5204 = vrot.lane.b32.xlu0 %v1232, 56
    %v5205 = vpop.permute.xlu0 %5204
    %v5222 = vsel %vm55, %v1217, %v4887
    %v5223 = vsel %vm55, %v1218, %v4889
    %v5224 = vsel %vm55, %v1219, %v4891
    %v5225 = vsel %vm55, %v1220, %v4893
    %v5226 = vsel %vm55, %v1221, %v4895
    %v5227 = vsel %vm55, %v1222, %v4897
    %v5228 = vsel %vm55, %v1223, %v4899
    %v5229 = vsel %vm55, %v1224, %v4901
    %v5230 = vsel %vm55, %v1225, %v4903
    %v5231 = vsel %vm55, %v1226, %v4905
    %v5232 = vsel %vm55, %v1227, %v4907
    %v5233 = vsel %vm55, %v1228, %v4909
    %v5234 = vsel %vm55, %v1229, %v4911
    %v5235 = vsel %vm55, %v1230, %v4913
    %v5236 = vsel %vm55, %v1231, %v4915
    %v5237 = vsel %vm55, %v1232, %v4917
    %v5238 = vsel %vm4769, %v5222, %v4935
    %v5239 = vsel %vm4769, %v5223, %v4937
    %v5240 = vsel %vm4769, %v5224, %v4939
    %v5241 = vsel %vm4769, %v5225, %v4941
    %v5242 = vsel %vm4769, %v5226, %v4943
    %v5243 = vsel %vm4769, %v5227, %v4945
    %v5244 = vsel %vm4769, %v5228, %v4947
    %v5245 = vsel %vm4769, %v5229, %v4949
    %v5246 = vsel %vm4769, %v5230, %v4951
    %v5247 = vsel %vm4769, %v5231, %v4953
    %v5248 = vsel %vm4769, %v5232, %v4955
    %v5249 = vsel %vm4769, %v5233, %v4957
    %v5250 = vsel %vm4769, %v5234, %v4959
    %v5251 = vsel %vm4769, %v5235, %v4961
    %v5252 = vsel %vm4769, %v5236, %v4963
    %v5253 = vsel %vm4769, %v5237, %v4965
    %v5254 = vsel %vm4786, %v5238, %v4983
    %v5255 = vsel %vm4786, %v5239, %v4985
    %v5256 = vsel %vm4786, %v5240, %v4987
    %v5257 = vsel %vm4786, %v5241, %v4989
    %v5258 = vsel %vm4786, %v5242, %v4991
    %v5259 = vsel %vm4786, %v5243, %v4993
    %v5260 = vsel %vm4786, %v5244, %v4995
    %v5261 = vsel %vm4786, %v5245, %v4997
    %v5262 = vsel %vm4786, %v5246, %v4999
    %v5263 = vsel %vm4786, %v5247, %v5001
    %v5264 = vsel %vm4786, %v5248, %v5003
    %v5265 = vsel %vm4786, %v5249, %v5005
    %v5266 = vsel %vm4786, %v5250, %v5007
    %v5267 = vsel %vm4786, %v5251, %v5009
    %v5268 = vsel %vm4786, %v5252, %v5011
    %v5269 = vsel %vm4786, %v5253, %v5013
    %v5270 = vsel %vm276, %v5254, %v5031
    %v5271 = vsel %vm276, %v5255, %v5033
    %v5272 = vsel %vm276, %v5256, %v5035
    %v5273 = vsel %vm276, %v5257, %v5037
    %v5274 = vsel %vm276, %v5258, %v5039
    %v5275 = vsel %vm276, %v5259, %v5041
    %v5276 = vsel %vm276, %v5260, %v5043
    %v5277 = vsel %vm276, %v5261, %v5045
    %v5278 = vsel %vm276, %v5262, %v5047
    %v5279 = vsel %vm276, %v5263, %v5049
    %v5280 = vsel %vm276, %v5264, %v5051
    %v5281 = vsel %vm276, %v5265, %v5053
    %v5282 = vsel %vm276, %v5266, %v5055
    %v5283 = vsel %vm276, %v5267, %v5057
    %v5284 = vsel %vm276, %v5268, %v5059
    %v5285 = vsel %vm276, %v5269, %v5061
    %v5286 = vsel %vm4819, %v5270, %v5079
    %v5287 = vsel %vm4819, %v5271, %v5081
    %v5288 = vsel %vm4819, %v5272, %v5083
    %v5289 = vsel %vm4819, %v5273, %v5085
    %v5290 = vsel %vm4819, %v5274, %v5087
    %v5291 = vsel %vm4819, %v5275, %v5089
    %v5292 = vsel %vm4819, %v5276, %v5091
    %v5293 = vsel %vm4819, %v5277, %v5093
    %v5294 = vsel %vm4819, %v5278, %v5095
    %v5295 = vsel %vm4819, %v5279, %v5097
    %v5296 = vsel %vm4819, %v5280, %v5099
    %v5297 = vsel %vm4819, %v5281, %v5101
    %v5298 = vsel %vm4819, %v5282, %v5103
    %v5299 = vsel %vm4819, %v5283, %v5105
    %v5300 = vsel %vm4819, %v5284, %v5107
    %v5301 = vsel %vm4819, %v5285, %v5109
    %v5302 = vsel %vm4836, %v5286, %v5127
    %v5303 = vsel %vm4836, %v5287, %v5129
    %v5304 = vsel %vm4836, %v5288, %v5131
    %v5305 = vsel %vm4836, %v5289, %v5133
    %v5306 = vsel %vm4836, %v5290, %v5135
    %v5307 = vsel %vm4836, %v5291, %v5137
    %v5308 = vsel %vm4836, %v5292, %v5139
    %v5309 = vsel %vm4836, %v5293, %v5141
    %v5310 = vsel %vm4836, %v5294, %v5143
    %v5311 = vsel %vm4836, %v5295, %v5145
    %v5312 = vsel %vm4836, %v5296, %v5147
    %v5313 = vsel %vm4836, %v5297, %v5149
    %v5314 = vsel %vm4836, %v5298, %v5151
    %v5315 = vsel %vm4836, %v5299, %v5153
    %v5316 = vsel %vm4836, %v5300, %v5155
    %v5317 = vsel %vm4836, %v5301, %v5157
    %v5318 = vsel %vm4853, %v5302, %v5175
    %v5319 = vsel %vm4853, %v5303, %v5177
    %v5320 = vsel %vm4853, %v5304, %v5179
    %v5321 = vsel %vm4853, %v5305, %v5181
    %v5322 = vsel %vm4853, %v5306, %v5183
    %v5323 = vsel %vm4853, %v5307, %v5185
    %v5324 = vsel %vm4853, %v5308, %v5187
    %v5325 = vsel %vm4853, %v5309, %v5189
    %v5326 = vsel %vm4853, %v5310, %v5191
    %v5327 = vsel %vm4853, %v5311, %v5193
    %v5328 = vsel %vm4853, %v5312, %v5195
    %v5329 = vsel %vm4853, %v5313, %v5197
    %v5330 = vsel %vm4853, %v5314, %v5199
    %v5331 = vsel %vm4853, %v5315, %v5201
    %v5332 = vsel %vm4853, %v5316, %v5203
    %v5333 = vsel %vm4853, %v5317, %v5205
    %v5334 = vmul.f32 %v4854, %v5318
    %v5335 = vmul.f32 %v4855, %v5319
    %v5336 = vmul.f32 %v4856, %v5320
    %v5337 = vmul.f32 %v4857, %v5321
    %v5338 = vmul.f32 %v4858, %v5322
    %v5339 = vmul.f32 %v4859, %v5323
    %v5340 = vmul.f32 %v4860, %v5324
    %v5341 = vmul.f32 %v4861, %v5325
    %v5342 = vmul.f32 %v4862, %v5326
    %v5343 = vmul.f32 %v4863, %v5327
    %v5344 = vmul.f32 %v4864, %v5328
    %v5345 = vmul.f32 %v4865, %v5329
    %v5346 = vmul.f32 %v4866, %v5330
    %v5347 = vmul.f32 %v4867, %v5331
    %v5348 = vmul.f32 %v4868, %v5332
    %v5349 = vmul.f32 %v4869, %v5333
    %v5350 = vld [vmem:[%s6] sm:$0xff]
    %v5351 = vld [vmem:[%s6 + $0x8] sm:$0xff]
    %v5352 = vld [vmem:[%s6 + $0x10] sm:$0xff]
    %v5353 = vld [vmem:[%s6 + $0x18] sm:$0xff]
    %v5354 = vld [vmem:[%s6 + $0x20] sm:$0xff]
    %v5355 = vld [vmem:[%s6 + $0x28] sm:$0xff]
    %v5356 = vld [vmem:[%s6 + $0x30] sm:$0xff]
    %v5357 = vld [vmem:[%s6 + $0x38] sm:$0xff]
    %vm5358 = vcmask 523264
    %v5360 = vsel %vm5358, %v5334, 0
    %v5363 = vsel %vm5358, %v5335, 0
    %v5366 = vsel %vm5358, %v5336, 0
    %v5369 = vsel %vm5358, %v5337, 0
    %v5372 = vsel %vm5358, %v5338, 0
    %v5375 = vsel %vm5358, %v5339, 0
    %v5378 = vsel %vm5358, %v5340, 0
    %v5381 = vsel %vm5358, %v5341, 0
    %v5384 = vsel %vm5358, %v5342, 0
    %v5387 = vsel %vm5358, %v5343, 0
    %v5390 = vsel %vm5358, %v5344, 0
    %v5393 = vsel %vm5358, %v5345, 0
    %v5396 = vsel %vm5358, %v5346, 0
    %v5399 = vsel %vm5358, %v5347, 0
    %v5402 = vsel %vm5358, %v5348, 0
    %v5405 = vsel %vm5358, %v5349, 0
    %5407 = vmatprep.subr.mxu0 0.0
    %5408 = vmatpush1.msra.mxu0 %v5350
    %5409 = vmatprep.subr.mxu0 0.0
    %5410 = vmatpush1.msra.mxu0 %v5351
    %5411 = vmatprep.subr.mxu0 0.0
    %5412 = vmatpush1.msra.mxu0 %v5352
    %5413 = vmatprep.subr.mxu0 0.0
    %5414 = vmatpush1.msra.mxu0 %v5353
    %5415 = vmatprep.subr.mxu0 0.0
    %5416 = vmatpush1.msra.mxu0 %v5354
    %5417 = vmatprep.subr.mxu0 0.0
    %5418 = vmatpush1.msra.mxu0 %v5355
    %5419 = vmatprep.subr.mxu0 0.0
    %5420 = vmatpush1.msra.mxu0 %v5356
    %5421 = vmatprep.subr.mxu0 0.0
    %5422 = vmatpush1.msra.mxu0 %v5357
    %5423 = vmatprep.subr.mxu0 0.0
    %5424 = vmatpush1.msra.mxu0 0.0
    %5425 = vmatprep.subr.mxu0 0.0
    %5426 = vmatpush1.msra.mxu0 0.0
    %5427 = vmatprep.subr.mxu0 0.0
    %5428 = vmatpush1.msra.mxu0 0.0
    %5429 = vmatprep.subr.mxu0 0.0
    %5430 = vmatpush1.msra.mxu0 0.0
    %5431 = vmatprep.subr.mxu0 0.0
    %5432 = vmatpush1.msra.mxu0 0.0
    %5433 = vmatprep.subr.mxu0 0.0
    %5434 = vmatpush1.msra.mxu0 0.0
    %5435 = vmatprep.subr.mxu0 0.0
    %5436 = vmatpush1.msra.mxu0 0.0
    %5437 = vmatprep.subr.mxu0 0.0
    %5438 = vmatpush1.msra.mxu0 0.0
    %5439 = vmatprep.subr.mxu0 0.0
    %5440 = vmatpush1.msra.mxu0 0.0
    %5441 = vmatprep.subr.mxu0 0.0
    %5442 = vmatpush1.msra.mxu0 0.0
    %5443 = vmatprep.subr.mxu0 0.0
    %5444 = vmatpush1.msra.mxu0 0.0
    %5445 = vmatprep.subr.mxu0 0.0
    %5446 = vmatpush1.msra.mxu0 0.0
    %5447 = vmatprep.subr.mxu0 0.0
    %5448 = vmatpush1.msra.mxu0 0.0
    %5449 = vmatprep.subr.mxu0 0.0
    %5450 = vmatpush1.msra.mxu0 0.0
    %5451 = vmatprep.subr.mxu0 0.0
    %5452 = vmatpush1.msra.mxu0 0.0
    %5453 = vmatprep.subr.mxu0 0.0
    %5454 = vmatpush1.msra.mxu0 0.0
    %5455 = vmatprep.subr.mxu0 0.0
    %5456 = vmatpush1.msra.mxu0 0.0
    %5457 = vmatprep.subr.mxu0 0.0
    %5458 = vmatpush1.msra.mxu0 0.0
    %5459 = vmatprep.subr.mxu0 0.0
    %5460 = vmatpush1.msra.mxu0 0.0
    %5461 = vmatprep.subr.mxu0 0.0
    %5462 = vmatpush1.msra.mxu0 0.0
    %5463 = vmatprep.subr.mxu0 0.0
    %5464 = vmatpush1.msra.mxu0 0.0
    %5465 = vmatprep.subr.mxu0 0.0
    %5466 = vmatpush1.msra.mxu0 0.0
    %5467 = vmatprep.subr.mxu0 0.0
    %5468 = vmatpush1.msra.mxu0 0.0
    %5469 = vmatprep.subr.mxu0 0.0
    %5470 = vmatpush1.msra.mxu0 0.0
    %5471 = vmatprep.mubr.f32.mxu0 0.0
    %5472 = vmatmul.mubr.f32.gmra.mrb[0].mxu0 %v5360
    %v5473 = vpop.f32.mrb[0].mxu0
    %v5474 = vadd.f32 0.0, %v5473
    %v5475 = vpop.f32.mrb[0].mxu0
    %5476 = vmatprep.mubr.f32.mxu0 0.0
    %5477 = vmatmul.mubr.f32.gmra.mrb[0].mxu0 %v5363
    %v5478 = vpop.f32.mrb[0].mxu0
    %v5479 = vadd.f32 0.0, %v5478
    %v5480 = vpop.f32.mrb[0].mxu0
    %5481 = vmatprep.mubr.f32.mxu0 0.0
    %5482 = vmatmul.mubr.f32.gmra.mrb[0].mxu0 %v5366
    %v5483 = vpop.f32.mrb[0].mxu0
    %v5484 = vadd.f32 0.0, %v5483
    %v5485 = vpop.f32.mrb[0].mxu0
    %5486 = vmatprep.mubr.f32.mxu0 0.0
    %5487 = vmatmul.mubr.f32.gmra.mrb[0].mxu0 %v5369
    %v5488 = vpop.f32.mrb[0].mxu0
    %v5489 = vadd.f32 0.0, %v5488
    %v5490 = vpop.f32.mrb[0].mxu0
    %5491 = vmatprep.mubr.f32.mxu0 0.0
    %5492 = vmatmul.mubr.f32.gmra.mrb[0].mxu0 %v5372
    %v5493 = vpop.f32.mrb[0].mxu0
    %v5494 = vadd.f32 0.0, %v5493
    %v5495 = vpop.f32.mrb[0].mxu0
    %5496 = vmatprep.mubr.f32.mxu0 0.0
    %5497 = vmatmul.mubr.f32.gmra.mrb[0].mxu0 %v5375
    %v5498 = vpop.f32.mrb[0].mxu0
    %v5499 = vadd.f32 0.0, %v5498
    %v5500 = vpop.f32.mrb[0].mxu0
    %5501 = vmatprep.mubr.f32.mxu0 0.0
    %5502 = vmatmul.mubr.f32.gmra.mrb[0].mxu0 %v5378
    %v5503 = vpop.f32.mrb[0].mxu0
    %v5504 = vadd.f32 0.0, %v5503
    %v5505 = vpop.f32.mrb[0].mxu0
    %5506 = vmatprep.mubr.f32.mxu0 0.0
    %5507 = vmatmul.mubr.f32.gmra.mrb[0].mxu0 %v5381
    %v5508 = vpop.f32.mrb[0].mxu0
    %v5509 = vadd.f32 0.0, %v5508
    %v5510 = vpop.f32.mrb[0].mxu0
    %5511 = vmatprep.mubr.f32.mxu0 0.0
    %5512 = vmatmul.mubr.f32.gmra.mrb[0].mxu0 %v5384
    %v5513 = vpop.f32.mrb[0].mxu0
    %v5514 = vadd.f32 0.0, %v5513
    %v5515 = vpop.f32.mrb[0].mxu0
    %5516 = vmatprep.mubr.f32.mxu0 0.0
    %5517 = vmatmul.mubr.f32.gmra.mrb[0].mxu0 %v5387
    %v5518 = vpop.f32.mrb[0].mxu0
    %v5519 = vadd.f32 0.0, %v5518
    %v5520 = vpop.f32.mrb[0].mxu0
    %5521 = vmatprep.mubr.f32.mxu0 0.0
    %5522 = vmatmul.mubr.f32.gmra.mrb[0].mxu0 %v5390
    %v5523 = vpop.f32.mrb[0].mxu0
    %v5524 = vadd.f32 0.0, %v5523
    %v5525 = vpop.f32.mrb[0].mxu0
    %5526 = vmatprep.mubr.f32.mxu0 0.0
    %5527 = vmatmul.mubr.f32.gmra.mrb[0].mxu0 %v5393
    %v5528 = vpop.f32.mrb[0].mxu0
    %v5529 = vadd.f32 0.0, %v5528
    %v5530 = vpop.f32.mrb[0].mxu0
    %5531 = vmatprep.mubr.f32.mxu0 0.0
    %5532 = vmatmul.mubr.f32.gmra.mrb[0].mxu0 %v5396
    %v5533 = vpop.f32.mrb[0].mxu0
    %v5534 = vadd.f32 0.0, %v5533
    %v5535 = vpop.f32.mrb[0].mxu0
    %5536 = vmatprep.mubr.f32.mxu0 0.0
    %5537 = vmatmul.mubr.f32.gmra.mrb[0].mxu0 %v5399
    %v5538 = vpop.f32.mrb[0].mxu0
    %v5539 = vadd.f32 0.0, %v5538
    %v5540 = vpop.f32.mrb[0].mxu0
    %5541 = vmatprep.mubr.f32.mxu0 0.0
    %5542 = vmatmul.mubr.f32.gmra.mrb[0].mxu0 %v5402
    %v5543 = vpop.f32.mrb[0].mxu0
    %v5544 = vadd.f32 0.0, %v5543
    %v5545 = vpop.f32.mrb[0].mxu0
    %5546 = vmatprep.mubr.f32.mxu0 0.0
    %5547 = vmatmul.mubr.f32.gmra.mrb[0].mxu0 %v5405
    %v5548 = vpop.f32.mrb[0].mxu0
    %v5549 = vadd.f32 0.0, %v5548
    %v5550 = vpop.f32.mrb[0].mxu0
    %5551 = vdwg.mxu0
    %5552 = vst [vmem:[#allocation4] sm:$0xff] %v5474
    %5553 = vst [vmem:[#allocation4 + $0x8] sm:$0xff] %v5479
    %5554 = vst [vmem:[#allocation4 + $0x10] sm:$0xff] %v5484
    %5555 = vst [vmem:[#allocation4 + $0x18] sm:$0xff] %v5489
    %5556 = vst [vmem:[#allocation4 + $0x20] sm:$0xff] %v5494
    %5557 = vst [vmem:[#allocation4 + $0x28] sm:$0xff] %v5499
    %5558 = vst [vmem:[#allocation4 + $0x30] sm:$0xff] %v5504
    %5559 = vst [vmem:[#allocation4 + $0x38] sm:$0xff] %v5509
    %5560 = vst [vmem:[#allocation4 + $0x40] sm:$0xff] %v5514
    %5561 = vst [vmem:[#allocation4 + $0x48] sm:$0xff] %v5519
    %5562 = vst [vmem:[#allocation4 + $0x50] sm:$0xff] %v5524
    %5563 = vst [vmem:[#allocation4 + $0x58] sm:$0xff] %v5529
    %5564 = vst [vmem:[#allocation4 + $0x60] sm:$0xff] %v5534
    %5565 = vst [vmem:[#allocation4 + $0x68] sm:$0xff] %v5539
    %5566 = vst [vmem:[#allocation4 + $0x70] sm:$0xff] %v5544
    %5567 = vst [vmem:[#allocation4 + $0x78] sm:$0xff] %v5549
    %v5568 = vsel %vm5358, %v5334, 0.0
    %v5569 = vsel %vm5358, %v5335, 0.0
    %v5570 = vsel %vm5358, %v5336, 0.0
    %v5571 = vsel %vm5358, %v5337, 0.0
    %v5572 = vsel %vm5358, %v5338, 0.0
    %v5573 = vsel %vm5358, %v5339, 0.0
    %v5574 = vsel %vm5358, %v5340, 0.0
    %v5575 = vsel %vm5358, %v5341, 0.0
    %v5576 = vsel %vm5358, %v5342, 0.0
    %v5577 = vsel %vm5358, %v5343, 0.0
    %v5578 = vsel %vm5358, %v5344, 0.0
    %v5579 = vsel %vm5358, %v5345, 0.0
    %v5580 = vsel %vm5358, %v5346, 0.0
    %v5581 = vsel %vm5358, %v5347, 0.0
    %v5582 = vsel %vm5358, %v5348, 0.0
    %v5583 = vsel %vm5358, %v5349, 0.0
    %5584 = vst [vmem:[#allocation2] sm:$0xff] %v5568
    %5585 = vst [vmem:[#allocation2 + $0x8] sm:$0xff] %v5569
    %5586 = vst [vmem:[#allocation2 + $0x10] sm:$0xff] %v5570
    %5587 = vst [vmem:[#allocation2 + $0x18] sm:$0xff] %v5571
    %5588 = vst [vmem:[#allocation2 + $0x20] sm:$0xff] %v5572
    %5589 = vst [vmem:[#allocation2 + $0x28] sm:$0xff] %v5573
    %5590 = vst [vmem:[#allocation2 + $0x30] sm:$0xff] %v5574
    %5591 = vst [vmem:[#allocation2 + $0x38] sm:$0xff] %v5575
    %5592 = vst [vmem:[#allocation2 + $0x40] sm:$0xff] %v5576
    %5593 = vst [vmem:[#allocation2 + $0x48] sm:$0xff] %v5577
    %5594 = vst [vmem:[#allocation2 + $0x50] sm:$0xff] %v5578
    %5595 = vst [vmem:[#allocation2 + $0x58] sm:$0xff] %v5579
    %5596 = vst [vmem:[#allocation2 + $0x60] sm:$0xff] %v5580
    %5597 = vst [vmem:[#allocation2 + $0x68] sm:$0xff] %v5581
    %5598 = vst [vmem:[#allocation2 + $0x70] sm:$0xff] %v5582
    %5599 = vst [vmem:[#allocation2 + $0x78] sm:$0xff] %v5583
    // Predicated region
    $region30: #{tpu_custom_call.1} parent=1 // pred_check
      _
    $region31: #{tpu_custom_call.1} parent=1 // pred_check_branch
      %5601 = sbr.rel (0) target = $region33
    $region32: #{tpu_custom_call.1} parent=1 // pred_region
      _
    $region33: #{tpu_custom_call.1} parent=1 // pred_fallthru
      _
    // Predicated region
    $region34: #{tpu_custom_call.1} parent=1 // pred_check
      _
    $region35: #{tpu_custom_call.1} parent=1 // pred_check_branch
      %5603 = sbr.rel (0) target = $region37
    $region36: #{tpu_custom_call.1} parent=1 // pred_region
      %s5605 = ssub.s32 2048, 2048
      %5606 = vsyncadd [#allocation3], %s5605
      %s5607 = sshll.u32 [#allocation2], 4
      %s5608 = int_to_ptr.vmem [resolvable:$true] %s5607
      %5613 = dma.vmem_to_hbm [thread:$0]  %s5608, 2048, %s8, [#allocation3], 128, 128, 8
    $region37: #{tpu_custom_call.1} parent=1 // pred_fallthru
      _
    // Predicated region
    $region38: #{tpu_custom_call.1} parent=1 // pred_check
      _
    $region39: #{tpu_custom_call.1} parent=1 // pred_check_branch
      %5615 = sbr.rel (0) target = $region41
    $region40: #{tpu_custom_call.1} parent=1 // pred_region
      %s5617 = ssub.s32 2048, 2048
      %5618 = vsyncadd [#allocation5], %s5617
      %s5619 = sshll.u32 [#allocation4], 4
      %s5620 = int_to_ptr.vmem [resolvable:$true] %s5619
      %5625 = dma.vmem_to_hbm [thread:$0]  %s5620, 2048, %s9, [#allocation5], 128, 128, 8
    $region41: #{tpu_custom_call.1} parent=1 // pred_fallthru
      _
    // Predicated region
    $region42: #{tpu_custom_call.1} parent=1 // pred_check
      _
    $region43: #{tpu_custom_call.1} parent=1 // pred_check_branch
      %5627 = sbr.rel (0) target = $region45
    $region44: #{tpu_custom_call.1} parent=1 // pred_region
      _
    $region45: #{tpu_custom_call.1} parent=1 // pred_fallthru
      _
    // Predicated region
    $region46: #{tpu_custom_call.1} parent=1 // pred_check
      _
    $region47: #{tpu_custom_call.1} parent=1 // pred_check_branch
      %5629 = sbr.rel (0) target = $region49
    $region48: #{tpu_custom_call.1} parent=1 // pred_region
      %5630 = dma.done [#allocation3], 2048
    $region49: #{tpu_custom_call.1} parent=1 // pred_fallthru
      _
    // Predicated region
    $region50: #{tpu_custom_call.1} parent=1 // pred_check
      _
    $region51: #{tpu_custom_call.1} parent=1 // pred_check_branch
      %5632 = sbr.rel (0) target = $region53
    $region52: #{tpu_custom_call.1} parent=1 // pred_region
      %5633 = dma.done [#allocation5], 2048
    $region53: #{tpu_custom_call.1} parent=1 // pred_fallthru
      _
    %5634 = vsyncpa [#allocation3], 1
    %5635 = vsyncpa [#allocation5], 1

</llo_original>
